<compile_context>
chip_gen: v5e
topology: v5e:2x2
jax: 0.10.0
libtpu: 0.0.40
codegen_flags: <defaults>
</compile_context>

<pallas_src>
import numpy as np
import jax
import jax.numpy as jnp
from jax import lax
from jax.experimental import pallas as pl
from jax.experimental.pallas import tpu as pltpu

H = W = 28          # input spatial size implied by fc1 in_features = 144 = 12*12
C1 = H - 2          # 26 after conv1 (valid 3x3)
C2 = C1 - 2         # 24 after conv2 (valid 3x3)
P = C2 // 2         # 12 after 2x2 max pool
FC1_IN = P * P      # 144
FC1_OUT = 64
N_CLASSES = 10
POOL_ROWS = P * C2  # 288 = rows of the row-pooled scratch (flattened (12, 24))


def net_kernel(x_ref, w1_ref, b1_ref, w2_ref, b2_ref,
               wfc1t_ref, bfc1_ref, woutt_ref, bout_ref,
               out_ref, pool_s):
    x = x_ref[...]                                   # (28, 28, NB), batch on lanes

    # ---- conv1 (valid 3x3 cross-correlation) + ReLU -> (26, 26, NB) ----
    c1 = x[0:C1, 0:C1, :] * w1_ref[0]                # init with first tap
    for di in range(3):
        for dj in range(3):
            if di == 0 and dj == 0:
                continue
            c1 = c1 + x[di:di + C1, dj:dj + C1, :] * w1_ref[3 * di + dj]
    c1 = jnp.maximum(c1 + b1_ref[0], 0.0)

    # ---- conv2 (valid 3x3) + ReLU -> (24, 24, NB) ----
    c2 = c1[0:C2, 0:C2, :] * w2_ref[0]
    for di in range(3):
        for dj in range(3):
            if di == 0 and dj == 0:
                continue
            c2 = c2 + c1[di:di + C2, dj:dj + C2, :] * w2_ref[3 * di + dj]
    c2 = jnp.maximum(c2 + b2_ref[0], 0.0)

    # ---- 2x2 max pool, stride 2 -> flat (144, NB) ----
    # Row pairs (leading dim): pool_s[r*24 + w, b] = max(c2[2r, w, b], c2[2r+1, w, b])
    for r in range(P):
        pool_s[r * C2:(r + 1) * C2, :] = jnp.maximum(c2[2 * r], c2[2 * r + 1])
    # Column pairs via stride-2 sublane reads: flat row 2*(r*12+c) = r*24 + 2c,
    # so the pooled result is already in PyTorch row-major flatten order.
    even = pool_s[pl.ds(0, FC1_IN, stride=2), :]     # (144, NB)
    odd = pool_s[pl.ds(1, FC1_IN, stride=2), :]      # (144, NB)
    pooled = jnp.maximum(even, odd)                  # (144, NB)

    # ---- fc1 + ReLU: (64, 144) @ (144, NB) -> (64, NB) ----
    h = jnp.dot(wfc1t_ref[...], pooled, preferred_element_type=jnp.float32)
    h = jnp.maximum(h + bfc1_ref[...], 0.0)

    # ---- out: (10, 64) @ (64, NB) -> (10, NB) ----
    out_ref[...] = (jnp.dot(woutt_ref[...], h, preferred_element_type=jnp.float32)
                    + bout_ref[...])


def net_forward(x, params, *, block_n=256):
    """x: (N, 1, 28, 28) float32.  Returns (N, 10) float32."""
    w1, b1, w2, b2, wfc1, bfc1, wout, bout = params
    n = x.shape[0]

    block_n = max(128, (block_n // 128) * 128)
    nb = max(128, min(block_n, -(-n // 128) * 128))   # block size, multiple of 128
    n_pad = -(-n // nb) * nb

    # (N, 1, 28, 28) -> (28, 28, N_pad): batch on the lane (minor) axis.
    x2 = jnp.transpose(x.reshape(n, H, W).astype(jnp.float32), (1, 2, 0))
    if n_pad != n:
        x2 = jnp.pad(x2, ((0, 0), (0, 0), (0, n_pad - n)))

    w1f = jnp.asarray(w1, jnp.float32).reshape(9)          # SMEM, scalar taps
    w2f = jnp.asarray(w2, jnp.float32).reshape(9)
    b1r = jnp.asarray(b1, jnp.float32).reshape(1)
    b2r = jnp.asarray(b2, jnp.float32).reshape(1)
    wfc1t = jnp.asarray(wfc1, jnp.float32).T                # (64, 144)
    woutt = jnp.asarray(wout, jnp.float32).T                # (10, 64)
    bfc1r = jnp.asarray(bfc1, jnp.float32).reshape(FC1_OUT, 1)
    boutr = jnp.asarray(bout, jnp.float32).reshape(N_CLASSES, 1)

    smem = lambda: pl.BlockSpec(memory_space=pltpu.MemorySpace.SMEM)
    full = lambda shape: pl.BlockSpec(shape, lambda b: (0,) * len(shape))

    out = pl.pallas_call(
        net_kernel,
        out_shape=jax.ShapeDtypeStruct((N_CLASSES, n_pad), jnp.float32),
        grid_spec=pltpu.PrefetchScalarGridSpec(
            num_scalar_prefetch=0,
            grid=(n_pad // nb,),
            in_specs=[
                pl.BlockSpec((H, W, nb), lambda b: (0, 0, b)),   # x (batch on lanes)
                smem(),                                          # w1 (9,)
                smem(),                                          # b1 (1,)
                smem(),                                          # w2 (9,)
                smem(),                                          # b2 (1,)
                full((FC1_OUT, FC1_IN)),                         # fc1 weight^T (64,144)
                full((FC1_OUT, 1)),                              # fc1 bias (64,1)
                full((N_CLASSES, FC1_OUT)),                      # out weight^T (10,64)
                full((N_CLASSES, 1)),                            # out bias (10,1)
            ],
            out_specs=pl.BlockSpec((N_CLASSES, nb), lambda b: (0, b)),
            scratch_shapes=[pltpu.VMEM((POOL_ROWS, nb), jnp.float32)],
        ),
        compiler_params=pltpu.CompilerParams(
            dimension_semantics=("parallel",)),
    )(x2, w1f, b1r, w2f, b2r, wfc1t, bfc1r, woutt, boutr)

    return out[:, :n].T                                       # (N, 10)


def ref_forward(x, params):
    """Pure-JAX reference matching the PyTorch forward."""
    w1, b1, w2, b2, wfc1, bfc1, wout, bout = params
    n = x.shape[0]
    dn = ("NCHW", "OIHW", "NCHW")
    c1 = lax.conv_general_dilated(x, w1[None, None], (1, 1), "VALID",
                                  dimension_numbers=dn) + b1
    c1 = jnp.maximum(c1, 0.0)
    c2 = lax.conv_general_dilated(c1, w2[None, None], (1, 1), "VALID",
                                  dimension_numbers=dn) + b2
    c2 = jnp.maximum(c2, 0.0)
    pooled = c2.reshape(n, 1, P, 2, P, 2).max(axis=(3, 5))
    flat = pooled.reshape(n, FC1_IN)
    h = jnp.maximum(flat @ wfc1 + bfc1, 0.0)
    return h @ wout + bout


def init_params():
    key = jax.random.PRNGKey(42)
    ks = jax.random.split(key, 8)
    w1 = jax.random.normal(ks[0], (3, 3), jnp.float32) * 0.2
    b1 = jnp.float32(0.05)
    w2 = jax.random.normal(ks[1], (3, 3), jnp.float32) * 0.2
    b2 = jnp.float32(-0.03)
    wfc1 = jax.random.normal(ks[2], (FC1_IN, FC1_OUT), jnp.float32) * 0.08
    bfc1 = jax.random.normal(ks[3], (FC1_OUT,), jnp.float32) * 0.05
    wout = jax.random.normal(ks[4], (FC1_OUT, N_CLASSES), jnp.float32) * 0.1
    bout = jax.random.normal(ks[5], (N_CLASSES,), jnp.float32) * 0.05
    return (w1, b1, w2, b2, wfc1, bfc1, wout, bout)


if __name__ == "__main__":
    params = init_params()
    x = jax.random.normal(jax.random.PRNGKey(0), (2, 1, H, W), jnp.float32)

    y = jax.block_until_ready(net_forward(x, params))
    y_ref = jax.block_until_ready(ref_forward(x, params))

    assert y.shape == (2, N_CLASSES)
    assert np.allclose(np.asarray(y), np.asarray(y_ref), atol=2e-2, rtol=2e-2), (
        "mismatch vs reference")

    print("KERNEL_OK")
</pallas_src>

<mosaic_0001>
module attributes {stable_mosaic.version = 11 : i64} {
  func.func @net_kernel(%arg0: i32, %arg1: memref<28x28x128xf32, #tpu.memory_space<vmem>>, %arg2: memref<9xf32, #tpu.memory_space<smem>>, %arg3: memref<1xf32, #tpu.memory_space<smem>>, %arg4: memref<9xf32, #tpu.memory_space<smem>>, %arg5: memref<1xf32, #tpu.memory_space<smem>>, %arg6: memref<64x144xf32, #tpu.memory_space<vmem>>, %arg7: memref<64x1xf32, #tpu.memory_space<vmem>>, %arg8: memref<10x64xf32, #tpu.memory_space<vmem>>, %arg9: memref<10x1xf32, #tpu.memory_space<vmem>>, %arg10: memref<10x128xf32, #tpu.memory_space<vmem>>, %arg11: memref<288x128xf32, #tpu.memory_space<vmem>>) attributes {dimension_semantics = [#tpu.dimension_semantics<parallel>], iteration_bounds = array<i64: 1>, scalar_prefetch = 0 : i64, scratch_operands = 1 : i64, tpu.core_type = #tpu.core_type<tc>, window_params = [{transform_indices = @transform_0, window_bounds = array<i64: 28, 28, 128>}, {transform_indices = @transform_1, window_bounds = array<i64: 9>}, {transform_indices = @transform_2, window_bounds = array<i64: 1>}, {transform_indices = @transform_3, window_bounds = array<i64: 9>}, {transform_indices = @transform_4, window_bounds = array<i64: 1>}, {pipeline_mode = #tpu.pipeline_mode<synchronous>, transform_indices = @transform_5, window_bounds = array<i64: 64, 144>}, {pipeline_mode = #tpu.pipeline_mode<synchronous>, transform_indices = @transform_6, window_bounds = array<i64: 64, 1>}, {pipeline_mode = #tpu.pipeline_mode<synchronous>, transform_indices = @transform_7, window_bounds = array<i64: 10, 64>}, {pipeline_mode = #tpu.pipeline_mode<synchronous>, transform_indices = @transform_8, window_bounds = array<i64: 10, 1>}, {transform_indices = @transform_9, window_bounds = array<i64: 10, 128>}]} {
    %c0 = arith.constant 0 : index
    %c0_0 = arith.constant 0 : index
    %c0_1 = arith.constant 0 : index
    %0 = vector.load %arg1[%c0, %c0_0, %c0_1] : memref<28x28x128xf32, #tpu.memory_space<vmem>>, vector<28x28x128xf32>
    %1 = vector.extract_strided_slice %0 {offsets = [0, 0, 0], sizes = [26, 26, 128], strides = [1, 1, 1]} : vector<28x28x128xf32> to vector<26x26x128xf32>
    %c0_2 = arith.constant 0 : index
    %2 = memref.load %arg2[%c0_2] : memref<9xf32, #tpu.memory_space<smem>>
    %3 = vector.broadcast %2 : f32 to vector<26x26x128xf32>
    %4 = arith.mulf %1, %3 : vector<26x26x128xf32>
    %5 = vector.extract_strided_slice %0 {offsets = [0, 1, 0], sizes = [26, 26, 128], strides = [1, 1, 1]} : vector<28x28x128xf32> to vector<26x26x128xf32>
    %c1 = arith.constant 1 : index
    %6 = memref.load %arg2[%c1] : memref<9xf32, #tpu.memory_space<smem>>
    %7 = vector.broadcast %6 : f32 to vector<26x26x128xf32>
    %8 = arith.mulf %5, %7 : vector<26x26x128xf32>
    %9 = arith.addf %4, %8 : vector<26x26x128xf32>
    %10 = vector.extract_strided_slice %0 {offsets = [0, 2, 0], sizes = [26, 26, 128], strides = [1, 1, 1]} : vector<28x28x128xf32> to vector<26x26x128xf32>
    %c2 = arith.constant 2 : index
    %11 = memref.load %arg2[%c2] : memref<9xf32, #tpu.memory_space<smem>>
    %12 = vector.broadcast %11 : f32 to vector<26x26x128xf32>
    %13 = arith.mulf %10, %12 : vector<26x26x128xf32>
    %14 = arith.addf %9, %13 : vector<26x26x128xf32>
    %15 = vector.extract_strided_slice %0 {offsets = [1, 0, 0], sizes = [26, 26, 128], strides = [1, 1, 1]} : vector<28x28x128xf32> to vector<26x26x128xf32>
    %c3 = arith.constant 3 : index
    %16 = memref.load %arg2[%c3] : memref<9xf32, #tpu.memory_space<smem>>
    %17 = vector.broadcast %16 : f32 to vector<26x26x128xf32>
    %18 = arith.mulf %15, %17 : vector<26x26x128xf32>
    %19 = arith.addf %14, %18 : vector<26x26x128xf32>
    %20 = vector.extract_strided_slice %0 {offsets = [1, 1, 0], sizes = [26, 26, 128], strides = [1, 1, 1]} : vector<28x28x128xf32> to vector<26x26x128xf32>
    %c4 = arith.constant 4 : index
    %21 = memref.load %arg2[%c4] : memref<9xf32, #tpu.memory_space<smem>>
    %22 = vector.broadcast %21 : f32 to vector<26x26x128xf32>
    %23 = arith.mulf %20, %22 : vector<26x26x128xf32>
    %24 = arith.addf %19, %23 : vector<26x26x128xf32>
    %25 = vector.extract_strided_slice %0 {offsets = [1, 2, 0], sizes = [26, 26, 128], strides = [1, 1, 1]} : vector<28x28x128xf32> to vector<26x26x128xf32>
    %c5 = arith.constant 5 : index
    %26 = memref.load %arg2[%c5] : memref<9xf32, #tpu.memory_space<smem>>
    %27 = vector.broadcast %26 : f32 to vector<26x26x128xf32>
    %28 = arith.mulf %25, %27 : vector<26x26x128xf32>
    %29 = arith.addf %24, %28 : vector<26x26x128xf32>
    %30 = vector.extract_strided_slice %0 {offsets = [2, 0, 0], sizes = [26, 26, 128], strides = [1, 1, 1]} : vector<28x28x128xf32> to vector<26x26x128xf32>
    %c6 = arith.constant 6 : index
    %31 = memref.load %arg2[%c6] : memref<9xf32, #tpu.memory_space<smem>>
    %32 = vector.broadcast %31 : f32 to vector<26x26x128xf32>
    %33 = arith.mulf %30, %32 : vector<26x26x128xf32>
    %34 = arith.addf %29, %33 : vector<26x26x128xf32>
    %35 = vector.extract_strided_slice %0 {offsets = [2, 1, 0], sizes = [26, 26, 128], strides = [1, 1, 1]} : vector<28x28x128xf32> to vector<26x26x128xf32>
    %c7 = arith.constant 7 : index
    %36 = memref.load %arg2[%c7] : memref<9xf32, #tpu.memory_space<smem>>
    %37 = vector.broadcast %36 : f32 to vector<26x26x128xf32>
    %38 = arith.mulf %35, %37 : vector<26x26x128xf32>
    %39 = arith.addf %34, %38 : vector<26x26x128xf32>
    %40 = vector.extract_strided_slice %0 {offsets = [2, 2, 0], sizes = [26, 26, 128], strides = [1, 1, 1]} : vector<28x28x128xf32> to vector<26x26x128xf32>
    %c8 = arith.constant 8 : index
    %41 = memref.load %arg2[%c8] : memref<9xf32, #tpu.memory_space<smem>>
    %42 = vector.broadcast %41 : f32 to vector<26x26x128xf32>
    %43 = arith.mulf %40, %42 : vector<26x26x128xf32>
    %44 = arith.addf %39, %43 : vector<26x26x128xf32>
    %c0_3 = arith.constant 0 : index
    %45 = memref.load %arg3[%c0_3] : memref<1xf32, #tpu.memory_space<smem>>
    %46 = vector.broadcast %45 : f32 to vector<26x26x128xf32>
    %47 = arith.addf %44, %46 : vector<26x26x128xf32>
    %cst = arith.constant 0.000000e+00 : f32
    %48 = vector.broadcast %cst : f32 to vector<26x26x128xf32>
    %49 = arith.maximumf %47, %48 : vector<26x26x128xf32>
    %50 = vector.extract_strided_slice %49 {offsets = [0, 0, 0], sizes = [24, 24, 128], strides = [1, 1, 1]} : vector<26x26x128xf32> to vector<24x24x128xf32>
    %c0_4 = arith.constant 0 : index
    %51 = memref.load %arg4[%c0_4] : memref<9xf32, #tpu.memory_space<smem>>
    %52 = vector.broadcast %51 : f32 to vector<24x24x128xf32>
    %53 = arith.mulf %50, %52 : vector<24x24x128xf32>
    %54 = vector.extract_strided_slice %49 {offsets = [0, 1, 0], sizes = [24, 24, 128], strides = [1, 1, 1]} : vector<26x26x128xf32> to vector<24x24x128xf32>
    %c1_5 = arith.constant 1 : index
    %55 = memref.load %arg4[%c1_5] : memref<9xf32, #tpu.memory_space<smem>>
    %56 = vector.broadcast %55 : f32 to vector<24x24x128xf32>
    %57 = arith.mulf %54, %56 : vector<24x24x128xf32>
    %58 = arith.addf %53, %57 : vector<24x24x128xf32>
    %59 = vector.extract_strided_slice %49 {offsets = [0, 2, 0], sizes = [24, 24, 128], strides = [1, 1, 1]} : vector<26x26x128xf32> to vector<24x24x128xf32>
    %c2_6 = arith.constant 2 : index
    %60 = memref.load %arg4[%c2_6] : memref<9xf32, #tpu.memory_space<smem>>
    %61 = vector.broadcast %60 : f32 to vector<24x24x128xf32>
    %62 = arith.mulf %59, %61 : vector<24x24x128xf32>
    %63 = arith.addf %58, %62 : vector<24x24x128xf32>
    %64 = vector.extract_strided_slice %49 {offsets = [1, 0, 0], sizes = [24, 24, 128], strides = [1, 1, 1]} : vector<26x26x128xf32> to vector<24x24x128xf32>
    %c3_7 = arith.constant 3 : index
    %65 = memref.load %arg4[%c3_7] : memref<9xf32, #tpu.memory_space<smem>>
    %66 = vector.broadcast %65 : f32 to vector<24x24x128xf32>
    %67 = arith.mulf %64, %66 : vector<24x24x128xf32>
    %68 = arith.addf %63, %67 : vector<24x24x128xf32>
    %69 = vector.extract_strided_slice %49 {offsets = [1, 1, 0], sizes = [24, 24, 128], strides = [1, 1, 1]} : vector<26x26x128xf32> to vector<24x24x128xf32>
    %c4_8 = arith.constant 4 : index
    %70 = memref.load %arg4[%c4_8] : memref<9xf32, #tpu.memory_space<smem>>
    %71 = vector.broadcast %70 : f32 to vector<24x24x128xf32>
    %72 = arith.mulf %69, %71 : vector<24x24x128xf32>
    %73 = arith.addf %68, %72 : vector<24x24x128xf32>
    %74 = vector.extract_strided_slice %49 {offsets = [1, 2, 0], sizes = [24, 24, 128], strides = [1, 1, 1]} : vector<26x26x128xf32> to vector<24x24x128xf32>
    %c5_9 = arith.constant 5 : index
    %75 = memref.load %arg4[%c5_9] : memref<9xf32, #tpu.memory_space<smem>>
    %76 = vector.broadcast %75 : f32 to vector<24x24x128xf32>
    %77 = arith.mulf %74, %76 : vector<24x24x128xf32>
    %78 = arith.addf %73, %77 : vector<24x24x128xf32>
    %79 = vector.extract_strided_slice %49 {offsets = [2, 0, 0], sizes = [24, 24, 128], strides = [1, 1, 1]} : vector<26x26x128xf32> to vector<24x24x128xf32>
    %c6_10 = arith.constant 6 : index
    %80 = memref.load %arg4[%c6_10] : memref<9xf32, #tpu.memory_space<smem>>
    %81 = vector.broadcast %80 : f32 to vector<24x24x128xf32>
    %82 = arith.mulf %79, %81 : vector<24x24x128xf32>
    %83 = arith.addf %78, %82 : vector<24x24x128xf32>
    %84 = vector.extract_strided_slice %49 {offsets = [2, 1, 0], sizes = [24, 24, 128], strides = [1, 1, 1]} : vector<26x26x128xf32> to vector<24x24x128xf32>
    %c7_11 = arith.constant 7 : index
    %85 = memref.load %arg4[%c7_11] : memref<9xf32, #tpu.memory_space<smem>>
    %86 = vector.broadcast %85 : f32 to vector<24x24x128xf32>
    %87 = arith.mulf %84, %86 : vector<24x24x128xf32>
    %88 = arith.addf %83, %87 : vector<24x24x128xf32>
    %89 = vector.extract_strided_slice %49 {offsets = [2, 2, 0], sizes = [24, 24, 128], strides = [1, 1, 1]} : vector<26x26x128xf32> to vector<24x24x128xf32>
    %c8_12 = arith.constant 8 : index
    %90 = memref.load %arg4[%c8_12] : memref<9xf32, #tpu.memory_space<smem>>
    %91 = vector.broadcast %90 : f32 to vector<24x24x128xf32>
    %92 = arith.mulf %89, %91 : vector<24x24x128xf32>
    %93 = arith.addf %88, %92 : vector<24x24x128xf32>
    %c0_13 = arith.constant 0 : index
    %94 = memref.load %arg5[%c0_13] : memref<1xf32, #tpu.memory_space<smem>>
    %95 = vector.broadcast %94 : f32 to vector<24x24x128xf32>
    %96 = arith.addf %93, %95 : vector<24x24x128xf32>
    %cst_14 = arith.constant 0.000000e+00 : f32
    %97 = vector.broadcast %cst_14 : f32 to vector<24x24x128xf32>
    %98 = arith.maximumf %96, %97 : vector<24x24x128xf32>
    %99 = vector.extract_strided_slice %98 {offsets = [0, 0, 0], sizes = [1, 24, 128], strides = [1, 1, 1]} : vector<24x24x128xf32> to vector<1x24x128xf32>
    %100 = vector.shape_cast %99 : vector<1x24x128xf32> to vector<24x128xf32>
    %101 = vector.extract_strided_slice %98 {offsets = [1, 0, 0], sizes = [1, 24, 128], strides = [1, 1, 1]} : vector<24x24x128xf32> to vector<1x24x128xf32>
    %102 = vector.shape_cast %101 : vector<1x24x128xf32> to vector<24x128xf32>
    %103 = arith.maximumf %100, %102 : vector<24x128xf32>
    %c0_15 = arith.constant 0 : index
    %c0_16 = arith.constant 0 : index
    %104 = vector.load %arg11[%c0_15, %c0_16] : memref<288x128xf32, #tpu.memory_space<vmem>>, vector<24x128xf32>
    tpu.vector_store %arg11[%c0_15, %c0_16], %103 {strides = array<i32>} : memref<288x128xf32, #tpu.memory_space<vmem>>, vector<24x128xf32>,
    %105 = vector.extract_strided_slice %98 {offsets = [2, 0, 0], sizes = [1, 24, 128], strides = [1, 1, 1]} : vector<24x24x128xf32> to vector<1x24x128xf32>
    %106 = vector.shape_cast %105 : vector<1x24x128xf32> to vector<24x128xf32>
    %107 = vector.extract_strided_slice %98 {offsets = [3, 0, 0], sizes = [1, 24, 128], strides = [1, 1, 1]} : vector<24x24x128xf32> to vector<1x24x128xf32>
    %108 = vector.shape_cast %107 : vector<1x24x128xf32> to vector<24x128xf32>
    %109 = arith.maximumf %106, %108 : vector<24x128xf32>
    %c24 = arith.constant 24 : index
    %c0_17 = arith.constant 0 : index
    %110 = vector.load %arg11[%c24, %c0_17] : memref<288x128xf32, #tpu.memory_space<vmem>>, vector<24x128xf32>
    tpu.vector_store %arg11[%c24, %c0_17], %109 {strides = array<i32>} : memref<288x128xf32, #tpu.memory_space<vmem>>, vector<24x128xf32>,
    %111 = vector.extract_strided_slice %98 {offsets = [4, 0, 0], sizes = [1, 24, 128], strides = [1, 1, 1]} : vector<24x24x128xf32> to vector<1x24x128xf32>
    %112 = vector.shape_cast %111 : vector<1x24x128xf32> to vector<24x128xf32>
    %113 = vector.extract_strided_slice %98 {offsets = [5, 0, 0], sizes = [1, 24, 128], strides = [1, 1, 1]} : vector<24x24x128xf32> to vector<1x24x128xf32>
    %114 = vector.shape_cast %113 : vector<1x24x128xf32> to vector<24x128xf32>
    %115 = arith.maximumf %112, %114 : vector<24x128xf32>
    %c48 = arith.constant 48 : index
    %c0_18 = arith.constant 0 : index
    %116 = vector.load %arg11[%c48, %c0_18] : memref<288x128xf32, #tpu.memory_space<vmem>>, vector<24x128xf32>
    tpu.vector_store %arg11[%c48, %c0_18], %115 {strides = array<i32>} : memref<288x128xf32, #tpu.memory_space<vmem>>, vector<24x128xf32>,
    %117 = vector.extract_strided_slice %98 {offsets = [6, 0, 0], sizes = [1, 24, 128], strides = [1, 1, 1]} : vector<24x24x128xf32> to vector<1x24x128xf32>
    %118 = vector.shape_cast %117 : vector<1x24x128xf32> to vector<24x128xf32>
    %119 = vector.extract_strided_slice %98 {offsets = [7, 0, 0], sizes = [1, 24, 128], strides = [1, 1, 1]} : vector<24x24x128xf32> to vector<1x24x128xf32>
    %120 = vector.shape_cast %119 : vector<1x24x128xf32> to vector<24x128xf32>
    %121 = arith.maximumf %118, %120 : vector<24x128xf32>
    %c72 = arith.constant 72 : index
    %c0_19 = arith.constant 0 : index
    %122 = vector.load %arg11[%c72, %c0_19] : memref<288x128xf32, #tpu.memory_space<vmem>>, vector<24x128xf32>
    tpu.vector_store %arg11[%c72, %c0_19], %121 {strides = array<i32>} : memref<288x128xf32, #tpu.memory_space<vmem>>, vector<24x128xf32>,
    %123 = vector.extract_strided_slice %98 {offsets = [8, 0, 0], sizes = [1, 24, 128], strides = [1, 1, 1]} : vector<24x24x128xf32> to vector<1x24x128xf32>
    %124 = vector.shape_cast %123 : vector<1x24x128xf32> to vector<24x128xf32>
    %125 = vector.extract_strided_slice %98 {offsets = [9, 0, 0], sizes = [1, 24, 128], strides = [1, 1, 1]} : vector<24x24x128xf32> to vector<1x24x128xf32>
    %126 = vector.shape_cast %125 : vector<1x24x128xf32> to vector<24x128xf32>
    %127 = arith.maximumf %124, %126 : vector<24x128xf32>
    %c96 = arith.constant 96 : index
    %c0_20 = arith.constant 0 : index
    %128 = vector.load %arg11[%c96, %c0_20] : memref<288x128xf32, #tpu.memory_space<vmem>>, vector<24x128xf32>
    tpu.vector_store %arg11[%c96, %c0_20], %127 {strides = array<i32>} : memref<288x128xf32, #tpu.memory_space<vmem>>, vector<24x128xf32>,
    %129 = vector.extract_strided_slice %98 {offsets = [10, 0, 0], sizes = [1, 24, 128], strides = [1, 1, 1]} : vector<24x24x128xf32> to vector<1x24x128xf32>
    %130 = vector.shape_cast %129 : vector<1x24x128xf32> to vector<24x128xf32>
    %131 = vector.extract_strided_slice %98 {offsets = [11, 0, 0], sizes = [1, 24, 128], strides = [1, 1, 1]} : vector<24x24x128xf32> to vector<1x24x128xf32>
    %132 = vector.shape_cast %131 : vector<1x24x128xf32> to vector<24x128xf32>
    %133 = arith.maximumf %130, %132 : vector<24x128xf32>
    %c120 = arith.constant 120 : index
    %c0_21 = arith.constant 0 : index
    %134 = vector.load %arg11[%c120, %c0_21] : memref<288x128xf32, #tpu.memory_space<vmem>>, vector<24x128xf32>
    tpu.vector_store %arg11[%c120, %c0_21], %133 {strides = array<i32>} : memref<288x128xf32, #tpu.memory_space<vmem>>, vector<24x128xf32>,
    %135 = vector.extract_strided_slice %98 {offsets = [12, 0, 0], sizes = [1, 24, 128], strides = [1, 1, 1]} : vector<24x24x128xf32> to vector<1x24x128xf32>
    %136 = vector.shape_cast %135 : vector<1x24x128xf32> to vector<24x128xf32>
    %137 = vector.extract_strided_slice %98 {offsets = [13, 0, 0], sizes = [1, 24, 128], strides = [1, 1, 1]} : vector<24x24x128xf32> to vector<1x24x128xf32>
    %138 = vector.shape_cast %137 : vector<1x24x128xf32> to vector<24x128xf32>
    %139 = arith.maximumf %136, %138 : vector<24x128xf32>
    %c144 = arith.constant 144 : index
    %c0_22 = arith.constant 0 : index
    %140 = vector.load %arg11[%c144, %c0_22] : memref<288x128xf32, #tpu.memory_space<vmem>>, vector<24x128xf32>
    tpu.vector_store %arg11[%c144, %c0_22], %139 {strides = array<i32>} : memref<288x128xf32, #tpu.memory_space<vmem>>, vector<24x128xf32>,
    %141 = vector.extract_strided_slice %98 {offsets = [14, 0, 0], sizes = [1, 24, 128], strides = [1, 1, 1]} : vector<24x24x128xf32> to vector<1x24x128xf32>
    %142 = vector.shape_cast %141 : vector<1x24x128xf32> to vector<24x128xf32>
    %143 = vector.extract_strided_slice %98 {offsets = [15, 0, 0], sizes = [1, 24, 128], strides = [1, 1, 1]} : vector<24x24x128xf32> to vector<1x24x128xf32>
    %144 = vector.shape_cast %143 : vector<1x24x128xf32> to vector<24x128xf32>
    %145 = arith.maximumf %142, %144 : vector<24x128xf32>
    %c168 = arith.constant 168 : index
    %c0_23 = arith.constant 0 : index
    %146 = vector.load %arg11[%c168, %c0_23] : memref<288x128xf32, #tpu.memory_space<vmem>>, vector<24x128xf32>
    tpu.vector_store %arg11[%c168, %c0_23], %145 {strides = array<i32>} : memref<288x128xf32, #tpu.memory_space<vmem>>, vector<24x128xf32>,
    %147 = vector.extract_strided_slice %98 {offsets = [16, 0, 0], sizes = [1, 24, 128], strides = [1, 1, 1]} : vector<24x24x128xf32> to vector<1x24x128xf32>
    %148 = vector.shape_cast %147 : vector<1x24x128xf32> to vector<24x128xf32>
    %149 = vector.extract_strided_slice %98 {offsets = [17, 0, 0], sizes = [1, 24, 128], strides = [1, 1, 1]} : vector<24x24x128xf32> to vector<1x24x128xf32>
    %150 = vector.shape_cast %149 : vector<1x24x128xf32> to vector<24x128xf32>
    %151 = arith.maximumf %148, %150 : vector<24x128xf32>
    %c192 = arith.constant 192 : index
    %c0_24 = arith.constant 0 : index
    %152 = vector.load %arg11[%c192, %c0_24] : memref<288x128xf32, #tpu.memory_space<vmem>>, vector<24x128xf32>
    tpu.vector_store %arg11[%c192, %c0_24], %151 {strides = array<i32>} : memref<288x128xf32, #tpu.memory_space<vmem>>, vector<24x128xf32>,
    %153 = vector.extract_strided_slice %98 {offsets = [18, 0, 0], sizes = [1, 24, 128], strides = [1, 1, 1]} : vector<24x24x128xf32> to vector<1x24x128xf32>
    %154 = vector.shape_cast %153 : vector<1x24x128xf32> to vector<24x128xf32>
    %155 = vector.extract_strided_slice %98 {offsets = [19, 0, 0], sizes = [1, 24, 128], strides = [1, 1, 1]} : vector<24x24x128xf32> to vector<1x24x128xf32>
    %156 = vector.shape_cast %155 : vector<1x24x128xf32> to vector<24x128xf32>
    %157 = arith.maximumf %154, %156 : vector<24x128xf32>
    %c216 = arith.constant 216 : index
    %c0_25 = arith.constant 0 : index
    %158 = vector.load %arg11[%c216, %c0_25] : memref<288x128xf32, #tpu.memory_space<vmem>>, vector<24x128xf32>
    tpu.vector_store %arg11[%c216, %c0_25], %157 {strides = array<i32>} : memref<288x128xf32, #tpu.memory_space<vmem>>, vector<24x128xf32>,
    %159 = vector.extract_strided_slice %98 {offsets = [20, 0, 0], sizes = [1, 24, 128], strides = [1, 1, 1]} : vector<24x24x128xf32> to vector<1x24x128xf32>
    %160 = vector.shape_cast %159 : vector<1x24x128xf32> to vector<24x128xf32>
    %161 = vector.extract_strided_slice %98 {offsets = [21, 0, 0], sizes = [1, 24, 128], strides = [1, 1, 1]} : vector<24x24x128xf32> to vector<1x24x128xf32>
    %162 = vector.shape_cast %161 : vector<1x24x128xf32> to vector<24x128xf32>
    %163 = arith.maximumf %160, %162 : vector<24x128xf32>
    %c240 = arith.constant 240 : index
    %c0_26 = arith.constant 0 : index
    %164 = vector.load %arg11[%c240, %c0_26] : memref<288x128xf32, #tpu.memory_space<vmem>>, vector<24x128xf32>
    tpu.vector_store %arg11[%c240, %c0_26], %163 {strides = array<i32>} : memref<288x128xf32, #tpu.memory_space<vmem>>, vector<24x128xf32>,
    %165 = vector.extract_strided_slice %98 {offsets = [22, 0, 0], sizes = [1, 24, 128], strides = [1, 1, 1]} : vector<24x24x128xf32> to vector<1x24x128xf32>
    %166 = vector.shape_cast %165 : vector<1x24x128xf32> to vector<24x128xf32>
    %167 = vector.extract_strided_slice %98 {offsets = [23, 0, 0], sizes = [1, 24, 128], strides = [1, 1, 1]} : vector<24x24x128xf32> to vector<1x24x128xf32>
    %168 = vector.shape_cast %167 : vector<1x24x128xf32> to vector<24x128xf32>
    %169 = arith.maximumf %166, %168 : vector<24x128xf32>
    %c264 = arith.constant 264 : index
    %c0_27 = arith.constant 0 : index
    %170 = vector.load %arg11[%c264, %c0_27] : memref<288x128xf32, #tpu.memory_space<vmem>>, vector<24x128xf32>
    tpu.vector_store %arg11[%c264, %c0_27], %169 {strides = array<i32>} : memref<288x128xf32, #tpu.memory_space<vmem>>, vector<24x128xf32>,
    %c0_28 = arith.constant 0 : index
    %c0_29 = arith.constant 0 : index
    %171 = tpu.strided_load %arg11[%c0_28, %c0_29] {strides = array<i32: 2, 1>} : memref<288x128xf32, #tpu.memory_space<vmem>>, vector<144x128xf32>
    %c1_30 = arith.constant 1 : index
    %c0_31 = arith.constant 0 : index
    %172 = tpu.strided_load %arg11[%c1_30, %c0_31] {strides = array<i32: 2, 1>} : memref<288x128xf32, #tpu.memory_space<vmem>>, vector<144x128xf32>
    %173 = arith.maximumf %171, %172 : vector<144x128xf32>
    %c0_32 = arith.constant 0 : index
    %c0_33 = arith.constant 0 : index
    %174 = vector.load %arg6[%c0_32, %c0_33] : memref<64x144xf32, #tpu.memory_space<vmem>>, vector<64x144xf32>
    %cst_34 = arith.constant dense<0.000000e+00> : vector<64x128xf32>
    %175 = tpu.matmul %174, %173, %cst_34 {dimension_numbers = #tpu.dot_dimension_numbers<[1], [0], [0], [1], [0, 0, 1, 1], [], []>} : vector<64x144xf32>, vector<144x128xf32>, vector<64x128xf32> -> vector<64x128xf32>
    %c0_35 = arith.constant 0 : index
    %c0_36 = arith.constant 0 : index
    %176 = vector.load %arg7[%c0_35, %c0_36] : memref<64x1xf32, #tpu.memory_space<vmem>>, vector<64x1xf32>
    %177 = vector.broadcast %176 : vector<64x1xf32> to vector<64x128xf32>
    %178 = arith.addf %175, %177 : vector<64x128xf32>
    %cst_37 = arith.constant 0.000000e+00 : f32
    %179 = vector.broadcast %cst_37 : f32 to vector<64x128xf32>
    %180 = arith.maximumf %178, %179 : vector<64x128xf32>
    %c0_38 = arith.constant 0 : index
    %c0_39 = arith.constant 0 : index
    %181 = vector.load %arg8[%c0_38, %c0_39] : memref<10x64xf32, #tpu.memory_space<vmem>>, vector<10x64xf32>
    %cst_40 = arith.constant dense<0.000000e+00> : vector<10x128xf32>
    %182 = tpu.matmul %181, %180, %cst_40 {dimension_numbers = #tpu.dot_dimension_numbers<[1], [0], [0], [1], [0, 0, 1, 1], [], []>} : vector<10x64xf32>, vector<64x128xf32>, vector<10x128xf32> -> vector<10x128xf32>
    %c0_41 = arith.constant 0 : index
    %c0_42 = arith.constant 0 : index
    %183 = vector.load %arg9[%c0_41, %c0_42] : memref<10x1xf32, #tpu.memory_space<vmem>>, vector<10x1xf32>
    %184 = vector.broadcast %183 : vector<10x1xf32> to vector<10x128xf32>
    %185 = arith.addf %182, %184 : vector<10x128xf32>
    %c0_43 = arith.constant 0 : index
    %c0_44 = arith.constant 0 : index
    %186 = vector.load %arg10[%c0_43, %c0_44] : memref<10x128xf32, #tpu.memory_space<vmem>>, vector<10x128xf32>
    tpu.vector_store %arg10[%c0_43, %c0_44], %185 {strides = array<i32>} : memref<10x128xf32, #tpu.memory_space<vmem>>, vector<10x128xf32>,
    return
  }
  func.func @transform_0(%arg0: i32) -> (i32, i32, i32) {
    %c0_i32 = arith.constant 0 : i32
    %c0_i32_0 = arith.constant 0 : i32
    %c0_i32_1 = arith.constant 0 : i32
    return %c0_i32, %c0_i32_0, %arg0 : i32, i32, i32
  }
  func.func @transform_1(%arg0: i32) -> i32 {
    %c0_i32 = arith.constant 0 : i32
    %c0_i32_0 = arith.constant 0 : i32
    return %c0_i32 : i32
  }
  func.func @transform_2(%arg0: i32) -> i32 {
    %c0_i32 = arith.constant 0 : i32
    %c0_i32_0 = arith.constant 0 : i32
    return %c0_i32 : i32
  }
  func.func @transform_3(%arg0: i32) -> i32 {
    %c0_i32 = arith.constant 0 : i32
    %c0_i32_0 = arith.constant 0 : i32
    return %c0_i32 : i32
  }
  func.func @transform_4(%arg0: i32) -> i32 {
    %c0_i32 = arith.constant 0 : i32
    %c0_i32_0 = arith.constant 0 : i32
    return %c0_i32 : i32
  }
  func.func @transform_5(%arg0: i32) -> (i32, i32) {
    %c0_i32 = arith.constant 0 : i32
    %c0_i32_0 = arith.constant 0 : i32
    %c0_i32_1 = arith.constant 0 : i32
    return %c0_i32, %c0_i32_0 : i32, i32
  }
  func.func @transform_6(%arg0: i32) -> (i32, i32) {
    %c0_i32 = arith.constant 0 : i32
    %c0_i32_0 = arith.constant 0 : i32
    %c0_i32_1 = arith.constant 0 : i32
    return %c0_i32, %c0_i32_0 : i32, i32
  }
  func.func @transform_7(%arg0: i32) -> (i32, i32) {
    %c0_i32 = arith.constant 0 : i32
    %c0_i32_0 = arith.constant 0 : i32
    %c0_i32_1 = arith.constant 0 : i32
    return %c0_i32, %c0_i32_0 : i32, i32
  }
  func.func @transform_8(%arg0: i32) -> (i32, i32) {
    %c0_i32 = arith.constant 0 : i32
    %c0_i32_0 = arith.constant 0 : i32
    %c0_i32_1 = arith.constant 0 : i32
    return %c0_i32, %c0_i32_0 : i32, i32
  }
  func.func @transform_9(%arg0: i32) -> (i32, i32) {
    %c0_i32 = arith.constant 0 : i32
    %c0_i32_0 = arith.constant 0 : i32
    return %c0_i32, %arg0 : i32, i32
  }
}

</mosaic_0001>

<llo_original>
// kernel: tpu_custom_call.1
$region0: #{tpu_custom_call.1}
  #allocation0 [shape = 'u32[]', space=smem, size = 0x4, offset = 0x4, fixed_abs, tag = 'smem constant byte address 0x4 - core index']
  #allocation1 [shape = 'u32[72,128]{1,0:T(1,128)}', space=vmem, size = 0x9000, scoped, tag = 'internal scratch']
  #allocation2 [shape = 'f32[288,128]{1,0:T(8,128)}', space=vmem, size = 0x24000, scoped, tag = 'scratch operand']
  #allocation3 [shape = 'f32[1]{0:T(128)S(6)}', space=smem, size = 0x200, scoped, tag = 'scoped memory for tpu_custom_call.1']
  #allocation4 [shape = 'f32[1]{0:T(128)S(6)}', space=smem, size = 0x200, scoped, tag = 'scoped memory for tpu_custom_call.1']
  %s0 = inlined_call_operand.hbm [shape: f32[28,28,128], index: 0, kind: input, shape index: {}]
  %s1 = inlined_call_operand.vmem [shape: f32[9], index: 1, kind: input, shape index: {}]
  %s2 = inlined_call_operand.<no memory space> [shape: f32[1], index: 2, kind: input, shape index: {}]
  %s3 = inlined_call_operand.vmem [shape: f32[9], index: 3, kind: input, shape index: {}]
  %s4 = inlined_call_operand.<no memory space> [shape: f32[1], index: 4, kind: input, shape index: {}]
  %s5 = inlined_call_operand.hbm [shape: f32[64,144], index: 5, kind: input, shape index: {}]
  %s6 = inlined_call_operand.vmem [shape: f32[64,1], index: 6, kind: input, shape index: {}]
  %s7 = inlined_call_operand.vmem [shape: f32[10,64], index: 7, kind: input, shape index: {}]
  %s8 = inlined_call_operand.vmem [shape: f32[10,1], index: 8, kind: input, shape index: {}]
  %s9 = inlined_call_operand.hbm [shape: f32[10,128], index: 9, kind: output, shape index: {}]
  %s10 = sld [smem:[#allocation0]]
  $region62: #{tpu_custom_call.1} parent=0
    _
  %s12 = ssub.s32 1, %s10
  %s13 = scalar_select 0, %s12, %s10
  %14 = sst [smem:[#allocation3]] %s2
  %15 = sst [smem:[#allocation4]] %s4
  $region1: #{tpu_custom_call.1} parent=0
    #allocation5 [shape = 'u8[458752]{0}', space=vmem, size = 0x70000, scoped, tag = 'input window, operand 0, single buffered']
    #allocation6 [shape = 's32[1]{0}', space=sflag, size = 0x4, scoped, tag = 'scoped memory for tpu_custom_call.1']
    #allocation7 [shape = 's32[1]{0}', space=sflag, size = 0x4, scoped, tag = 'scoped memory for tpu_custom_call.1']
    #allocation8 [shape = 's32[1]{0}', space=sflag, size = 0x4, scoped, tag = 'scoped memory for tpu_custom_call.1']
    #allocation9 [shape = 'u8[512]{0}', space=smem, size = 0x200, scoped, tag = 'input window, operand 1, single buffered']
    #allocation10 [shape = 'u8[512]{0}', space=smem, size = 0x200, scoped, tag = 'input window, operand 3, single buffered']
    #allocation11 [shape = 's32[1]{0}', space=sflag, size = 0x4, scoped, tag = 'scoped memory for tpu_custom_call.1']
    #allocation12 [shape = 'u8[65536]{0}', space=vmem, size = 0x10000, scoped, tag = 'input window, operand 5, single buffered']
    #allocation13 [shape = 's32[1]{0}', space=sflag, size = 0x4, scoped, tag = 'scoped memory for tpu_custom_call.1']
    #allocation14 [shape = 'u8[8192]{0}', space=vmem, size = 0x2000, scoped, tag = 'output window, operand 0, single buffered']
    %16 = vsyncpa [#allocation6], 0
    %17 = vsyncpa [#allocation8], 0
    %18 = vsyncpa [#allocation11], 0
    %19 = vsyncpa [#allocation13], 0
    %20 = vsyncpa [#allocation7], 0
    // Predicated region
    $region2: #{tpu_custom_call.1} parent=1 // pred_check
      _
    $region3: #{tpu_custom_call.1} parent=1 // pred_check_branch
      %22 = sbr.rel (0) target = $region5
    $region4: #{tpu_custom_call.1} parent=1 // pred_region
      %24 = vsyncadd [#allocation6], 0
      %s25 = sshll.u32 %s0, 4
      %s26 = int_to_ptr.hbm [resolvable:$true] %s25
      %s27 = sshll.u32 [#allocation5], 4
      %s28 = int_to_ptr.vmem [resolvable:$true] %s27
      %33 = dma.hbm_to_vmem [thread:$0]  %s26, 14336, %s28, [#allocation6], 128, 128, 8
    $region5: #{tpu_custom_call.1} parent=1 // pred_fallthru
      _
    // Predicated region
    $region6: #{tpu_custom_call.1} parent=1 // pred_check
      _
    $region7: #{tpu_custom_call.1} parent=1 // pred_check_branch
      %35 = sbr.rel (0) target = $region9
    $region8: #{tpu_custom_call.1} parent=1 // pred_region
      %37 = vsyncadd [#allocation8], 0
      %s39 = sshll.u32 %s1, 4
      %s40 = int_to_ptr.vmem [resolvable:$true] %s39
      %42 = dma.vmem_to_smem %s40, 16, [#allocation9], [#allocation8]
    $region9: #{tpu_custom_call.1} parent=1 // pred_fallthru
      _
    // Predicated region
    $region10: #{tpu_custom_call.1} parent=1 // pred_check
      _
    $region11: #{tpu_custom_call.1} parent=1 // pred_check_branch
      %44 = sbr.rel (0) target = $region13
    $region12: #{tpu_custom_call.1} parent=1 // pred_region
      _
    $region13: #{tpu_custom_call.1} parent=1 // pred_fallthru
      _
    // Predicated region
    $region14: #{tpu_custom_call.1} parent=1 // pred_check
      _
    $region15: #{tpu_custom_call.1} parent=1 // pred_check_branch
      %46 = sbr.rel (0) target = $region17
    $region16: #{tpu_custom_call.1} parent=1 // pred_region
      %48 = vsyncadd [#allocation11], 0
      %s50 = sshll.u32 %s3, 4
      %s51 = int_to_ptr.vmem [resolvable:$true] %s50
      %53 = dma.vmem_to_smem %s51, 16, [#allocation10], [#allocation11]
    $region17: #{tpu_custom_call.1} parent=1 // pred_fallthru
      _
    // Predicated region
    $region18: #{tpu_custom_call.1} parent=1 // pred_check
      _
    $region19: #{tpu_custom_call.1} parent=1 // pred_check_branch
      %55 = sbr.rel (0) target = $region21
    $region20: #{tpu_custom_call.1} parent=1 // pred_region
      _
    $region21: #{tpu_custom_call.1} parent=1 // pred_fallthru
      _
    // Predicated region
    $region22: #{tpu_custom_call.1} parent=1 // pred_check
      _
    $region23: #{tpu_custom_call.1} parent=1 // pred_check_branch
      %57 = sbr.rel (0) target = $region25
    $region24: #{tpu_custom_call.1} parent=1 // pred_region
      %59 = vsyncadd [#allocation13], 0
      %s60 = sshll.u32 %s5, 4
      %s61 = int_to_ptr.hbm [resolvable:$true] %s60
      %s62 = sshll.u32 [#allocation12], 4
      %s63 = int_to_ptr.vmem [resolvable:$true] %s62
      %68 = dma.hbm_to_vmem [thread:$0]  %s61, 2048, %s63, [#allocation13], 256, 256, 16
    $region25: #{tpu_custom_call.1} parent=1 // pred_fallthru
      _
    // Predicated region
    $region26: #{tpu_custom_call.1} parent=1 // pred_check
      _
    $region27: #{tpu_custom_call.1} parent=1 // pred_check_branch
      %70 = sbr.rel (0) target = $region29
    $region28: #{tpu_custom_call.1} parent=1 // pred_region
      _
    $region29: #{tpu_custom_call.1} parent=1 // pred_fallthru
      _
    // Predicated region
    $region30: #{tpu_custom_call.1} parent=1 // pred_check
      _
    $region31: #{tpu_custom_call.1} parent=1 // pred_check_branch
      %72 = sbr.rel (0) target = $region33
    $region32: #{tpu_custom_call.1} parent=1 // pred_region
      _
    $region33: #{tpu_custom_call.1} parent=1 // pred_fallthru
      _
    // Predicated region
    $region34: #{tpu_custom_call.1} parent=1 // pred_check
      _
    $region35: #{tpu_custom_call.1} parent=1 // pred_check_branch
      %74 = sbr.rel (0) target = $region37
    $region36: #{tpu_custom_call.1} parent=1 // pred_region
      _
    $region37: #{tpu_custom_call.1} parent=1 // pred_fallthru
      _
    // Predicated region
    $region38: #{tpu_custom_call.1} parent=1 // pred_check
      _
    $region39: #{tpu_custom_call.1} parent=1 // pred_check_branch
      %76 = sbr.rel (0) target = $region41
    $region40: #{tpu_custom_call.1} parent=1 // pred_region
      %78 = dma.done [#allocation6], 14336
    $region41: #{tpu_custom_call.1} parent=1 // pred_fallthru
      _
    // Predicated region
    $region42: #{tpu_custom_call.1} parent=1 // pred_check
      _
    $region43: #{tpu_custom_call.1} parent=1 // pred_check_branch
      %80 = sbr.rel (0) target = $region45
    $region44: #{tpu_custom_call.1} parent=1 // pred_region
      %82 = dma.done [#allocation8], 16
    $region45: #{tpu_custom_call.1} parent=1 // pred_fallthru
      _
    // Predicated region
    $region46: #{tpu_custom_call.1} parent=1 // pred_check
      _
    $region47: #{tpu_custom_call.1} parent=1 // pred_check_branch
      %84 = sbr.rel (0) target = $region49
    $region48: #{tpu_custom_call.1} parent=1 // pred_region
      %86 = dma.done [#allocation11], 16
    $region49: #{tpu_custom_call.1} parent=1 // pred_fallthru
      _
    // Predicated region
    $region50: #{tpu_custom_call.1} parent=1 // pred_check
      _
    $region51: #{tpu_custom_call.1} parent=1 // pred_check_branch
      %88 = sbr.rel (0) target = $region53
    $region52: #{tpu_custom_call.1} parent=1 // pred_region
      %90 = dma.done [#allocation13], 2048
    $region53: #{tpu_custom_call.1} parent=1 // pred_fallthru
      _
    %91 = sfence
    %v92 = vld [vmem:[#allocation5] sm:$0xff]
    %v93 = vld [vmem:[#allocation5 + $0x8] sm:$0xff]
    %v94 = vld [vmem:[#allocation5 + $0x10] sm:$0xff]
    %v95 = vld [vmem:[#allocation5 + $0x18] sm:$0xf]
    %v96 = vld [vmem:[#allocation5 + $0x20] sm:$0xff]
    %v97 = vld [vmem:[#allocation5 + $0x28] sm:$0xff]
    %v98 = vld [vmem:[#allocation5 + $0x30] sm:$0xff]
    %v99 = vld [vmem:[#allocation5 + $0x38] sm:$0xf]
    %v100 = vld [vmem:[#allocation5 + $0x40] sm:$0xff]
    %v101 = vld [vmem:[#allocation5 + $0x48] sm:$0xff]
    %v102 = vld [vmem:[#allocation5 + $0x50] sm:$0xff]
    %v103 = vld [vmem:[#allocation5 + $0x58] sm:$0xf]
    %v104 = vld [vmem:[#allocation5 + $0x60] sm:$0xff]
    %v105 = vld [vmem:[#allocation5 + $0x68] sm:$0xff]
    %v106 = vld [vmem:[#allocation5 + $0x70] sm:$0xff]
    %v107 = vld [vmem:[#allocation5 + $0x78] sm:$0xf]
    %v108 = vld [vmem:[#allocation5 + $0x80] sm:$0xff]
    %v109 = vld [vmem:[#allocation5 + $0x88] sm:$0xff]
    %v110 = vld [vmem:[#allocation5 + $0x90] sm:$0xff]
    %v111 = vld [vmem:[#allocation5 + $0x98] sm:$0xf]
    %v112 = vld [vmem:[#allocation5 + $0xa0] sm:$0xff]
    %v113 = vld [vmem:[#allocation5 + $0xa8] sm:$0xff]
    %v114 = vld [vmem:[#allocation5 + $0xb0] sm:$0xff]
    %v115 = vld [vmem:[#allocation5 + $0xb8] sm:$0xf]
    %v116 = vld [vmem:[#allocation5 + $0xc0] sm:$0xff]
    %v117 = vld [vmem:[#allocation5 + $0xc8] sm:$0xff]
    %v118 = vld [vmem:[#allocation5 + $0xd0] sm:$0xff]
    %v119 = vld [vmem:[#allocation5 + $0xd8] sm:$0xf]
    %v120 = vld [vmem:[#allocation5 + $0xe0] sm:$0xff]
    %v121 = vld [vmem:[#allocation5 + $0xe8] sm:$0xff]
    %v122 = vld [vmem:[#allocation5 + $0xf0] sm:$0xff]
    %v123 = vld [vmem:[#allocation5 + $0xf8] sm:$0xf]
    %v124 = vld [vmem:[#allocation5 + $0x100] sm:$0xff]
    %v125 = vld [vmem:[#allocation5 + $0x108] sm:$0xff]
    %v126 = vld [vmem:[#allocation5 + $0x110] sm:$0xff]
    %v127 = vld [vmem:[#allocation5 + $0x118] sm:$0xf]
    %v128 = vld [vmem:[#allocation5 + $0x120] sm:$0xff]
    %v129 = vld [vmem:[#allocation5 + $0x128] sm:$0xff]
    %v130 = vld [vmem:[#allocation5 + $0x130] sm:$0xff]
    %v131 = vld [vmem:[#allocation5 + $0x138] sm:$0xf]
    %v132 = vld [vmem:[#allocation5 + $0x140] sm:$0xff]
    %v133 = vld [vmem:[#allocation5 + $0x148] sm:$0xff]
    %v134 = vld [vmem:[#allocation5 + $0x150] sm:$0xff]
    %v135 = vld [vmem:[#allocation5 + $0x158] sm:$0xf]
    %v136 = vld [vmem:[#allocation5 + $0x160] sm:$0xff]
    %v137 = vld [vmem:[#allocation5 + $0x168] sm:$0xff]
    %v138 = vld [vmem:[#allocation5 + $0x170] sm:$0xff]
    %v139 = vld [vmem:[#allocation5 + $0x178] sm:$0xf]
    %v140 = vld [vmem:[#allocation5 + $0x180] sm:$0xff]
    %v141 = vld [vmem:[#allocation5 + $0x188] sm:$0xff]
    %v142 = vld [vmem:[#allocation5 + $0x190] sm:$0xff]
    %v143 = vld [vmem:[#allocation5 + $0x198] sm:$0xf]
    %v144 = vld [vmem:[#allocation5 + $0x1a0] sm:$0xff]
    %v145 = vld [vmem:[#allocation5 + $0x1a8] sm:$0xff]
    %v146 = vld [vmem:[#allocation5 + $0x1b0] sm:$0xff]
    %v147 = vld [vmem:[#allocation5 + $0x1b8] sm:$0xf]
    %v148 = vld [vmem:[#allocation5 + $0x1c0] sm:$0xff]
    %v149 = vld [vmem:[#allocation5 + $0x1c8] sm:$0xff]
    %v150 = vld [vmem:[#allocation5 + $0x1d0] sm:$0xff]
    %v151 = vld [vmem:[#allocation5 + $0x1d8] sm:$0xf]
    %v152 = vld [vmem:[#allocation5 + $0x1e0] sm:$0xff]
    %v153 = vld [vmem:[#allocation5 + $0x1e8] sm:$0xff]
    %v154 = vld [vmem:[#allocation5 + $0x1f0] sm:$0xff]
    %v155 = vld [vmem:[#allocation5 + $0x1f8] sm:$0xf]
    %v156 = vld [vmem:[#allocation5 + $0x200] sm:$0xff]
    %v157 = vld [vmem:[#allocation5 + $0x208] sm:$0xff]
    %v158 = vld [vmem:[#allocation5 + $0x210] sm:$0xff]
    %v159 = vld [vmem:[#allocation5 + $0x218] sm:$0xf]
    %v160 = vld [vmem:[#allocation5 + $0x220] sm:$0xff]
    %v161 = vld [vmem:[#allocation5 + $0x228] sm:$0xff]
    %v162 = vld [vmem:[#allocation5 + $0x230] sm:$0xff]
    %v163 = vld [vmem:[#allocation5 + $0x238] sm:$0xf]
    %v164 = vld [vmem:[#allocation5 + $0x240] sm:$0xff]
    %v165 = vld [vmem:[#allocation5 + $0x248] sm:$0xff]
    %v166 = vld [vmem:[#allocation5 + $0x250] sm:$0xff]
    %v167 = vld [vmem:[#allocation5 + $0x258] sm:$0xf]
    %v168 = vld [vmem:[#allocation5 + $0x260] sm:$0xff]
    %v169 = vld [vmem:[#allocation5 + $0x268] sm:$0xff]
    %v170 = vld [vmem:[#allocation5 + $0x270] sm:$0xff]
    %v171 = vld [vmem:[#allocation5 + $0x278] sm:$0xf]
    %v172 = vld [vmem:[#allocation5 + $0x280] sm:$0xff]
    %v173 = vld [vmem:[#allocation5 + $0x288] sm:$0xff]
    %v174 = vld [vmem:[#allocation5 + $0x290] sm:$0xff]
    %v175 = vld [vmem:[#allocation5 + $0x298] sm:$0xf]
    %v176 = vld [vmem:[#allocation5 + $0x2a0] sm:$0xff]
    %v177 = vld [vmem:[#allocation5 + $0x2a8] sm:$0xff]
    %v178 = vld [vmem:[#allocation5 + $0x2b0] sm:$0xff]
    %v179 = vld [vmem:[#allocation5 + $0x2b8] sm:$0xf]
    %v180 = vld [vmem:[#allocation5 + $0x2c0] sm:$0xff]
    %v181 = vld [vmem:[#allocation5 + $0x2c8] sm:$0xff]
    %v182 = vld [vmem:[#allocation5 + $0x2d0] sm:$0xff]
    %v183 = vld [vmem:[#allocation5 + $0x2d8] sm:$0xf]
    %v184 = vld [vmem:[#allocation5 + $0x2e0] sm:$0xff]
    %v185 = vld [vmem:[#allocation5 + $0x2e8] sm:$0xff]
    %v186 = vld [vmem:[#allocation5 + $0x2f0] sm:$0xff]
    %v187 = vld [vmem:[#allocation5 + $0x2f8] sm:$0xf]
    %v188 = vld [vmem:[#allocation5 + $0x300] sm:$0xff]
    %v189 = vld [vmem:[#allocation5 + $0x308] sm:$0xff]
    %v190 = vld [vmem:[#allocation5 + $0x310] sm:$0xff]
    %v191 = vld [vmem:[#allocation5 + $0x318] sm:$0xf]
    %v192 = vld [vmem:[#allocation5 + $0x320] sm:$0xff]
    %v193 = vld [vmem:[#allocation5 + $0x328] sm:$0xff]
    %v194 = vld [vmem:[#allocation5 + $0x330] sm:$0xff]
    %v195 = vld [vmem:[#allocation5 + $0x338] sm:$0xf]
    %v196 = vld [vmem:[#allocation5 + $0x340] sm:$0xff]
    %v197 = vld [vmem:[#allocation5 + $0x348] sm:$0xff]
    %v198 = vld [vmem:[#allocation5 + $0x350] sm:$0xff]
    %v199 = vld [vmem:[#allocation5 + $0x358] sm:$0xf]
    %v200 = vld [vmem:[#allocation5 + $0x360] sm:$0xff]
    %v201 = vld [vmem:[#allocation5 + $0x368] sm:$0xff]
    %v202 = vld [vmem:[#allocation5 + $0x370] sm:$0xff]
    %v203 = vld [vmem:[#allocation5 + $0x378] sm:$0xf]
    %s204 = sld [smem:[#allocation9]]
    %v205 = vstv %s204
    %v206 = vmul.f32 %v92, %v205
    %v207 = vmul.f32 %v93, %v205
    %v208 = vmul.f32 %v94, %v205
    %v209 = vmul.f32 %v95, %v205
    %v210 = vmul.f32 %v96, %v205
    %v211 = vmul.f32 %v97, %v205
    %v212 = vmul.f32 %v98, %v205
    %v213 = vmul.f32 %v99, %v205
    %v214 = vmul.f32 %v100, %v205
    %v215 = vmul.f32 %v101, %v205
    %v216 = vmul.f32 %v102, %v205
    %v217 = vmul.f32 %v103, %v205
    %v218 = vmul.f32 %v104, %v205
    %v219 = vmul.f32 %v105, %v205
    %v220 = vmul.f32 %v106, %v205
    %v221 = vmul.f32 %v107, %v205
    %v222 = vmul.f32 %v108, %v205
    %v223 = vmul.f32 %v109, %v205
    %v224 = vmul.f32 %v110, %v205
    %v225 = vmul.f32 %v111, %v205
    %v226 = vmul.f32 %v112, %v205
    %v227 = vmul.f32 %v113, %v205
    %v228 = vmul.f32 %v114, %v205
    %v229 = vmul.f32 %v115, %v205
    %v230 = vmul.f32 %v116, %v205
    %v231 = vmul.f32 %v117, %v205
    %v232 = vmul.f32 %v118, %v205
    %v233 = vmul.f32 %v119, %v205
    %v234 = vmul.f32 %v120, %v205
    %v235 = vmul.f32 %v121, %v205
    %v236 = vmul.f32 %v122, %v205
    %v237 = vmul.f32 %v123, %v205
    %v238 = vmul.f32 %v124, %v205
    %v239 = vmul.f32 %v125, %v205
    %v240 = vmul.f32 %v126, %v205
    %v241 = vmul.f32 %v127, %v205
    %v242 = vmul.f32 %v128, %v205
    %v243 = vmul.f32 %v129, %v205
    %v244 = vmul.f32 %v130, %v205
    %v245 = vmul.f32 %v131, %v205
    %v246 = vmul.f32 %v132, %v205
    %v247 = vmul.f32 %v133, %v205
    %v248 = vmul.f32 %v134, %v205
    %v249 = vmul.f32 %v135, %v205
    %v250 = vmul.f32 %v136, %v205
    %v251 = vmul.f32 %v137, %v205
    %v252 = vmul.f32 %v138, %v205
    %v253 = vmul.f32 %v139, %v205
    %v254 = vmul.f32 %v140, %v205
    %v255 = vmul.f32 %v141, %v205
    %v256 = vmul.f32 %v142, %v205
    %v257 = vmul.f32 %v143, %v205
    %v258 = vmul.f32 %v144, %v205
    %v259 = vmul.f32 %v145, %v205
    %v260 = vmul.f32 %v146, %v205
    %v261 = vmul.f32 %v147, %v205
    %v262 = vmul.f32 %v148, %v205
    %v263 = vmul.f32 %v149, %v205
    %v264 = vmul.f32 %v150, %v205
    %v265 = vmul.f32 %v151, %v205
    %v266 = vmul.f32 %v152, %v205
    %v267 = vmul.f32 %v153, %v205
    %v268 = vmul.f32 %v154, %v205
    %v269 = vmul.f32 %v155, %v205
    %v270 = vmul.f32 %v156, %v205
    %v271 = vmul.f32 %v157, %v205
    %v272 = vmul.f32 %v158, %v205
    %v273 = vmul.f32 %v159, %v205
    %v274 = vmul.f32 %v160, %v205
    %v275 = vmul.f32 %v161, %v205
    %v276 = vmul.f32 %v162, %v205
    %v277 = vmul.f32 %v163, %v205
    %v278 = vmul.f32 %v164, %v205
    %v279 = vmul.f32 %v165, %v205
    %v280 = vmul.f32 %v166, %v205
    %v281 = vmul.f32 %v167, %v205
    %v282 = vmul.f32 %v168, %v205
    %v283 = vmul.f32 %v169, %v205
    %v284 = vmul.f32 %v170, %v205
    %v285 = vmul.f32 %v171, %v205
    %v286 = vmul.f32 %v172, %v205
    %v287 = vmul.f32 %v173, %v205
    %v288 = vmul.f32 %v174, %v205
    %v289 = vmul.f32 %v175, %v205
    %v290 = vmul.f32 %v176, %v205
    %v291 = vmul.f32 %v177, %v205
    %v292 = vmul.f32 %v178, %v205
    %v293 = vmul.f32 %v179, %v205
    %v294 = vmul.f32 %v180, %v205
    %v295 = vmul.f32 %v181, %v205
    %v296 = vmul.f32 %v182, %v205
    %v297 = vmul.f32 %v183, %v205
    %v298 = vmul.f32 %v184, %v205
    %v299 = vmul.f32 %v185, %v205
    %v300 = vmul.f32 %v186, %v205
    %v301 = vmul.f32 %v187, %v205
    %v302 = vmul.f32 %v188, %v205
    %v303 = vmul.f32 %v189, %v205
    %v304 = vmul.f32 %v190, %v205
    %v305 = vmul.f32 %v191, %v205
    %v306 = vmul.f32 %v192, %v205
    %v307 = vmul.f32 %v193, %v205
    %v308 = vmul.f32 %v194, %v205
    %v309 = vmul.f32 %v195, %v205
    %s310 = sld [smem:[#allocation9 + $0x1]]
    %v311 = vstv %s310
    %v312 = vmul.f32 %v92, %v311
    %v313 = vmul.f32 %v93, %v311
    %v314 = vmul.f32 %v94, %v311
    %v315 = vmul.f32 %v95, %v311
    %v316 = vmul.f32 %v96, %v311
    %v317 = vmul.f32 %v97, %v311
    %v318 = vmul.f32 %v98, %v311
    %v319 = vmul.f32 %v99, %v311
    %v320 = vmul.f32 %v100, %v311
    %v321 = vmul.f32 %v101, %v311
    %v322 = vmul.f32 %v102, %v311
    %v323 = vmul.f32 %v103, %v311
    %v324 = vmul.f32 %v104, %v311
    %v325 = vmul.f32 %v105, %v311
    %v326 = vmul.f32 %v106, %v311
    %v327 = vmul.f32 %v107, %v311
    %v328 = vmul.f32 %v108, %v311
    %v329 = vmul.f32 %v109, %v311
    %v330 = vmul.f32 %v110, %v311
    %v331 = vmul.f32 %v111, %v311
    %v332 = vmul.f32 %v112, %v311
    %v333 = vmul.f32 %v113, %v311
    %v334 = vmul.f32 %v114, %v311
    %v335 = vmul.f32 %v115, %v311
    %v336 = vmul.f32 %v116, %v311
    %v337 = vmul.f32 %v117, %v311
    %v338 = vmul.f32 %v118, %v311
    %v339 = vmul.f32 %v119, %v311
    %v340 = vmul.f32 %v120, %v311
    %v341 = vmul.f32 %v121, %v311
    %v342 = vmul.f32 %v122, %v311
    %v343 = vmul.f32 %v123, %v311
    %v344 = vmul.f32 %v124, %v311
    %v345 = vmul.f32 %v125, %v311
    %v346 = vmul.f32 %v126, %v311
    %v347 = vmul.f32 %v127, %v311
    %v348 = vmul.f32 %v128, %v311
    %v349 = vmul.f32 %v129, %v311
    %v350 = vmul.f32 %v130, %v311
    %v351 = vmul.f32 %v131, %v311
    %v352 = vmul.f32 %v132, %v311
    %v353 = vmul.f32 %v133, %v311
    %v354 = vmul.f32 %v134, %v311
    %v355 = vmul.f32 %v135, %v311
    %v356 = vmul.f32 %v136, %v311
    %v357 = vmul.f32 %v137, %v311
    %v358 = vmul.f32 %v138, %v311
    %v359 = vmul.f32 %v139, %v311
    %v360 = vmul.f32 %v140, %v311
    %v361 = vmul.f32 %v141, %v311
    %v362 = vmul.f32 %v142, %v311
    %v363 = vmul.f32 %v143, %v311
    %v364 = vmul.f32 %v144, %v311
    %v365 = vmul.f32 %v145, %v311
    %v366 = vmul.f32 %v146, %v311
    %v367 = vmul.f32 %v147, %v311
    %v368 = vmul.f32 %v148, %v311
    %v369 = vmul.f32 %v149, %v311
    %v370 = vmul.f32 %v150, %v311
    %v371 = vmul.f32 %v151, %v311
    %v372 = vmul.f32 %v152, %v311
    %v373 = vmul.f32 %v153, %v311
    %v374 = vmul.f32 %v154, %v311
    %v375 = vmul.f32 %v155, %v311
    %v376 = vmul.f32 %v156, %v311
    %v377 = vmul.f32 %v157, %v311
    %v378 = vmul.f32 %v158, %v311
    %v379 = vmul.f32 %v159, %v311
    %v380 = vmul.f32 %v160, %v311
    %v381 = vmul.f32 %v161, %v311
    %v382 = vmul.f32 %v162, %v311
    %v383 = vmul.f32 %v163, %v311
    %v384 = vmul.f32 %v164, %v311
    %v385 = vmul.f32 %v165, %v311
    %v386 = vmul.f32 %v166, %v311
    %v387 = vmul.f32 %v167, %v311
    %v388 = vmul.f32 %v168, %v311
    %v389 = vmul.f32 %v169, %v311
    %v390 = vmul.f32 %v170, %v311
    %v391 = vmul.f32 %v171, %v311
    %v392 = vmul.f32 %v172, %v311
    %v393 = vmul.f32 %v173, %v311
    %v394 = vmul.f32 %v174, %v311
    %v395 = vmul.f32 %v175, %v311
    %v396 = vmul.f32 %v176, %v311
    %v397 = vmul.f32 %v177, %v311
    %v398 = vmul.f32 %v178, %v311
    %v399 = vmul.f32 %v179, %v311
    %v400 = vmul.f32 %v180, %v311
    %v401 = vmul.f32 %v181, %v311
    %v402 = vmul.f32 %v182, %v311
    %v403 = vmul.f32 %v183, %v311
    %v404 = vmul.f32 %v184, %v311
    %v405 = vmul.f32 %v185, %v311
    %v406 = vmul.f32 %v186, %v311
    %v407 = vmul.f32 %v187, %v311
    %v408 = vmul.f32 %v188, %v311
    %v409 = vmul.f32 %v189, %v311
    %v410 = vmul.f32 %v190, %v311
    %v411 = vmul.f32 %v191, %v311
    %v412 = vmul.f32 %v192, %v311
    %v413 = vmul.f32 %v193, %v311
    %v414 = vmul.f32 %v194, %v311
    %v415 = vmul.f32 %v195, %v311
    %vm520 = vcmask 1046528
    %v521 = vrot.slane %v312, 1
    %v522 = vrot.slane %v313, 1
    %v523 = vsel %vm520, %v521, %v522
    %v524 = vrot.slane %v314, 1
    %v525 = vsel %vm520, %v522, %v524
    %v526 = vrot.slane %v315, 1
    %v527 = vsel %vm520, %v524, %v526
    %v528 = vrot.slane %v316, 1
    %v529 = vrot.slane %v317, 1
    %v530 = vsel %vm520, %v528, %v529
    %v531 = vrot.slane %v318, 1
    %v532 = vsel %vm520, %v529, %v531
    %v533 = vrot.slane %v319, 1
    %v534 = vsel %vm520, %v531, %v533
    %v535 = vrot.slane %v320, 1
    %v536 = vrot.slane %v321, 1
    %v537 = vsel %vm520, %v535, %v536
    %v538 = vrot.slane %v322, 1
    %v539 = vsel %vm520, %v536, %v538
    %v540 = vrot.slane %v323, 1
    %v541 = vsel %vm520, %v538, %v540
    %v542 = vrot.slane %v324, 1
    %v543 = vrot.slane %v325, 1
    %v544 = vsel %vm520, %v542, %v543
    %v545 = vrot.slane %v326, 1
    %v546 = vsel %vm520, %v543, %v545
    %v547 = vrot.slane %v327, 1
    %v548 = vsel %vm520, %v545, %v547
    %v549 = vrot.slane %v328, 1
    %v550 = vrot.slane %v329, 1
    %v551 = vsel %vm520, %v549, %v550
    %v552 = vrot.slane %v330, 1
    %v553 = vsel %vm520, %v550, %v552
    %v554 = vrot.slane %v331, 1
    %v555 = vsel %vm520, %v552, %v554
    %v556 = vrot.slane %v332, 1
    %v557 = vrot.slane %v333, 1
    %v558 = vsel %vm520, %v556, %v557
    %v559 = vrot.slane %v334, 1
    %v560 = vsel %vm520, %v557, %v559
    %v561 = vrot.slane %v335, 1
    %v562 = vsel %vm520, %v559, %v561
    %v563 = vrot.slane %v336, 1
    %v564 = vrot.slane %v337, 1
    %v565 = vsel %vm520, %v563, %v564
    %v566 = vrot.slane %v338, 1
    %v567 = vsel %vm520, %v564, %v566
    %v568 = vrot.slane %v339, 1
    %v569 = vsel %vm520, %v566, %v568
    %v570 = vrot.slane %v340, 1
    %v571 = vrot.slane %v341, 1
    %v572 = vsel %vm520, %v570, %v571
    %v573 = vrot.slane %v342, 1
    %v574 = vsel %vm520, %v571, %v573
    %v575 = vrot.slane %v343, 1
    %v576 = vsel %vm520, %v573, %v575
    %v577 = vrot.slane %v344, 1
    %v578 = vrot.slane %v345, 1
    %v579 = vsel %vm520, %v577, %v578
    %v580 = vrot.slane %v346, 1
    %v581 = vsel %vm520, %v578, %v580
    %v582 = vrot.slane %v347, 1
    %v583 = vsel %vm520, %v580, %v582
    %v584 = vrot.slane %v348, 1
    %v585 = vrot.slane %v349, 1
    %v586 = vsel %vm520, %v584, %v585
    %v587 = vrot.slane %v350, 1
    %v588 = vsel %vm520, %v585, %v587
    %v589 = vrot.slane %v351, 1
    %v590 = vsel %vm520, %v587, %v589
    %v591 = vrot.slane %v352, 1
    %v592 = vrot.slane %v353, 1
    %v593 = vsel %vm520, %v591, %v592
    %v594 = vrot.slane %v354, 1
    %v595 = vsel %vm520, %v592, %v594
    %v596 = vrot.slane %v355, 1
    %v597 = vsel %vm520, %v594, %v596
    %v598 = vrot.slane %v356, 1
    %v599 = vrot.slane %v357, 1
    %v600 = vsel %vm520, %v598, %v599
    %v601 = vrot.slane %v358, 1
    %v602 = vsel %vm520, %v599, %v601
    %v603 = vrot.slane %v359, 1
    %v604 = vsel %vm520, %v601, %v603
    %v605 = vrot.slane %v360, 1
    %v606 = vrot.slane %v361, 1
    %v607 = vsel %vm520, %v605, %v606
    %v608 = vrot.slane %v362, 1
    %v609 = vsel %vm520, %v606, %v608
    %v610 = vrot.slane %v363, 1
    %v611 = vsel %vm520, %v608, %v610
    %v612 = vrot.slane %v364, 1
    %v613 = vrot.slane %v365, 1
    %v614 = vsel %vm520, %v612, %v613
    %v615 = vrot.slane %v366, 1
    %v616 = vsel %vm520, %v613, %v615
    %v617 = vrot.slane %v367, 1
    %v618 = vsel %vm520, %v615, %v617
    %v619 = vrot.slane %v368, 1
    %v620 = vrot.slane %v369, 1
    %v621 = vsel %vm520, %v619, %v620
    %v622 = vrot.slane %v370, 1
    %v623 = vsel %vm520, %v620, %v622
    %v624 = vrot.slane %v371, 1
    %v625 = vsel %vm520, %v622, %v624
    %v626 = vrot.slane %v372, 1
    %v627 = vrot.slane %v373, 1
    %v628 = vsel %vm520, %v626, %v627
    %v629 = vrot.slane %v374, 1
    %v630 = vsel %vm520, %v627, %v629
    %v631 = vrot.slane %v375, 1
    %v632 = vsel %vm520, %v629, %v631
    %v633 = vrot.slane %v376, 1
    %v634 = vrot.slane %v377, 1
    %v635 = vsel %vm520, %v633, %v634
    %v636 = vrot.slane %v378, 1
    %v637 = vsel %vm520, %v634, %v636
    %v638 = vrot.slane %v379, 1
    %v639 = vsel %vm520, %v636, %v638
    %v640 = vrot.slane %v380, 1
    %v641 = vrot.slane %v381, 1
    %v642 = vsel %vm520, %v640, %v641
    %v643 = vrot.slane %v382, 1
    %v644 = vsel %vm520, %v641, %v643
    %v645 = vrot.slane %v383, 1
    %v646 = vsel %vm520, %v643, %v645
    %v647 = vrot.slane %v384, 1
    %v648 = vrot.slane %v385, 1
    %v649 = vsel %vm520, %v647, %v648
    %v650 = vrot.slane %v386, 1
    %v651 = vsel %vm520, %v648, %v650
    %v652 = vrot.slane %v387, 1
    %v653 = vsel %vm520, %v650, %v652
    %v654 = vrot.slane %v388, 1
    %v655 = vrot.slane %v389, 1
    %v656 = vsel %vm520, %v654, %v655
    %v657 = vrot.slane %v390, 1
    %v658 = vsel %vm520, %v655, %v657
    %v659 = vrot.slane %v391, 1
    %v660 = vsel %vm520, %v657, %v659
    %v661 = vrot.slane %v392, 1
    %v662 = vrot.slane %v393, 1
    %v663 = vsel %vm520, %v661, %v662
    %v664 = vrot.slane %v394, 1
    %v665 = vsel %vm520, %v662, %v664
    %v666 = vrot.slane %v395, 1
    %v667 = vsel %vm520, %v664, %v666
    %v668 = vrot.slane %v396, 1
    %v669 = vrot.slane %v397, 1
    %v670 = vsel %vm520, %v668, %v669
    %v671 = vrot.slane %v398, 1
    %v672 = vsel %vm520, %v669, %v671
    %v673 = vrot.slane %v399, 1
    %v674 = vsel %vm520, %v671, %v673
    %v675 = vrot.slane %v400, 1
    %v676 = vrot.slane %v401, 1
    %v677 = vsel %vm520, %v675, %v676
    %v678 = vrot.slane %v402, 1
    %v679 = vsel %vm520, %v676, %v678
    %v680 = vrot.slane %v403, 1
    %v681 = vsel %vm520, %v678, %v680
    %v682 = vrot.slane %v404, 1
    %v683 = vrot.slane %v405, 1
    %v684 = vsel %vm520, %v682, %v683
    %v685 = vrot.slane %v406, 1
    %v686 = vsel %vm520, %v683, %v685
    %v687 = vrot.slane %v407, 1
    %v688 = vsel %vm520, %v685, %v687
    %v689 = vrot.slane %v408, 1
    %v690 = vrot.slane %v409, 1
    %v691 = vsel %vm520, %v689, %v690
    %v692 = vrot.slane %v410, 1
    %v693 = vsel %vm520, %v690, %v692
    %v694 = vrot.slane %v411, 1
    %v695 = vsel %vm520, %v692, %v694
    %v696 = vrot.slane %v412, 1
    %v697 = vrot.slane %v413, 1
    %v698 = vsel %vm520, %v696, %v697
    %v699 = vrot.slane %v414, 1
    %v700 = vsel %vm520, %v697, %v699
    %v701 = vrot.slane %v415, 1
    %v702 = vsel %vm520, %v699, %v701
    %v807 = vadd.f32 %v206, %v523
    %v808 = vadd.f32 %v207, %v525
    %v809 = vadd.f32 %v208, %v527
    %v810 = vadd.f32 %v209, %v526
    %v811 = vadd.f32 %v210, %v530
    %v812 = vadd.f32 %v211, %v532
    %v813 = vadd.f32 %v212, %v534
    %v814 = vadd.f32 %v213, %v533
    %v815 = vadd.f32 %v214, %v537
    %v816 = vadd.f32 %v215, %v539
    %v817 = vadd.f32 %v216, %v541
    %v818 = vadd.f32 %v217, %v540
    %v819 = vadd.f32 %v218, %v544
    %v820 = vadd.f32 %v219, %v546
    %v821 = vadd.f32 %v220, %v548
    %v822 = vadd.f32 %v221, %v547
    %v823 = vadd.f32 %v222, %v551
    %v824 = vadd.f32 %v223, %v553
    %v825 = vadd.f32 %v224, %v555
    %v826 = vadd.f32 %v225, %v554
    %v827 = vadd.f32 %v226, %v558
    %v828 = vadd.f32 %v227, %v560
    %v829 = vadd.f32 %v228, %v562
    %v830 = vadd.f32 %v229, %v561
    %v831 = vadd.f32 %v230, %v565
    %v832 = vadd.f32 %v231, %v567
    %v833 = vadd.f32 %v232, %v569
    %v834 = vadd.f32 %v233, %v568
    %v835 = vadd.f32 %v234, %v572
    %v836 = vadd.f32 %v235, %v574
    %v837 = vadd.f32 %v236, %v576
    %v838 = vadd.f32 %v237, %v575
    %v839 = vadd.f32 %v238, %v579
    %v840 = vadd.f32 %v239, %v581
    %v841 = vadd.f32 %v240, %v583
    %v842 = vadd.f32 %v241, %v582
    %v843 = vadd.f32 %v242, %v586
    %v844 = vadd.f32 %v243, %v588
    %v845 = vadd.f32 %v244, %v590
    %v846 = vadd.f32 %v245, %v589
    %v847 = vadd.f32 %v246, %v593
    %v848 = vadd.f32 %v247, %v595
    %v849 = vadd.f32 %v248, %v597
    %v850 = vadd.f32 %v249, %v596
    %v851 = vadd.f32 %v250, %v600
    %v852 = vadd.f32 %v251, %v602
    %v853 = vadd.f32 %v252, %v604
    %v854 = vadd.f32 %v253, %v603
    %v855 = vadd.f32 %v254, %v607
    %v856 = vadd.f32 %v255, %v609
    %v857 = vadd.f32 %v256, %v611
    %v858 = vadd.f32 %v257, %v610
    %v859 = vadd.f32 %v258, %v614
    %v860 = vadd.f32 %v259, %v616
    %v861 = vadd.f32 %v260, %v618
    %v862 = vadd.f32 %v261, %v617
    %v863 = vadd.f32 %v262, %v621
    %v864 = vadd.f32 %v263, %v623
    %v865 = vadd.f32 %v264, %v625
    %v866 = vadd.f32 %v265, %v624
    %v867 = vadd.f32 %v266, %v628
    %v868 = vadd.f32 %v267, %v630
    %v869 = vadd.f32 %v268, %v632
    %v870 = vadd.f32 %v269, %v631
    %v871 = vadd.f32 %v270, %v635
    %v872 = vadd.f32 %v271, %v637
    %v873 = vadd.f32 %v272, %v639
    %v874 = vadd.f32 %v273, %v638
    %v875 = vadd.f32 %v274, %v642
    %v876 = vadd.f32 %v275, %v644
    %v877 = vadd.f32 %v276, %v646
    %v878 = vadd.f32 %v277, %v645
    %v879 = vadd.f32 %v278, %v649
    %v880 = vadd.f32 %v279, %v651
    %v881 = vadd.f32 %v280, %v653
    %v882 = vadd.f32 %v281, %v652
    %v883 = vadd.f32 %v282, %v656
    %v884 = vadd.f32 %v283, %v658
    %v885 = vadd.f32 %v284, %v660
    %v886 = vadd.f32 %v285, %v659
    %v887 = vadd.f32 %v286, %v663
    %v888 = vadd.f32 %v287, %v665
    %v889 = vadd.f32 %v288, %v667
    %v890 = vadd.f32 %v289, %v666
    %v891 = vadd.f32 %v290, %v670
    %v892 = vadd.f32 %v291, %v672
    %v893 = vadd.f32 %v292, %v674
    %v894 = vadd.f32 %v293, %v673
    %v895 = vadd.f32 %v294, %v677
    %v896 = vadd.f32 %v295, %v679
    %v897 = vadd.f32 %v296, %v681
    %v898 = vadd.f32 %v297, %v680
    %v899 = vadd.f32 %v298, %v684
    %v900 = vadd.f32 %v299, %v686
    %v901 = vadd.f32 %v300, %v688
    %v902 = vadd.f32 %v301, %v687
    %v903 = vadd.f32 %v302, %v691
    %v904 = vadd.f32 %v303, %v693
    %v905 = vadd.f32 %v304, %v695
    %v906 = vadd.f32 %v305, %v694
    %v907 = vadd.f32 %v306, %v698
    %v908 = vadd.f32 %v307, %v700
    %v909 = vadd.f32 %v308, %v702
    %v910 = vadd.f32 %v309, %v701
    %s911 = sld [smem:[#allocation9 + $0x2]]
    %v912 = vstv %s911
    %v913 = vmul.f32 %v92, %v912
    %v914 = vmul.f32 %v93, %v912
    %v915 = vmul.f32 %v94, %v912
    %v916 = vmul.f32 %v95, %v912
    %v917 = vmul.f32 %v96, %v912
    %v918 = vmul.f32 %v97, %v912
    %v919 = vmul.f32 %v98, %v912
    %v920 = vmul.f32 %v99, %v912
    %v921 = vmul.f32 %v100, %v912
    %v922 = vmul.f32 %v101, %v912
    %v923 = vmul.f32 %v102, %v912
    %v924 = vmul.f32 %v103, %v912
    %v925 = vmul.f32 %v104, %v912
    %v926 = vmul.f32 %v105, %v912
    %v927 = vmul.f32 %v106, %v912
    %v928 = vmul.f32 %v107, %v912
    %v929 = vmul.f32 %v108, %v912
    %v930 = vmul.f32 %v109, %v912
    %v931 = vmul.f32 %v110, %v912
    %v932 = vmul.f32 %v111, %v912
    %v933 = vmul.f32 %v112, %v912
    %v934 = vmul.f32 %v113, %v912
    %v935 = vmul.f32 %v114, %v912
    %v936 = vmul.f32 %v115, %v912
    %v937 = vmul.f32 %v116, %v912
    %v938 = vmul.f32 %v117, %v912
    %v939 = vmul.f32 %v118, %v912
    %v940 = vmul.f32 %v119, %v912
    %v941 = vmul.f32 %v120, %v912
    %v942 = vmul.f32 %v121, %v912
    %v943 = vmul.f32 %v122, %v912
    %v944 = vmul.f32 %v123, %v912
    %v945 = vmul.f32 %v124, %v912
    %v946 = vmul.f32 %v125, %v912
    %v947 = vmul.f32 %v126, %v912
    %v948 = vmul.f32 %v127, %v912
    %v949 = vmul.f32 %v128, %v912
    %v950 = vmul.f32 %v129, %v912
    %v951 = vmul.f32 %v130, %v912
    %v952 = vmul.f32 %v131, %v912
    %v953 = vmul.f32 %v132, %v912
    %v954 = vmul.f32 %v133, %v912
    %v955 = vmul.f32 %v134, %v912
    %v956 = vmul.f32 %v135, %v912
    %v957 = vmul.f32 %v136, %v912
    %v958 = vmul.f32 %v137, %v912
    %v959 = vmul.f32 %v138, %v912
    %v960 = vmul.f32 %v139, %v912
    %v961 = vmul.f32 %v140, %v912
    %v962 = vmul.f32 %v141, %v912
    %v963 = vmul.f32 %v142, %v912
    %v964 = vmul.f32 %v143, %v912
    %v965 = vmul.f32 %v144, %v912
    %v966 = vmul.f32 %v145, %v912
    %v967 = vmul.f32 %v146, %v912
    %v968 = vmul.f32 %v147, %v912
    %v969 = vmul.f32 %v148, %v912
    %v970 = vmul.f32 %v149, %v912
    %v971 = vmul.f32 %v150, %v912
    %v972 = vmul.f32 %v151, %v912
    %v973 = vmul.f32 %v152, %v912
    %v974 = vmul.f32 %v153, %v912
    %v975 = vmul.f32 %v154, %v912
    %v976 = vmul.f32 %v155, %v912
    %v977 = vmul.f32 %v156, %v912
    %v978 = vmul.f32 %v157, %v912
    %v979 = vmul.f32 %v158, %v912
    %v980 = vmul.f32 %v159, %v912
    %v981 = vmul.f32 %v160, %v912
    %v982 = vmul.f32 %v161, %v912
    %v983 = vmul.f32 %v162, %v912
    %v984 = vmul.f32 %v163, %v912
    %v985 = vmul.f32 %v164, %v912
    %v986 = vmul.f32 %v165, %v912
    %v987 = vmul.f32 %v166, %v912
    %v988 = vmul.f32 %v167, %v912
    %v989 = vmul.f32 %v168, %v912
    %v990 = vmul.f32 %v169, %v912
    %v991 = vmul.f32 %v170, %v912
    %v992 = vmul.f32 %v171, %v912
    %v993 = vmul.f32 %v172, %v912
    %v994 = vmul.f32 %v173, %v912
    %v995 = vmul.f32 %v174, %v912
    %v996 = vmul.f32 %v175, %v912
    %v997 = vmul.f32 %v176, %v912
    %v998 = vmul.f32 %v177, %v912
    %v999 = vmul.f32 %v178, %v912
    %v1000 = vmul.f32 %v179, %v912
    %v1001 = vmul.f32 %v180, %v912
    %v1002 = vmul.f32 %v181, %v912
    %v1003 = vmul.f32 %v182, %v912
    %v1004 = vmul.f32 %v183, %v912
    %v1005 = vmul.f32 %v184, %v912
    %v1006 = vmul.f32 %v185, %v912
    %v1007 = vmul.f32 %v186, %v912
    %v1008 = vmul.f32 %v187, %v912
    %v1009 = vmul.f32 %v188, %v912
    %v1010 = vmul.f32 %v189, %v912
    %v1011 = vmul.f32 %v190, %v912
    %v1012 = vmul.f32 %v191, %v912
    %v1013 = vmul.f32 %v192, %v912
    %v1014 = vmul.f32 %v193, %v912
    %v1015 = vmul.f32 %v194, %v912
    %v1016 = vmul.f32 %v195, %v912
    %vm1121 = vcmask 1045504
    %v1122 = vrot.slane %v913, 2
    %v1123 = vrot.slane %v914, 2
    %v1124 = vsel %vm1121, %v1122, %v1123
    %v1125 = vrot.slane %v915, 2
    %v1126 = vsel %vm1121, %v1123, %v1125
    %v1127 = vrot.slane %v916, 2
    %v1128 = vsel %vm1121, %v1125, %v1127
    %v1129 = vrot.slane %v917, 2
    %v1130 = vrot.slane %v918, 2
    %v1131 = vsel %vm1121, %v1129, %v1130
    %v1132 = vrot.slane %v919, 2
    %v1133 = vsel %vm1121, %v1130, %v1132
    %v1134 = vrot.slane %v920, 2
    %v1135 = vsel %vm1121, %v1132, %v1134
    %v1136 = vrot.slane %v921, 2
    %v1137 = vrot.slane %v922, 2
    %v1138 = vsel %vm1121, %v1136, %v1137
    %v1139 = vrot.slane %v923, 2
    %v1140 = vsel %vm1121, %v1137, %v1139
    %v1141 = vrot.slane %v924, 2
    %v1142 = vsel %vm1121, %v1139, %v1141
    %v1143 = vrot.slane %v925, 2
    %v1144 = vrot.slane %v926, 2
    %v1145 = vsel %vm1121, %v1143, %v1144
    %v1146 = vrot.slane %v927, 2
    %v1147 = vsel %vm1121, %v1144, %v1146
    %v1148 = vrot.slane %v928, 2
    %v1149 = vsel %vm1121, %v1146, %v1148
    %v1150 = vrot.slane %v929, 2
    %v1151 = vrot.slane %v930, 2
    %v1152 = vsel %vm1121, %v1150, %v1151
    %v1153 = vrot.slane %v931, 2
    %v1154 = vsel %vm1121, %v1151, %v1153
    %v1155 = vrot.slane %v932, 2
    %v1156 = vsel %vm1121, %v1153, %v1155
    %v1157 = vrot.slane %v933, 2
    %v1158 = vrot.slane %v934, 2
    %v1159 = vsel %vm1121, %v1157, %v1158
    %v1160 = vrot.slane %v935, 2
    %v1161 = vsel %vm1121, %v1158, %v1160
    %v1162 = vrot.slane %v936, 2
    %v1163 = vsel %vm1121, %v1160, %v1162
    %v1164 = vrot.slane %v937, 2
    %v1165 = vrot.slane %v938, 2
    %v1166 = vsel %vm1121, %v1164, %v1165
    %v1167 = vrot.slane %v939, 2
    %v1168 = vsel %vm1121, %v1165, %v1167
    %v1169 = vrot.slane %v940, 2
    %v1170 = vsel %vm1121, %v1167, %v1169
    %v1171 = vrot.slane %v941, 2
    %v1172 = vrot.slane %v942, 2
    %v1173 = vsel %vm1121, %v1171, %v1172
    %v1174 = vrot.slane %v943, 2
    %v1175 = vsel %vm1121, %v1172, %v1174
    %v1176 = vrot.slane %v944, 2
    %v1177 = vsel %vm1121, %v1174, %v1176
    %v1178 = vrot.slane %v945, 2
    %v1179 = vrot.slane %v946, 2
    %v1180 = vsel %vm1121, %v1178, %v1179
    %v1181 = vrot.slane %v947, 2
    %v1182 = vsel %vm1121, %v1179, %v1181
    %v1183 = vrot.slane %v948, 2
    %v1184 = vsel %vm1121, %v1181, %v1183
    %v1185 = vrot.slane %v949, 2
    %v1186 = vrot.slane %v950, 2
    %v1187 = vsel %vm1121, %v1185, %v1186
    %v1188 = vrot.slane %v951, 2
    %v1189 = vsel %vm1121, %v1186, %v1188
    %v1190 = vrot.slane %v952, 2
    %v1191 = vsel %vm1121, %v1188, %v1190
    %v1192 = vrot.slane %v953, 2
    %v1193 = vrot.slane %v954, 2
    %v1194 = vsel %vm1121, %v1192, %v1193
    %v1195 = vrot.slane %v955, 2
    %v1196 = vsel %vm1121, %v1193, %v1195
    %v1197 = vrot.slane %v956, 2
    %v1198 = vsel %vm1121, %v1195, %v1197
    %v1199 = vrot.slane %v957, 2
    %v1200 = vrot.slane %v958, 2
    %v1201 = vsel %vm1121, %v1199, %v1200
    %v1202 = vrot.slane %v959, 2
    %v1203 = vsel %vm1121, %v1200, %v1202
    %v1204 = vrot.slane %v960, 2
    %v1205 = vsel %vm1121, %v1202, %v1204
    %v1206 = vrot.slane %v961, 2
    %v1207 = vrot.slane %v962, 2
    %v1208 = vsel %vm1121, %v1206, %v1207
    %v1209 = vrot.slane %v963, 2
    %v1210 = vsel %vm1121, %v1207, %v1209
    %v1211 = vrot.slane %v964, 2
    %v1212 = vsel %vm1121, %v1209, %v1211
    %v1213 = vrot.slane %v965, 2
    %v1214 = vrot.slane %v966, 2
    %v1215 = vsel %vm1121, %v1213, %v1214
    %v1216 = vrot.slane %v967, 2
    %v1217 = vsel %vm1121, %v1214, %v1216
    %v1218 = vrot.slane %v968, 2
    %v1219 = vsel %vm1121, %v1216, %v1218
    %v1220 = vrot.slane %v969, 2
    %v1221 = vrot.slane %v970, 2
    %v1222 = vsel %vm1121, %v1220, %v1221
    %v1223 = vrot.slane %v971, 2
    %v1224 = vsel %vm1121, %v1221, %v1223
    %v1225 = vrot.slane %v972, 2
    %v1226 = vsel %vm1121, %v1223, %v1225
    %v1227 = vrot.slane %v973, 2
    %v1228 = vrot.slane %v974, 2
    %v1229 = vsel %vm1121, %v1227, %v1228
    %v1230 = vrot.slane %v975, 2
    %v1231 = vsel %vm1121, %v1228, %v1230
    %v1232 = vrot.slane %v976, 2
    %v1233 = vsel %vm1121, %v1230, %v1232
    %v1234 = vrot.slane %v977, 2
    %v1235 = vrot.slane %v978, 2
    %v1236 = vsel %vm1121, %v1234, %v1235
    %v1237 = vrot.slane %v979, 2
    %v1238 = vsel %vm1121, %v1235, %v1237
    %v1239 = vrot.slane %v980, 2
    %v1240 = vsel %vm1121, %v1237, %v1239
    %v1241 = vrot.slane %v981, 2
    %v1242 = vrot.slane %v982, 2
    %v1243 = vsel %vm1121, %v1241, %v1242
    %v1244 = vrot.slane %v983, 2
    %v1245 = vsel %vm1121, %v1242, %v1244
    %v1246 = vrot.slane %v984, 2
    %v1247 = vsel %vm1121, %v1244, %v1246
    %v1248 = vrot.slane %v985, 2
    %v1249 = vrot.slane %v986, 2
    %v1250 = vsel %vm1121, %v1248, %v1249
    %v1251 = vrot.slane %v987, 2
    %v1252 = vsel %vm1121, %v1249, %v1251
    %v1253 = vrot.slane %v988, 2
    %v1254 = vsel %vm1121, %v1251, %v1253
    %v1255 = vrot.slane %v989, 2
    %v1256 = vrot.slane %v990, 2
    %v1257 = vsel %vm1121, %v1255, %v1256
    %v1258 = vrot.slane %v991, 2
    %v1259 = vsel %vm1121, %v1256, %v1258
    %v1260 = vrot.slane %v992, 2
    %v1261 = vsel %vm1121, %v1258, %v1260
    %v1262 = vrot.slane %v993, 2
    %v1263 = vrot.slane %v994, 2
    %v1264 = vsel %vm1121, %v1262, %v1263
    %v1265 = vrot.slane %v995, 2
    %v1266 = vsel %vm1121, %v1263, %v1265
    %v1267 = vrot.slane %v996, 2
    %v1268 = vsel %vm1121, %v1265, %v1267
    %v1269 = vrot.slane %v997, 2
    %v1270 = vrot.slane %v998, 2
    %v1271 = vsel %vm1121, %v1269, %v1270
    %v1272 = vrot.slane %v999, 2
    %v1273 = vsel %vm1121, %v1270, %v1272
    %v1274 = vrot.slane %v1000, 2
    %v1275 = vsel %vm1121, %v1272, %v1274
    %v1276 = vrot.slane %v1001, 2
    %v1277 = vrot.slane %v1002, 2
    %v1278 = vsel %vm1121, %v1276, %v1277
    %v1279 = vrot.slane %v1003, 2
    %v1280 = vsel %vm1121, %v1277, %v1279
    %v1281 = vrot.slane %v1004, 2
    %v1282 = vsel %vm1121, %v1279, %v1281
    %v1283 = vrot.slane %v1005, 2
    %v1284 = vrot.slane %v1006, 2
    %v1285 = vsel %vm1121, %v1283, %v1284
    %v1286 = vrot.slane %v1007, 2
    %v1287 = vsel %vm1121, %v1284, %v1286
    %v1288 = vrot.slane %v1008, 2
    %v1289 = vsel %vm1121, %v1286, %v1288
    %v1290 = vrot.slane %v1009, 2
    %v1291 = vrot.slane %v1010, 2
    %v1292 = vsel %vm1121, %v1290, %v1291
    %v1293 = vrot.slane %v1011, 2
    %v1294 = vsel %vm1121, %v1291, %v1293
    %v1295 = vrot.slane %v1012, 2
    %v1296 = vsel %vm1121, %v1293, %v1295
    %v1297 = vrot.slane %v1013, 2
    %v1298 = vrot.slane %v1014, 2
    %v1299 = vsel %vm1121, %v1297, %v1298
    %v1300 = vrot.slane %v1015, 2
    %v1301 = vsel %vm1121, %v1298, %v1300
    %v1302 = vrot.slane %v1016, 2
    %v1303 = vsel %vm1121, %v1300, %v1302
    %v1408 = vadd.f32 %v807, %v1124
    %v1409 = vadd.f32 %v808, %v1126
    %v1410 = vadd.f32 %v809, %v1128
    %v1411 = vadd.f32 %v810, %v1127
    %v1412 = vadd.f32 %v811, %v1131
    %v1413 = vadd.f32 %v812, %v1133
    %v1414 = vadd.f32 %v813, %v1135
    %v1415 = vadd.f32 %v814, %v1134
    %v1416 = vadd.f32 %v815, %v1138
    %v1417 = vadd.f32 %v816, %v1140
    %v1418 = vadd.f32 %v817, %v1142
    %v1419 = vadd.f32 %v818, %v1141
    %v1420 = vadd.f32 %v819, %v1145
    %v1421 = vadd.f32 %v820, %v1147
    %v1422 = vadd.f32 %v821, %v1149
    %v1423 = vadd.f32 %v822, %v1148
    %v1424 = vadd.f32 %v823, %v1152
    %v1425 = vadd.f32 %v824, %v1154
    %v1426 = vadd.f32 %v825, %v1156
    %v1427 = vadd.f32 %v826, %v1155
    %v1428 = vadd.f32 %v827, %v1159
    %v1429 = vadd.f32 %v828, %v1161
    %v1430 = vadd.f32 %v829, %v1163
    %v1431 = vadd.f32 %v830, %v1162
    %v1432 = vadd.f32 %v831, %v1166
    %v1433 = vadd.f32 %v832, %v1168
    %v1434 = vadd.f32 %v833, %v1170
    %v1435 = vadd.f32 %v834, %v1169
    %v1436 = vadd.f32 %v835, %v1173
    %v1437 = vadd.f32 %v836, %v1175
    %v1438 = vadd.f32 %v837, %v1177
    %v1439 = vadd.f32 %v838, %v1176
    %v1440 = vadd.f32 %v839, %v1180
    %v1441 = vadd.f32 %v840, %v1182
    %v1442 = vadd.f32 %v841, %v1184
    %v1443 = vadd.f32 %v842, %v1183
    %v1444 = vadd.f32 %v843, %v1187
    %v1445 = vadd.f32 %v844, %v1189
    %v1446 = vadd.f32 %v845, %v1191
    %v1447 = vadd.f32 %v846, %v1190
    %v1448 = vadd.f32 %v847, %v1194
    %v1449 = vadd.f32 %v848, %v1196
    %v1450 = vadd.f32 %v849, %v1198
    %v1451 = vadd.f32 %v850, %v1197
    %v1452 = vadd.f32 %v851, %v1201
    %v1453 = vadd.f32 %v852, %v1203
    %v1454 = vadd.f32 %v853, %v1205
    %v1455 = vadd.f32 %v854, %v1204
    %v1456 = vadd.f32 %v855, %v1208
    %v1457 = vadd.f32 %v856, %v1210
    %v1458 = vadd.f32 %v857, %v1212
    %v1459 = vadd.f32 %v858, %v1211
    %v1460 = vadd.f32 %v859, %v1215
    %v1461 = vadd.f32 %v860, %v1217
    %v1462 = vadd.f32 %v861, %v1219
    %v1463 = vadd.f32 %v862, %v1218
    %v1464 = vadd.f32 %v863, %v1222
    %v1465 = vadd.f32 %v864, %v1224
    %v1466 = vadd.f32 %v865, %v1226
    %v1467 = vadd.f32 %v866, %v1225
    %v1468 = vadd.f32 %v867, %v1229
    %v1469 = vadd.f32 %v868, %v1231
    %v1470 = vadd.f32 %v869, %v1233
    %v1471 = vadd.f32 %v870, %v1232
    %v1472 = vadd.f32 %v871, %v1236
    %v1473 = vadd.f32 %v872, %v1238
    %v1474 = vadd.f32 %v873, %v1240
    %v1475 = vadd.f32 %v874, %v1239
    %v1476 = vadd.f32 %v875, %v1243
    %v1477 = vadd.f32 %v876, %v1245
    %v1478 = vadd.f32 %v877, %v1247
    %v1479 = vadd.f32 %v878, %v1246
    %v1480 = vadd.f32 %v879, %v1250
    %v1481 = vadd.f32 %v880, %v1252
    %v1482 = vadd.f32 %v881, %v1254
    %v1483 = vadd.f32 %v882, %v1253
    %v1484 = vadd.f32 %v883, %v1257
    %v1485 = vadd.f32 %v884, %v1259
    %v1486 = vadd.f32 %v885, %v1261
    %v1487 = vadd.f32 %v886, %v1260
    %v1488 = vadd.f32 %v887, %v1264
    %v1489 = vadd.f32 %v888, %v1266
    %v1490 = vadd.f32 %v889, %v1268
    %v1491 = vadd.f32 %v890, %v1267
    %v1492 = vadd.f32 %v891, %v1271
    %v1493 = vadd.f32 %v892, %v1273
    %v1494 = vadd.f32 %v893, %v1275
    %v1495 = vadd.f32 %v894, %v1274
    %v1496 = vadd.f32 %v895, %v1278
    %v1497 = vadd.f32 %v896, %v1280
    %v1498 = vadd.f32 %v897, %v1282
    %v1499 = vadd.f32 %v898, %v1281
    %v1500 = vadd.f32 %v899, %v1285
    %v1501 = vadd.f32 %v900, %v1287
    %v1502 = vadd.f32 %v901, %v1289
    %v1503 = vadd.f32 %v902, %v1288
    %v1504 = vadd.f32 %v903, %v1292
    %v1505 = vadd.f32 %v904, %v1294
    %v1506 = vadd.f32 %v905, %v1296
    %v1507 = vadd.f32 %v906, %v1295
    %v1508 = vadd.f32 %v907, %v1299
    %v1509 = vadd.f32 %v908, %v1301
    %v1510 = vadd.f32 %v909, %v1303
    %v1511 = vadd.f32 %v910, %v1302
    %s1512 = sld [smem:[#allocation9 + $0x3]]
    %v1513 = vstv %s1512
    %v1514 = vmul.f32 %v96, %v1513
    %v1515 = vmul.f32 %v97, %v1513
    %v1516 = vmul.f32 %v98, %v1513
    %v1517 = vmul.f32 %v99, %v1513
    %v1518 = vmul.f32 %v100, %v1513
    %v1519 = vmul.f32 %v101, %v1513
    %v1520 = vmul.f32 %v102, %v1513
    %v1521 = vmul.f32 %v103, %v1513
    %v1522 = vmul.f32 %v104, %v1513
    %v1523 = vmul.f32 %v105, %v1513
    %v1524 = vmul.f32 %v106, %v1513
    %v1525 = vmul.f32 %v107, %v1513
    %v1526 = vmul.f32 %v108, %v1513
    %v1527 = vmul.f32 %v109, %v1513
    %v1528 = vmul.f32 %v110, %v1513
    %v1529 = vmul.f32 %v111, %v1513
    %v1530 = vmul.f32 %v112, %v1513
    %v1531 = vmul.f32 %v113, %v1513
    %v1532 = vmul.f32 %v114, %v1513
    %v1533 = vmul.f32 %v115, %v1513
    %v1534 = vmul.f32 %v116, %v1513
    %v1535 = vmul.f32 %v117, %v1513
    %v1536 = vmul.f32 %v118, %v1513
    %v1537 = vmul.f32 %v119, %v1513
    %v1538 = vmul.f32 %v120, %v1513
    %v1539 = vmul.f32 %v121, %v1513
    %v1540 = vmul.f32 %v122, %v1513
    %v1541 = vmul.f32 %v123, %v1513
    %v1542 = vmul.f32 %v124, %v1513
    %v1543 = vmul.f32 %v125, %v1513
    %v1544 = vmul.f32 %v126, %v1513
    %v1545 = vmul.f32 %v127, %v1513
    %v1546 = vmul.f32 %v128, %v1513
    %v1547 = vmul.f32 %v129, %v1513
    %v1548 = vmul.f32 %v130, %v1513
    %v1549 = vmul.f32 %v131, %v1513
    %v1550 = vmul.f32 %v132, %v1513
    %v1551 = vmul.f32 %v133, %v1513
    %v1552 = vmul.f32 %v134, %v1513
    %v1553 = vmul.f32 %v135, %v1513
    %v1554 = vmul.f32 %v136, %v1513
    %v1555 = vmul.f32 %v137, %v1513
    %v1556 = vmul.f32 %v138, %v1513
    %v1557 = vmul.f32 %v139, %v1513
    %v1558 = vmul.f32 %v140, %v1513
    %v1559 = vmul.f32 %v141, %v1513
    %v1560 = vmul.f32 %v142, %v1513
    %v1561 = vmul.f32 %v143, %v1513
    %v1562 = vmul.f32 %v144, %v1513
    %v1563 = vmul.f32 %v145, %v1513
    %v1564 = vmul.f32 %v146, %v1513
    %v1565 = vmul.f32 %v147, %v1513
    %v1566 = vmul.f32 %v148, %v1513
    %v1567 = vmul.f32 %v149, %v1513
    %v1568 = vmul.f32 %v150, %v1513
    %v1569 = vmul.f32 %v151, %v1513
    %v1570 = vmul.f32 %v152, %v1513
    %v1571 = vmul.f32 %v153, %v1513
    %v1572 = vmul.f32 %v154, %v1513
    %v1573 = vmul.f32 %v155, %v1513
    %v1574 = vmul.f32 %v156, %v1513
    %v1575 = vmul.f32 %v157, %v1513
    %v1576 = vmul.f32 %v158, %v1513
    %v1577 = vmul.f32 %v159, %v1513
    %v1578 = vmul.f32 %v160, %v1513
    %v1579 = vmul.f32 %v161, %v1513
    %v1580 = vmul.f32 %v162, %v1513
    %v1581 = vmul.f32 %v163, %v1513
    %v1582 = vmul.f32 %v164, %v1513
    %v1583 = vmul.f32 %v165, %v1513
    %v1584 = vmul.f32 %v166, %v1513
    %v1585 = vmul.f32 %v167, %v1513
    %v1586 = vmul.f32 %v168, %v1513
    %v1587 = vmul.f32 %v169, %v1513
    %v1588 = vmul.f32 %v170, %v1513
    %v1589 = vmul.f32 %v171, %v1513
    %v1590 = vmul.f32 %v172, %v1513
    %v1591 = vmul.f32 %v173, %v1513
    %v1592 = vmul.f32 %v174, %v1513
    %v1593 = vmul.f32 %v175, %v1513
    %v1594 = vmul.f32 %v176, %v1513
    %v1595 = vmul.f32 %v177, %v1513
    %v1596 = vmul.f32 %v178, %v1513
    %v1597 = vmul.f32 %v179, %v1513
    %v1598 = vmul.f32 %v180, %v1513
    %v1599 = vmul.f32 %v181, %v1513
    %v1600 = vmul.f32 %v182, %v1513
    %v1601 = vmul.f32 %v183, %v1513
    %v1602 = vmul.f32 %v184, %v1513
    %v1603 = vmul.f32 %v185, %v1513
    %v1604 = vmul.f32 %v186, %v1513
    %v1605 = vmul.f32 %v187, %v1513
    %v1606 = vmul.f32 %v188, %v1513
    %v1607 = vmul.f32 %v189, %v1513
    %v1608 = vmul.f32 %v190, %v1513
    %v1609 = vmul.f32 %v191, %v1513
    %v1610 = vmul.f32 %v192, %v1513
    %v1611 = vmul.f32 %v193, %v1513
    %v1612 = vmul.f32 %v194, %v1513
    %v1613 = vmul.f32 %v195, %v1513
    %v1614 = vmul.f32 %v196, %v1513
    %v1615 = vmul.f32 %v197, %v1513
    %v1616 = vmul.f32 %v198, %v1513
    %v1617 = vmul.f32 %v199, %v1513
    %v1618 = vadd.f32 %v1408, %v1514
    %v1619 = vadd.f32 %v1409, %v1515
    %v1620 = vadd.f32 %v1410, %v1516
    %v1621 = vadd.f32 %v1411, %v1517
    %v1622 = vadd.f32 %v1412, %v1518
    %v1623 = vadd.f32 %v1413, %v1519
    %v1624 = vadd.f32 %v1414, %v1520
    %v1625 = vadd.f32 %v1415, %v1521
    %v1626 = vadd.f32 %v1416, %v1522
    %v1627 = vadd.f32 %v1417, %v1523
    %v1628 = vadd.f32 %v1418, %v1524
    %v1629 = vadd.f32 %v1419, %v1525
    %v1630 = vadd.f32 %v1420, %v1526
    %v1631 = vadd.f32 %v1421, %v1527
    %v1632 = vadd.f32 %v1422, %v1528
    %v1633 = vadd.f32 %v1423, %v1529
    %v1634 = vadd.f32 %v1424, %v1530
    %v1635 = vadd.f32 %v1425, %v1531
    %v1636 = vadd.f32 %v1426, %v1532
    %v1637 = vadd.f32 %v1427, %v1533
    %v1638 = vadd.f32 %v1428, %v1534
    %v1639 = vadd.f32 %v1429, %v1535
    %v1640 = vadd.f32 %v1430, %v1536
    %v1641 = vadd.f32 %v1431, %v1537
    %v1642 = vadd.f32 %v1432, %v1538
    %v1643 = vadd.f32 %v1433, %v1539
    %v1644 = vadd.f32 %v1434, %v1540
    %v1645 = vadd.f32 %v1435, %v1541
    %v1646 = vadd.f32 %v1436, %v1542
    %v1647 = vadd.f32 %v1437, %v1543
    %v1648 = vadd.f32 %v1438, %v1544
    %v1649 = vadd.f32 %v1439, %v1545
    %v1650 = vadd.f32 %v1440, %v1546
    %v1651 = vadd.f32 %v1441, %v1547
    %v1652 = vadd.f32 %v1442, %v1548
    %v1653 = vadd.f32 %v1443, %v1549
    %v1654 = vadd.f32 %v1444, %v1550
    %v1655 = vadd.f32 %v1445, %v1551
    %v1656 = vadd.f32 %v1446, %v1552
    %v1657 = vadd.f32 %v1447, %v1553
    %v1658 = vadd.f32 %v1448, %v1554
    %v1659 = vadd.f32 %v1449, %v1555
    %v1660 = vadd.f32 %v1450, %v1556
    %v1661 = vadd.f32 %v1451, %v1557
    %v1662 = vadd.f32 %v1452, %v1558
    %v1663 = vadd.f32 %v1453, %v1559
    %v1664 = vadd.f32 %v1454, %v1560
    %v1665 = vadd.f32 %v1455, %v1561
    %v1666 = vadd.f32 %v1456, %v1562
    %v1667 = vadd.f32 %v1457, %v1563
    %v1668 = vadd.f32 %v1458, %v1564
    %v1669 = vadd.f32 %v1459, %v1565
    %v1670 = vadd.f32 %v1460, %v1566
    %v1671 = vadd.f32 %v1461, %v1567
    %v1672 = vadd.f32 %v1462, %v1568
    %v1673 = vadd.f32 %v1463, %v1569
    %v1674 = vadd.f32 %v1464, %v1570
    %v1675 = vadd.f32 %v1465, %v1571
    %v1676 = vadd.f32 %v1466, %v1572
    %v1677 = vadd.f32 %v1467, %v1573
    %v1678 = vadd.f32 %v1468, %v1574
    %v1679 = vadd.f32 %v1469, %v1575
    %v1680 = vadd.f32 %v1470, %v1576
    %v1681 = vadd.f32 %v1471, %v1577
    %v1682 = vadd.f32 %v1472, %v1578
    %v1683 = vadd.f32 %v1473, %v1579
    %v1684 = vadd.f32 %v1474, %v1580
    %v1685 = vadd.f32 %v1475, %v1581
    %v1686 = vadd.f32 %v1476, %v1582
    %v1687 = vadd.f32 %v1477, %v1583
    %v1688 = vadd.f32 %v1478, %v1584
    %v1689 = vadd.f32 %v1479, %v1585
    %v1690 = vadd.f32 %v1480, %v1586
    %v1691 = vadd.f32 %v1481, %v1587
    %v1692 = vadd.f32 %v1482, %v1588
    %v1693 = vadd.f32 %v1483, %v1589
    %v1694 = vadd.f32 %v1484, %v1590
    %v1695 = vadd.f32 %v1485, %v1591
    %v1696 = vadd.f32 %v1486, %v1592
    %v1697 = vadd.f32 %v1487, %v1593
    %v1698 = vadd.f32 %v1488, %v1594
    %v1699 = vadd.f32 %v1489, %v1595
    %v1700 = vadd.f32 %v1490, %v1596
    %v1701 = vadd.f32 %v1491, %v1597
    %v1702 = vadd.f32 %v1492, %v1598
    %v1703 = vadd.f32 %v1493, %v1599
    %v1704 = vadd.f32 %v1494, %v1600
    %v1705 = vadd.f32 %v1495, %v1601
    %v1706 = vadd.f32 %v1496, %v1602
    %v1707 = vadd.f32 %v1497, %v1603
    %v1708 = vadd.f32 %v1498, %v1604
    %v1709 = vadd.f32 %v1499, %v1605
    %v1710 = vadd.f32 %v1500, %v1606
    %v1711 = vadd.f32 %v1501, %v1607
    %v1712 = vadd.f32 %v1502, %v1608
    %v1713 = vadd.f32 %v1503, %v1609
    %v1714 = vadd.f32 %v1504, %v1610
    %v1715 = vadd.f32 %v1505, %v1611
    %v1716 = vadd.f32 %v1506, %v1612
    %v1717 = vadd.f32 %v1507, %v1613
    %v1718 = vadd.f32 %v1508, %v1614
    %v1719 = vadd.f32 %v1509, %v1615
    %v1720 = vadd.f32 %v1510, %v1616
    %v1721 = vadd.f32 %v1511, %v1617
    %s1722 = sld [smem:[#allocation9 + $0x4]]
    %v1723 = vstv %s1722
    %v1724 = vmul.f32 %v96, %v1723
    %v1725 = vmul.f32 %v97, %v1723
    %v1726 = vmul.f32 %v98, %v1723
    %v1727 = vmul.f32 %v99, %v1723
    %v1728 = vmul.f32 %v100, %v1723
    %v1729 = vmul.f32 %v101, %v1723
    %v1730 = vmul.f32 %v102, %v1723
    %v1731 = vmul.f32 %v103, %v1723
    %v1732 = vmul.f32 %v104, %v1723
    %v1733 = vmul.f32 %v105, %v1723
    %v1734 = vmul.f32 %v106, %v1723
    %v1735 = vmul.f32 %v107, %v1723
    %v1736 = vmul.f32 %v108, %v1723
    %v1737 = vmul.f32 %v109, %v1723
    %v1738 = vmul.f32 %v110, %v1723
    %v1739 = vmul.f32 %v111, %v1723
    %v1740 = vmul.f32 %v112, %v1723
    %v1741 = vmul.f32 %v113, %v1723
    %v1742 = vmul.f32 %v114, %v1723
    %v1743 = vmul.f32 %v115, %v1723
    %v1744 = vmul.f32 %v116, %v1723
    %v1745 = vmul.f32 %v117, %v1723
    %v1746 = vmul.f32 %v118, %v1723
    %v1747 = vmul.f32 %v119, %v1723
    %v1748 = vmul.f32 %v120, %v1723
    %v1749 = vmul.f32 %v121, %v1723
    %v1750 = vmul.f32 %v122, %v1723
    %v1751 = vmul.f32 %v123, %v1723
    %v1752 = vmul.f32 %v124, %v1723
    %v1753 = vmul.f32 %v125, %v1723
    %v1754 = vmul.f32 %v126, %v1723
    %v1755 = vmul.f32 %v127, %v1723
    %v1756 = vmul.f32 %v128, %v1723
    %v1757 = vmul.f32 %v129, %v1723
    %v1758 = vmul.f32 %v130, %v1723
    %v1759 = vmul.f32 %v131, %v1723
    %v1760 = vmul.f32 %v132, %v1723
    %v1761 = vmul.f32 %v133, %v1723
    %v1762 = vmul.f32 %v134, %v1723
    %v1763 = vmul.f32 %v135, %v1723
    %v1764 = vmul.f32 %v136, %v1723
    %v1765 = vmul.f32 %v137, %v1723
    %v1766 = vmul.f32 %v138, %v1723
    %v1767 = vmul.f32 %v139, %v1723
    %v1768 = vmul.f32 %v140, %v1723
    %v1769 = vmul.f32 %v141, %v1723
    %v1770 = vmul.f32 %v142, %v1723
    %v1771 = vmul.f32 %v143, %v1723
    %v1772 = vmul.f32 %v144, %v1723
    %v1773 = vmul.f32 %v145, %v1723
    %v1774 = vmul.f32 %v146, %v1723
    %v1775 = vmul.f32 %v147, %v1723
    %v1776 = vmul.f32 %v148, %v1723
    %v1777 = vmul.f32 %v149, %v1723
    %v1778 = vmul.f32 %v150, %v1723
    %v1779 = vmul.f32 %v151, %v1723
    %v1780 = vmul.f32 %v152, %v1723
    %v1781 = vmul.f32 %v153, %v1723
    %v1782 = vmul.f32 %v154, %v1723
    %v1783 = vmul.f32 %v155, %v1723
    %v1784 = vmul.f32 %v156, %v1723
    %v1785 = vmul.f32 %v157, %v1723
    %v1786 = vmul.f32 %v158, %v1723
    %v1787 = vmul.f32 %v159, %v1723
    %v1788 = vmul.f32 %v160, %v1723
    %v1789 = vmul.f32 %v161, %v1723
    %v1790 = vmul.f32 %v162, %v1723
    %v1791 = vmul.f32 %v163, %v1723
    %v1792 = vmul.f32 %v164, %v1723
    %v1793 = vmul.f32 %v165, %v1723
    %v1794 = vmul.f32 %v166, %v1723
    %v1795 = vmul.f32 %v167, %v1723
    %v1796 = vmul.f32 %v168, %v1723
    %v1797 = vmul.f32 %v169, %v1723
    %v1798 = vmul.f32 %v170, %v1723
    %v1799 = vmul.f32 %v171, %v1723
    %v1800 = vmul.f32 %v172, %v1723
    %v1801 = vmul.f32 %v173, %v1723
    %v1802 = vmul.f32 %v174, %v1723
    %v1803 = vmul.f32 %v175, %v1723
    %v1804 = vmul.f32 %v176, %v1723
    %v1805 = vmul.f32 %v177, %v1723
    %v1806 = vmul.f32 %v178, %v1723
    %v1807 = vmul.f32 %v179, %v1723
    %v1808 = vmul.f32 %v180, %v1723
    %v1809 = vmul.f32 %v181, %v1723
    %v1810 = vmul.f32 %v182, %v1723
    %v1811 = vmul.f32 %v183, %v1723
    %v1812 = vmul.f32 %v184, %v1723
    %v1813 = vmul.f32 %v185, %v1723
    %v1814 = vmul.f32 %v186, %v1723
    %v1815 = vmul.f32 %v187, %v1723
    %v1816 = vmul.f32 %v188, %v1723
    %v1817 = vmul.f32 %v189, %v1723
    %v1818 = vmul.f32 %v190, %v1723
    %v1819 = vmul.f32 %v191, %v1723
    %v1820 = vmul.f32 %v192, %v1723
    %v1821 = vmul.f32 %v193, %v1723
    %v1822 = vmul.f32 %v194, %v1723
    %v1823 = vmul.f32 %v195, %v1723
    %v1824 = vmul.f32 %v196, %v1723
    %v1825 = vmul.f32 %v197, %v1723
    %v1826 = vmul.f32 %v198, %v1723
    %v1827 = vmul.f32 %v199, %v1723
    %v1932 = vrot.slane %v1724, 1
    %v1933 = vrot.slane %v1725, 1
    %v1934 = vsel %vm520, %v1932, %v1933
    %v1935 = vrot.slane %v1726, 1
    %v1936 = vsel %vm520, %v1933, %v1935
    %v1937 = vrot.slane %v1727, 1
    %v1938 = vsel %vm520, %v1935, %v1937
    %v1939 = vrot.slane %v1728, 1
    %v1940 = vrot.slane %v1729, 1
    %v1941 = vsel %vm520, %v1939, %v1940
    %v1942 = vrot.slane %v1730, 1
    %v1943 = vsel %vm520, %v1940, %v1942
    %v1944 = vrot.slane %v1731, 1
    %v1945 = vsel %vm520, %v1942, %v1944
    %v1946 = vrot.slane %v1732, 1
    %v1947 = vrot.slane %v1733, 1
    %v1948 = vsel %vm520, %v1946, %v1947
    %v1949 = vrot.slane %v1734, 1
    %v1950 = vsel %vm520, %v1947, %v1949
    %v1951 = vrot.slane %v1735, 1
    %v1952 = vsel %vm520, %v1949, %v1951
    %v1953 = vrot.slane %v1736, 1
    %v1954 = vrot.slane %v1737, 1
    %v1955 = vsel %vm520, %v1953, %v1954
    %v1956 = vrot.slane %v1738, 1
    %v1957 = vsel %vm520, %v1954, %v1956
    %v1958 = vrot.slane %v1739, 1
    %v1959 = vsel %vm520, %v1956, %v1958
    %v1960 = vrot.slane %v1740, 1
    %v1961 = vrot.slane %v1741, 1
    %v1962 = vsel %vm520, %v1960, %v1961
    %v1963 = vrot.slane %v1742, 1
    %v1964 = vsel %vm520, %v1961, %v1963
    %v1965 = vrot.slane %v1743, 1
    %v1966 = vsel %vm520, %v1963, %v1965
    %v1967 = vrot.slane %v1744, 1
    %v1968 = vrot.slane %v1745, 1
    %v1969 = vsel %vm520, %v1967, %v1968
    %v1970 = vrot.slane %v1746, 1
    %v1971 = vsel %vm520, %v1968, %v1970
    %v1972 = vrot.slane %v1747, 1
    %v1973 = vsel %vm520, %v1970, %v1972
    %v1974 = vrot.slane %v1748, 1
    %v1975 = vrot.slane %v1749, 1
    %v1976 = vsel %vm520, %v1974, %v1975
    %v1977 = vrot.slane %v1750, 1
    %v1978 = vsel %vm520, %v1975, %v1977
    %v1979 = vrot.slane %v1751, 1
    %v1980 = vsel %vm520, %v1977, %v1979
    %v1981 = vrot.slane %v1752, 1
    %v1982 = vrot.slane %v1753, 1
    %v1983 = vsel %vm520, %v1981, %v1982
    %v1984 = vrot.slane %v1754, 1
    %v1985 = vsel %vm520, %v1982, %v1984
    %v1986 = vrot.slane %v1755, 1
    %v1987 = vsel %vm520, %v1984, %v1986
    %v1988 = vrot.slane %v1756, 1
    %v1989 = vrot.slane %v1757, 1
    %v1990 = vsel %vm520, %v1988, %v1989
    %v1991 = vrot.slane %v1758, 1
    %v1992 = vsel %vm520, %v1989, %v1991
    %v1993 = vrot.slane %v1759, 1
    %v1994 = vsel %vm520, %v1991, %v1993
    %v1995 = vrot.slane %v1760, 1
    %v1996 = vrot.slane %v1761, 1
    %v1997 = vsel %vm520, %v1995, %v1996
    %v1998 = vrot.slane %v1762, 1
    %v1999 = vsel %vm520, %v1996, %v1998
    %v2000 = vrot.slane %v1763, 1
    %v2001 = vsel %vm520, %v1998, %v2000
    %v2002 = vrot.slane %v1764, 1
    %v2003 = vrot.slane %v1765, 1
    %v2004 = vsel %vm520, %v2002, %v2003
    %v2005 = vrot.slane %v1766, 1
    %v2006 = vsel %vm520, %v2003, %v2005
    %v2007 = vrot.slane %v1767, 1
    %v2008 = vsel %vm520, %v2005, %v2007
    %v2009 = vrot.slane %v1768, 1
    %v2010 = vrot.slane %v1769, 1
    %v2011 = vsel %vm520, %v2009, %v2010
    %v2012 = vrot.slane %v1770, 1
    %v2013 = vsel %vm520, %v2010, %v2012
    %v2014 = vrot.slane %v1771, 1
    %v2015 = vsel %vm520, %v2012, %v2014
    %v2016 = vrot.slane %v1772, 1
    %v2017 = vrot.slane %v1773, 1
    %v2018 = vsel %vm520, %v2016, %v2017
    %v2019 = vrot.slane %v1774, 1
    %v2020 = vsel %vm520, %v2017, %v2019
    %v2021 = vrot.slane %v1775, 1
    %v2022 = vsel %vm520, %v2019, %v2021
    %v2023 = vrot.slane %v1776, 1
    %v2024 = vrot.slane %v1777, 1
    %v2025 = vsel %vm520, %v2023, %v2024
    %v2026 = vrot.slane %v1778, 1
    %v2027 = vsel %vm520, %v2024, %v2026
    %v2028 = vrot.slane %v1779, 1
    %v2029 = vsel %vm520, %v2026, %v2028
    %v2030 = vrot.slane %v1780, 1
    %v2031 = vrot.slane %v1781, 1
    %v2032 = vsel %vm520, %v2030, %v2031
    %v2033 = vrot.slane %v1782, 1
    %v2034 = vsel %vm520, %v2031, %v2033
    %v2035 = vrot.slane %v1783, 1
    %v2036 = vsel %vm520, %v2033, %v2035
    %v2037 = vrot.slane %v1784, 1
    %v2038 = vrot.slane %v1785, 1
    %v2039 = vsel %vm520, %v2037, %v2038
    %v2040 = vrot.slane %v1786, 1
    %v2041 = vsel %vm520, %v2038, %v2040
    %v2042 = vrot.slane %v1787, 1
    %v2043 = vsel %vm520, %v2040, %v2042
    %v2044 = vrot.slane %v1788, 1
    %v2045 = vrot.slane %v1789, 1
    %v2046 = vsel %vm520, %v2044, %v2045
    %v2047 = vrot.slane %v1790, 1
    %v2048 = vsel %vm520, %v2045, %v2047
    %v2049 = vrot.slane %v1791, 1
    %v2050 = vsel %vm520, %v2047, %v2049
    %v2051 = vrot.slane %v1792, 1
    %v2052 = vrot.slane %v1793, 1
    %v2053 = vsel %vm520, %v2051, %v2052
    %v2054 = vrot.slane %v1794, 1
    %v2055 = vsel %vm520, %v2052, %v2054
    %v2056 = vrot.slane %v1795, 1
    %v2057 = vsel %vm520, %v2054, %v2056
    %v2058 = vrot.slane %v1796, 1
    %v2059 = vrot.slane %v1797, 1
    %v2060 = vsel %vm520, %v2058, %v2059
    %v2061 = vrot.slane %v1798, 1
    %v2062 = vsel %vm520, %v2059, %v2061
    %v2063 = vrot.slane %v1799, 1
    %v2064 = vsel %vm520, %v2061, %v2063
    %v2065 = vrot.slane %v1800, 1
    %v2066 = vrot.slane %v1801, 1
    %v2067 = vsel %vm520, %v2065, %v2066
    %v2068 = vrot.slane %v1802, 1
    %v2069 = vsel %vm520, %v2066, %v2068
    %v2070 = vrot.slane %v1803, 1
    %v2071 = vsel %vm520, %v2068, %v2070
    %v2072 = vrot.slane %v1804, 1
    %v2073 = vrot.slane %v1805, 1
    %v2074 = vsel %vm520, %v2072, %v2073
    %v2075 = vrot.slane %v1806, 1
    %v2076 = vsel %vm520, %v2073, %v2075
    %v2077 = vrot.slane %v1807, 1
    %v2078 = vsel %vm520, %v2075, %v2077
    %v2079 = vrot.slane %v1808, 1
    %v2080 = vrot.slane %v1809, 1
    %v2081 = vsel %vm520, %v2079, %v2080
    %v2082 = vrot.slane %v1810, 1
    %v2083 = vsel %vm520, %v2080, %v2082
    %v2084 = vrot.slane %v1811, 1
    %v2085 = vsel %vm520, %v2082, %v2084
    %v2086 = vrot.slane %v1812, 1
    %v2087 = vrot.slane %v1813, 1
    %v2088 = vsel %vm520, %v2086, %v2087
    %v2089 = vrot.slane %v1814, 1
    %v2090 = vsel %vm520, %v2087, %v2089
    %v2091 = vrot.slane %v1815, 1
    %v2092 = vsel %vm520, %v2089, %v2091
    %v2093 = vrot.slane %v1816, 1
    %v2094 = vrot.slane %v1817, 1
    %v2095 = vsel %vm520, %v2093, %v2094
    %v2096 = vrot.slane %v1818, 1
    %v2097 = vsel %vm520, %v2094, %v2096
    %v2098 = vrot.slane %v1819, 1
    %v2099 = vsel %vm520, %v2096, %v2098
    %v2100 = vrot.slane %v1820, 1
    %v2101 = vrot.slane %v1821, 1
    %v2102 = vsel %vm520, %v2100, %v2101
    %v2103 = vrot.slane %v1822, 1
    %v2104 = vsel %vm520, %v2101, %v2103
    %v2105 = vrot.slane %v1823, 1
    %v2106 = vsel %vm520, %v2103, %v2105
    %v2107 = vrot.slane %v1824, 1
    %v2108 = vrot.slane %v1825, 1
    %v2109 = vsel %vm520, %v2107, %v2108
    %v2110 = vrot.slane %v1826, 1
    %v2111 = vsel %vm520, %v2108, %v2110
    %v2112 = vrot.slane %v1827, 1
    %v2113 = vsel %vm520, %v2110, %v2112
    %v2218 = vadd.f32 %v1618, %v1934
    %v2219 = vadd.f32 %v1619, %v1936
    %v2220 = vadd.f32 %v1620, %v1938
    %v2221 = vadd.f32 %v1621, %v1937
    %v2222 = vadd.f32 %v1622, %v1941
    %v2223 = vadd.f32 %v1623, %v1943
    %v2224 = vadd.f32 %v1624, %v1945
    %v2225 = vadd.f32 %v1625, %v1944
    %v2226 = vadd.f32 %v1626, %v1948
    %v2227 = vadd.f32 %v1627, %v1950
    %v2228 = vadd.f32 %v1628, %v1952
    %v2229 = vadd.f32 %v1629, %v1951
    %v2230 = vadd.f32 %v1630, %v1955
    %v2231 = vadd.f32 %v1631, %v1957
    %v2232 = vadd.f32 %v1632, %v1959
    %v2233 = vadd.f32 %v1633, %v1958
    %v2234 = vadd.f32 %v1634, %v1962
    %v2235 = vadd.f32 %v1635, %v1964
    %v2236 = vadd.f32 %v1636, %v1966
    %v2237 = vadd.f32 %v1637, %v1965
    %v2238 = vadd.f32 %v1638, %v1969
    %v2239 = vadd.f32 %v1639, %v1971
    %v2240 = vadd.f32 %v1640, %v1973
    %v2241 = vadd.f32 %v1641, %v1972
    %v2242 = vadd.f32 %v1642, %v1976
    %v2243 = vadd.f32 %v1643, %v1978
    %v2244 = vadd.f32 %v1644, %v1980
    %v2245 = vadd.f32 %v1645, %v1979
    %v2246 = vadd.f32 %v1646, %v1983
    %v2247 = vadd.f32 %v1647, %v1985
    %v2248 = vadd.f32 %v1648, %v1987
    %v2249 = vadd.f32 %v1649, %v1986
    %v2250 = vadd.f32 %v1650, %v1990
    %v2251 = vadd.f32 %v1651, %v1992
    %v2252 = vadd.f32 %v1652, %v1994
    %v2253 = vadd.f32 %v1653, %v1993
    %v2254 = vadd.f32 %v1654, %v1997
    %v2255 = vadd.f32 %v1655, %v1999
    %v2256 = vadd.f32 %v1656, %v2001
    %v2257 = vadd.f32 %v1657, %v2000
    %v2258 = vadd.f32 %v1658, %v2004
    %v2259 = vadd.f32 %v1659, %v2006
    %v2260 = vadd.f32 %v1660, %v2008
    %v2261 = vadd.f32 %v1661, %v2007
    %v2262 = vadd.f32 %v1662, %v2011
    %v2263 = vadd.f32 %v1663, %v2013
    %v2264 = vadd.f32 %v1664, %v2015
    %v2265 = vadd.f32 %v1665, %v2014
    %v2266 = vadd.f32 %v1666, %v2018
    %v2267 = vadd.f32 %v1667, %v2020
    %v2268 = vadd.f32 %v1668, %v2022
    %v2269 = vadd.f32 %v1669, %v2021
    %v2270 = vadd.f32 %v1670, %v2025
    %v2271 = vadd.f32 %v1671, %v2027
    %v2272 = vadd.f32 %v1672, %v2029
    %v2273 = vadd.f32 %v1673, %v2028
    %v2274 = vadd.f32 %v1674, %v2032
    %v2275 = vadd.f32 %v1675, %v2034
    %v2276 = vadd.f32 %v1676, %v2036
    %v2277 = vadd.f32 %v1677, %v2035
    %v2278 = vadd.f32 %v1678, %v2039
    %v2279 = vadd.f32 %v1679, %v2041
    %v2280 = vadd.f32 %v1680, %v2043
    %v2281 = vadd.f32 %v1681, %v2042
    %v2282 = vadd.f32 %v1682, %v2046
    %v2283 = vadd.f32 %v1683, %v2048
    %v2284 = vadd.f32 %v1684, %v2050
    %v2285 = vadd.f32 %v1685, %v2049
    %v2286 = vadd.f32 %v1686, %v2053
    %v2287 = vadd.f32 %v1687, %v2055
    %v2288 = vadd.f32 %v1688, %v2057
    %v2289 = vadd.f32 %v1689, %v2056
    %v2290 = vadd.f32 %v1690, %v2060
    %v2291 = vadd.f32 %v1691, %v2062
    %v2292 = vadd.f32 %v1692, %v2064
    %v2293 = vadd.f32 %v1693, %v2063
    %v2294 = vadd.f32 %v1694, %v2067
    %v2295 = vadd.f32 %v1695, %v2069
    %v2296 = vadd.f32 %v1696, %v2071
    %v2297 = vadd.f32 %v1697, %v2070
    %v2298 = vadd.f32 %v1698, %v2074
    %v2299 = vadd.f32 %v1699, %v2076
    %v2300 = vadd.f32 %v1700, %v2078
    %v2301 = vadd.f32 %v1701, %v2077
    %v2302 = vadd.f32 %v1702, %v2081
    %v2303 = vadd.f32 %v1703, %v2083
    %v2304 = vadd.f32 %v1704, %v2085
    %v2305 = vadd.f32 %v1705, %v2084
    %v2306 = vadd.f32 %v1706, %v2088
    %v2307 = vadd.f32 %v1707, %v2090
    %v2308 = vadd.f32 %v1708, %v2092
    %v2309 = vadd.f32 %v1709, %v2091
    %v2310 = vadd.f32 %v1710, %v2095
    %v2311 = vadd.f32 %v1711, %v2097
    %v2312 = vadd.f32 %v1712, %v2099
    %v2313 = vadd.f32 %v1713, %v2098
    %v2314 = vadd.f32 %v1714, %v2102
    %v2315 = vadd.f32 %v1715, %v2104
    %v2316 = vadd.f32 %v1716, %v2106
    %v2317 = vadd.f32 %v1717, %v2105
    %v2318 = vadd.f32 %v1718, %v2109
    %v2319 = vadd.f32 %v1719, %v2111
    %v2320 = vadd.f32 %v1720, %v2113
    %v2321 = vadd.f32 %v1721, %v2112
    %s2322 = sld [smem:[#allocation9 + $0x5]]
    %v2323 = vstv %s2322
    %v2324 = vmul.f32 %v96, %v2323
    %v2325 = vmul.f32 %v97, %v2323
    %v2326 = vmul.f32 %v98, %v2323
    %v2327 = vmul.f32 %v99, %v2323
    %v2328 = vmul.f32 %v100, %v2323
    %v2329 = vmul.f32 %v101, %v2323
    %v2330 = vmul.f32 %v102, %v2323
    %v2331 = vmul.f32 %v103, %v2323
    %v2332 = vmul.f32 %v104, %v2323
    %v2333 = vmul.f32 %v105, %v2323
    %v2334 = vmul.f32 %v106, %v2323
    %v2335 = vmul.f32 %v107, %v2323
    %v2336 = vmul.f32 %v108, %v2323
    %v2337 = vmul.f32 %v109, %v2323
    %v2338 = vmul.f32 %v110, %v2323
    %v2339 = vmul.f32 %v111, %v2323
    %v2340 = vmul.f32 %v112, %v2323
    %v2341 = vmul.f32 %v113, %v2323
    %v2342 = vmul.f32 %v114, %v2323
    %v2343 = vmul.f32 %v115, %v2323
    %v2344 = vmul.f32 %v116, %v2323
    %v2345 = vmul.f32 %v117, %v2323
    %v2346 = vmul.f32 %v118, %v2323
    %v2347 = vmul.f32 %v119, %v2323
    %v2348 = vmul.f32 %v120, %v2323
    %v2349 = vmul.f32 %v121, %v2323
    %v2350 = vmul.f32 %v122, %v2323
    %v2351 = vmul.f32 %v123, %v2323
    %v2352 = vmul.f32 %v124, %v2323
    %v2353 = vmul.f32 %v125, %v2323
    %v2354 = vmul.f32 %v126, %v2323
    %v2355 = vmul.f32 %v127, %v2323
    %v2356 = vmul.f32 %v128, %v2323
    %v2357 = vmul.f32 %v129, %v2323
    %v2358 = vmul.f32 %v130, %v2323
    %v2359 = vmul.f32 %v131, %v2323
    %v2360 = vmul.f32 %v132, %v2323
    %v2361 = vmul.f32 %v133, %v2323
    %v2362 = vmul.f32 %v134, %v2323
    %v2363 = vmul.f32 %v135, %v2323
    %v2364 = vmul.f32 %v136, %v2323
    %v2365 = vmul.f32 %v137, %v2323
    %v2366 = vmul.f32 %v138, %v2323
    %v2367 = vmul.f32 %v139, %v2323
    %v2368 = vmul.f32 %v140, %v2323
    %v2369 = vmul.f32 %v141, %v2323
    %v2370 = vmul.f32 %v142, %v2323
    %v2371 = vmul.f32 %v143, %v2323
    %v2372 = vmul.f32 %v144, %v2323
    %v2373 = vmul.f32 %v145, %v2323
    %v2374 = vmul.f32 %v146, %v2323
    %v2375 = vmul.f32 %v147, %v2323
    %v2376 = vmul.f32 %v148, %v2323
    %v2377 = vmul.f32 %v149, %v2323
    %v2378 = vmul.f32 %v150, %v2323
    %v2379 = vmul.f32 %v151, %v2323
    %v2380 = vmul.f32 %v152, %v2323
    %v2381 = vmul.f32 %v153, %v2323
    %v2382 = vmul.f32 %v154, %v2323
    %v2383 = vmul.f32 %v155, %v2323
    %v2384 = vmul.f32 %v156, %v2323
    %v2385 = vmul.f32 %v157, %v2323
    %v2386 = vmul.f32 %v158, %v2323
    %v2387 = vmul.f32 %v159, %v2323
    %v2388 = vmul.f32 %v160, %v2323
    %v2389 = vmul.f32 %v161, %v2323
    %v2390 = vmul.f32 %v162, %v2323
    %v2391 = vmul.f32 %v163, %v2323
    %v2392 = vmul.f32 %v164, %v2323
    %v2393 = vmul.f32 %v165, %v2323
    %v2394 = vmul.f32 %v166, %v2323
    %v2395 = vmul.f32 %v167, %v2323
    %v2396 = vmul.f32 %v168, %v2323
    %v2397 = vmul.f32 %v169, %v2323
    %v2398 = vmul.f32 %v170, %v2323
    %v2399 = vmul.f32 %v171, %v2323
    %v2400 = vmul.f32 %v172, %v2323
    %v2401 = vmul.f32 %v173, %v2323
    %v2402 = vmul.f32 %v174, %v2323
    %v2403 = vmul.f32 %v175, %v2323
    %v2404 = vmul.f32 %v176, %v2323
    %v2405 = vmul.f32 %v177, %v2323
    %v2406 = vmul.f32 %v178, %v2323
    %v2407 = vmul.f32 %v179, %v2323
    %v2408 = vmul.f32 %v180, %v2323
    %v2409 = vmul.f32 %v181, %v2323
    %v2410 = vmul.f32 %v182, %v2323
    %v2411 = vmul.f32 %v183, %v2323
    %v2412 = vmul.f32 %v184, %v2323
    %v2413 = vmul.f32 %v185, %v2323
    %v2414 = vmul.f32 %v186, %v2323
    %v2415 = vmul.f32 %v187, %v2323
    %v2416 = vmul.f32 %v188, %v2323
    %v2417 = vmul.f32 %v189, %v2323
    %v2418 = vmul.f32 %v190, %v2323
    %v2419 = vmul.f32 %v191, %v2323
    %v2420 = vmul.f32 %v192, %v2323
    %v2421 = vmul.f32 %v193, %v2323
    %v2422 = vmul.f32 %v194, %v2323
    %v2423 = vmul.f32 %v195, %v2323
    %v2424 = vmul.f32 %v196, %v2323
    %v2425 = vmul.f32 %v197, %v2323
    %v2426 = vmul.f32 %v198, %v2323
    %v2427 = vmul.f32 %v199, %v2323
    %v2532 = vrot.slane %v2324, 2
    %v2533 = vrot.slane %v2325, 2
    %v2534 = vsel %vm1121, %v2532, %v2533
    %v2535 = vrot.slane %v2326, 2
    %v2536 = vsel %vm1121, %v2533, %v2535
    %v2537 = vrot.slane %v2327, 2
    %v2538 = vsel %vm1121, %v2535, %v2537
    %v2539 = vrot.slane %v2328, 2
    %v2540 = vrot.slane %v2329, 2
    %v2541 = vsel %vm1121, %v2539, %v2540
    %v2542 = vrot.slane %v2330, 2
    %v2543 = vsel %vm1121, %v2540, %v2542
    %v2544 = vrot.slane %v2331, 2
    %v2545 = vsel %vm1121, %v2542, %v2544
    %v2546 = vrot.slane %v2332, 2
    %v2547 = vrot.slane %v2333, 2
    %v2548 = vsel %vm1121, %v2546, %v2547
    %v2549 = vrot.slane %v2334, 2
    %v2550 = vsel %vm1121, %v2547, %v2549
    %v2551 = vrot.slane %v2335, 2
    %v2552 = vsel %vm1121, %v2549, %v2551
    %v2553 = vrot.slane %v2336, 2
    %v2554 = vrot.slane %v2337, 2
    %v2555 = vsel %vm1121, %v2553, %v2554
    %v2556 = vrot.slane %v2338, 2
    %v2557 = vsel %vm1121, %v2554, %v2556
    %v2558 = vrot.slane %v2339, 2
    %v2559 = vsel %vm1121, %v2556, %v2558
    %v2560 = vrot.slane %v2340, 2
    %v2561 = vrot.slane %v2341, 2
    %v2562 = vsel %vm1121, %v2560, %v2561
    %v2563 = vrot.slane %v2342, 2
    %v2564 = vsel %vm1121, %v2561, %v2563
    %v2565 = vrot.slane %v2343, 2
    %v2566 = vsel %vm1121, %v2563, %v2565
    %v2567 = vrot.slane %v2344, 2
    %v2568 = vrot.slane %v2345, 2
    %v2569 = vsel %vm1121, %v2567, %v2568
    %v2570 = vrot.slane %v2346, 2
    %v2571 = vsel %vm1121, %v2568, %v2570
    %v2572 = vrot.slane %v2347, 2
    %v2573 = vsel %vm1121, %v2570, %v2572
    %v2574 = vrot.slane %v2348, 2
    %v2575 = vrot.slane %v2349, 2
    %v2576 = vsel %vm1121, %v2574, %v2575
    %v2577 = vrot.slane %v2350, 2
    %v2578 = vsel %vm1121, %v2575, %v2577
    %v2579 = vrot.slane %v2351, 2
    %v2580 = vsel %vm1121, %v2577, %v2579
    %v2581 = vrot.slane %v2352, 2
    %v2582 = vrot.slane %v2353, 2
    %v2583 = vsel %vm1121, %v2581, %v2582
    %v2584 = vrot.slane %v2354, 2
    %v2585 = vsel %vm1121, %v2582, %v2584
    %v2586 = vrot.slane %v2355, 2
    %v2587 = vsel %vm1121, %v2584, %v2586
    %v2588 = vrot.slane %v2356, 2
    %v2589 = vrot.slane %v2357, 2
    %v2590 = vsel %vm1121, %v2588, %v2589
    %v2591 = vrot.slane %v2358, 2
    %v2592 = vsel %vm1121, %v2589, %v2591
    %v2593 = vrot.slane %v2359, 2
    %v2594 = vsel %vm1121, %v2591, %v2593
    %v2595 = vrot.slane %v2360, 2
    %v2596 = vrot.slane %v2361, 2
    %v2597 = vsel %vm1121, %v2595, %v2596
    %v2598 = vrot.slane %v2362, 2
    %v2599 = vsel %vm1121, %v2596, %v2598
    %v2600 = vrot.slane %v2363, 2
    %v2601 = vsel %vm1121, %v2598, %v2600
    %v2602 = vrot.slane %v2364, 2
    %v2603 = vrot.slane %v2365, 2
    %v2604 = vsel %vm1121, %v2602, %v2603
    %v2605 = vrot.slane %v2366, 2
    %v2606 = vsel %vm1121, %v2603, %v2605
    %v2607 = vrot.slane %v2367, 2
    %v2608 = vsel %vm1121, %v2605, %v2607
    %v2609 = vrot.slane %v2368, 2
    %v2610 = vrot.slane %v2369, 2
    %v2611 = vsel %vm1121, %v2609, %v2610
    %v2612 = vrot.slane %v2370, 2
    %v2613 = vsel %vm1121, %v2610, %v2612
    %v2614 = vrot.slane %v2371, 2
    %v2615 = vsel %vm1121, %v2612, %v2614
    %v2616 = vrot.slane %v2372, 2
    %v2617 = vrot.slane %v2373, 2
    %v2618 = vsel %vm1121, %v2616, %v2617
    %v2619 = vrot.slane %v2374, 2
    %v2620 = vsel %vm1121, %v2617, %v2619
    %v2621 = vrot.slane %v2375, 2
    %v2622 = vsel %vm1121, %v2619, %v2621
    %v2623 = vrot.slane %v2376, 2
    %v2624 = vrot.slane %v2377, 2
    %v2625 = vsel %vm1121, %v2623, %v2624
    %v2626 = vrot.slane %v2378, 2
    %v2627 = vsel %vm1121, %v2624, %v2626
    %v2628 = vrot.slane %v2379, 2
    %v2629 = vsel %vm1121, %v2626, %v2628
    %v2630 = vrot.slane %v2380, 2
    %v2631 = vrot.slane %v2381, 2
    %v2632 = vsel %vm1121, %v2630, %v2631
    %v2633 = vrot.slane %v2382, 2
    %v2634 = vsel %vm1121, %v2631, %v2633
    %v2635 = vrot.slane %v2383, 2
    %v2636 = vsel %vm1121, %v2633, %v2635
    %v2637 = vrot.slane %v2384, 2
    %v2638 = vrot.slane %v2385, 2
    %v2639 = vsel %vm1121, %v2637, %v2638
    %v2640 = vrot.slane %v2386, 2
    %v2641 = vsel %vm1121, %v2638, %v2640
    %v2642 = vrot.slane %v2387, 2
    %v2643 = vsel %vm1121, %v2640, %v2642
    %v2644 = vrot.slane %v2388, 2
    %v2645 = vrot.slane %v2389, 2
    %v2646 = vsel %vm1121, %v2644, %v2645
    %v2647 = vrot.slane %v2390, 2
    %v2648 = vsel %vm1121, %v2645, %v2647
    %v2649 = vrot.slane %v2391, 2
    %v2650 = vsel %vm1121, %v2647, %v2649
    %v2651 = vrot.slane %v2392, 2
    %v2652 = vrot.slane %v2393, 2
    %v2653 = vsel %vm1121, %v2651, %v2652
    %v2654 = vrot.slane %v2394, 2
    %v2655 = vsel %vm1121, %v2652, %v2654
    %v2656 = vrot.slane %v2395, 2
    %v2657 = vsel %vm1121, %v2654, %v2656
    %v2658 = vrot.slane %v2396, 2
    %v2659 = vrot.slane %v2397, 2
    %v2660 = vsel %vm1121, %v2658, %v2659
    %v2661 = vrot.slane %v2398, 2
    %v2662 = vsel %vm1121, %v2659, %v2661
    %v2663 = vrot.slane %v2399, 2
    %v2664 = vsel %vm1121, %v2661, %v2663
    %v2665 = vrot.slane %v2400, 2
    %v2666 = vrot.slane %v2401, 2
    %v2667 = vsel %vm1121, %v2665, %v2666
    %v2668 = vrot.slane %v2402, 2
    %v2669 = vsel %vm1121, %v2666, %v2668
    %v2670 = vrot.slane %v2403, 2
    %v2671 = vsel %vm1121, %v2668, %v2670
    %v2672 = vrot.slane %v2404, 2
    %v2673 = vrot.slane %v2405, 2
    %v2674 = vsel %vm1121, %v2672, %v2673
    %v2675 = vrot.slane %v2406, 2
    %v2676 = vsel %vm1121, %v2673, %v2675
    %v2677 = vrot.slane %v2407, 2
    %v2678 = vsel %vm1121, %v2675, %v2677
    %v2679 = vrot.slane %v2408, 2
    %v2680 = vrot.slane %v2409, 2
    %v2681 = vsel %vm1121, %v2679, %v2680
    %v2682 = vrot.slane %v2410, 2
    %v2683 = vsel %vm1121, %v2680, %v2682
    %v2684 = vrot.slane %v2411, 2
    %v2685 = vsel %vm1121, %v2682, %v2684
    %v2686 = vrot.slane %v2412, 2
    %v2687 = vrot.slane %v2413, 2
    %v2688 = vsel %vm1121, %v2686, %v2687
    %v2689 = vrot.slane %v2414, 2
    %v2690 = vsel %vm1121, %v2687, %v2689
    %v2691 = vrot.slane %v2415, 2
    %v2692 = vsel %vm1121, %v2689, %v2691
    %v2693 = vrot.slane %v2416, 2
    %v2694 = vrot.slane %v2417, 2
    %v2695 = vsel %vm1121, %v2693, %v2694
    %v2696 = vrot.slane %v2418, 2
    %v2697 = vsel %vm1121, %v2694, %v2696
    %v2698 = vrot.slane %v2419, 2
    %v2699 = vsel %vm1121, %v2696, %v2698
    %v2700 = vrot.slane %v2420, 2
    %v2701 = vrot.slane %v2421, 2
    %v2702 = vsel %vm1121, %v2700, %v2701
    %v2703 = vrot.slane %v2422, 2
    %v2704 = vsel %vm1121, %v2701, %v2703
    %v2705 = vrot.slane %v2423, 2
    %v2706 = vsel %vm1121, %v2703, %v2705
    %v2707 = vrot.slane %v2424, 2
    %v2708 = vrot.slane %v2425, 2
    %v2709 = vsel %vm1121, %v2707, %v2708
    %v2710 = vrot.slane %v2426, 2
    %v2711 = vsel %vm1121, %v2708, %v2710
    %v2712 = vrot.slane %v2427, 2
    %v2713 = vsel %vm1121, %v2710, %v2712
    %v2818 = vadd.f32 %v2218, %v2534
    %v2819 = vadd.f32 %v2219, %v2536
    %v2820 = vadd.f32 %v2220, %v2538
    %v2821 = vadd.f32 %v2221, %v2537
    %v2822 = vadd.f32 %v2222, %v2541
    %v2823 = vadd.f32 %v2223, %v2543
    %v2824 = vadd.f32 %v2224, %v2545
    %v2825 = vadd.f32 %v2225, %v2544
    %v2826 = vadd.f32 %v2226, %v2548
    %v2827 = vadd.f32 %v2227, %v2550
    %v2828 = vadd.f32 %v2228, %v2552
    %v2829 = vadd.f32 %v2229, %v2551
    %v2830 = vadd.f32 %v2230, %v2555
    %v2831 = vadd.f32 %v2231, %v2557
    %v2832 = vadd.f32 %v2232, %v2559
    %v2833 = vadd.f32 %v2233, %v2558
    %v2834 = vadd.f32 %v2234, %v2562
    %v2835 = vadd.f32 %v2235, %v2564
    %v2836 = vadd.f32 %v2236, %v2566
    %v2837 = vadd.f32 %v2237, %v2565
    %v2838 = vadd.f32 %v2238, %v2569
    %v2839 = vadd.f32 %v2239, %v2571
    %v2840 = vadd.f32 %v2240, %v2573
    %v2841 = vadd.f32 %v2241, %v2572
    %v2842 = vadd.f32 %v2242, %v2576
    %v2843 = vadd.f32 %v2243, %v2578
    %v2844 = vadd.f32 %v2244, %v2580
    %v2845 = vadd.f32 %v2245, %v2579
    %v2846 = vadd.f32 %v2246, %v2583
    %v2847 = vadd.f32 %v2247, %v2585
    %v2848 = vadd.f32 %v2248, %v2587
    %v2849 = vadd.f32 %v2249, %v2586
    %v2850 = vadd.f32 %v2250, %v2590
    %v2851 = vadd.f32 %v2251, %v2592
    %v2852 = vadd.f32 %v2252, %v2594
    %v2853 = vadd.f32 %v2253, %v2593
    %v2854 = vadd.f32 %v2254, %v2597
    %v2855 = vadd.f32 %v2255, %v2599
    %v2856 = vadd.f32 %v2256, %v2601
    %v2857 = vadd.f32 %v2257, %v2600
    %v2858 = vadd.f32 %v2258, %v2604
    %v2859 = vadd.f32 %v2259, %v2606
    %v2860 = vadd.f32 %v2260, %v2608
    %v2861 = vadd.f32 %v2261, %v2607
    %v2862 = vadd.f32 %v2262, %v2611
    %v2863 = vadd.f32 %v2263, %v2613
    %v2864 = vadd.f32 %v2264, %v2615
    %v2865 = vadd.f32 %v2265, %v2614
    %v2866 = vadd.f32 %v2266, %v2618
    %v2867 = vadd.f32 %v2267, %v2620
    %v2868 = vadd.f32 %v2268, %v2622
    %v2869 = vadd.f32 %v2269, %v2621
    %v2870 = vadd.f32 %v2270, %v2625
    %v2871 = vadd.f32 %v2271, %v2627
    %v2872 = vadd.f32 %v2272, %v2629
    %v2873 = vadd.f32 %v2273, %v2628
    %v2874 = vadd.f32 %v2274, %v2632
    %v2875 = vadd.f32 %v2275, %v2634
    %v2876 = vadd.f32 %v2276, %v2636
    %v2877 = vadd.f32 %v2277, %v2635
    %v2878 = vadd.f32 %v2278, %v2639
    %v2879 = vadd.f32 %v2279, %v2641
    %v2880 = vadd.f32 %v2280, %v2643
    %v2881 = vadd.f32 %v2281, %v2642
    %v2882 = vadd.f32 %v2282, %v2646
    %v2883 = vadd.f32 %v2283, %v2648
    %v2884 = vadd.f32 %v2284, %v2650
    %v2885 = vadd.f32 %v2285, %v2649
    %v2886 = vadd.f32 %v2286, %v2653
    %v2887 = vadd.f32 %v2287, %v2655
    %v2888 = vadd.f32 %v2288, %v2657
    %v2889 = vadd.f32 %v2289, %v2656
    %v2890 = vadd.f32 %v2290, %v2660
    %v2891 = vadd.f32 %v2291, %v2662
    %v2892 = vadd.f32 %v2292, %v2664
    %v2893 = vadd.f32 %v2293, %v2663
    %v2894 = vadd.f32 %v2294, %v2667
    %v2895 = vadd.f32 %v2295, %v2669
    %v2896 = vadd.f32 %v2296, %v2671
    %v2897 = vadd.f32 %v2297, %v2670
    %v2898 = vadd.f32 %v2298, %v2674
    %v2899 = vadd.f32 %v2299, %v2676
    %v2900 = vadd.f32 %v2300, %v2678
    %v2901 = vadd.f32 %v2301, %v2677
    %v2902 = vadd.f32 %v2302, %v2681
    %v2903 = vadd.f32 %v2303, %v2683
    %v2904 = vadd.f32 %v2304, %v2685
    %v2905 = vadd.f32 %v2305, %v2684
    %v2906 = vadd.f32 %v2306, %v2688
    %v2907 = vadd.f32 %v2307, %v2690
    %v2908 = vadd.f32 %v2308, %v2692
    %v2909 = vadd.f32 %v2309, %v2691
    %v2910 = vadd.f32 %v2310, %v2695
    %v2911 = vadd.f32 %v2311, %v2697
    %v2912 = vadd.f32 %v2312, %v2699
    %v2913 = vadd.f32 %v2313, %v2698
    %v2914 = vadd.f32 %v2314, %v2702
    %v2915 = vadd.f32 %v2315, %v2704
    %v2916 = vadd.f32 %v2316, %v2706
    %v2917 = vadd.f32 %v2317, %v2705
    %v2918 = vadd.f32 %v2318, %v2709
    %v2919 = vadd.f32 %v2319, %v2711
    %v2920 = vadd.f32 %v2320, %v2713
    %v2921 = vadd.f32 %v2321, %v2712
    %s2922 = sld [smem:[#allocation9 + $0x6]]
    %v2923 = vstv %s2922
    %v2924 = vmul.f32 %v100, %v2923
    %v2925 = vmul.f32 %v101, %v2923
    %v2926 = vmul.f32 %v102, %v2923
    %v2927 = vmul.f32 %v103, %v2923
    %v2928 = vmul.f32 %v104, %v2923
    %v2929 = vmul.f32 %v105, %v2923
    %v2930 = vmul.f32 %v106, %v2923
    %v2931 = vmul.f32 %v107, %v2923
    %v2932 = vmul.f32 %v108, %v2923
    %v2933 = vmul.f32 %v109, %v2923
    %v2934 = vmul.f32 %v110, %v2923
    %v2935 = vmul.f32 %v111, %v2923
    %v2936 = vmul.f32 %v112, %v2923
    %v2937 = vmul.f32 %v113, %v2923
    %v2938 = vmul.f32 %v114, %v2923
    %v2939 = vmul.f32 %v115, %v2923
    %v2940 = vmul.f32 %v116, %v2923
    %v2941 = vmul.f32 %v117, %v2923
    %v2942 = vmul.f32 %v118, %v2923
    %v2943 = vmul.f32 %v119, %v2923
    %v2944 = vmul.f32 %v120, %v2923
    %v2945 = vmul.f32 %v121, %v2923
    %v2946 = vmul.f32 %v122, %v2923
    %v2947 = vmul.f32 %v123, %v2923
    %v2948 = vmul.f32 %v124, %v2923
    %v2949 = vmul.f32 %v125, %v2923
    %v2950 = vmul.f32 %v126, %v2923
    %v2951 = vmul.f32 %v127, %v2923
    %v2952 = vmul.f32 %v128, %v2923
    %v2953 = vmul.f32 %v129, %v2923
    %v2954 = vmul.f32 %v130, %v2923
    %v2955 = vmul.f32 %v131, %v2923
    %v2956 = vmul.f32 %v132, %v2923
    %v2957 = vmul.f32 %v133, %v2923
    %v2958 = vmul.f32 %v134, %v2923
    %v2959 = vmul.f32 %v135, %v2923
    %v2960 = vmul.f32 %v136, %v2923
    %v2961 = vmul.f32 %v137, %v2923
    %v2962 = vmul.f32 %v138, %v2923
    %v2963 = vmul.f32 %v139, %v2923
    %v2964 = vmul.f32 %v140, %v2923
    %v2965 = vmul.f32 %v141, %v2923
    %v2966 = vmul.f32 %v142, %v2923
    %v2967 = vmul.f32 %v143, %v2923
    %v2968 = vmul.f32 %v144, %v2923
    %v2969 = vmul.f32 %v145, %v2923
    %v2970 = vmul.f32 %v146, %v2923
    %v2971 = vmul.f32 %v147, %v2923
    %v2972 = vmul.f32 %v148, %v2923
    %v2973 = vmul.f32 %v149, %v2923
    %v2974 = vmul.f32 %v150, %v2923
    %v2975 = vmul.f32 %v151, %v2923
    %v2976 = vmul.f32 %v152, %v2923
    %v2977 = vmul.f32 %v153, %v2923
    %v2978 = vmul.f32 %v154, %v2923
    %v2979 = vmul.f32 %v155, %v2923
    %v2980 = vmul.f32 %v156, %v2923
    %v2981 = vmul.f32 %v157, %v2923
    %v2982 = vmul.f32 %v158, %v2923
    %v2983 = vmul.f32 %v159, %v2923
    %v2984 = vmul.f32 %v160, %v2923
    %v2985 = vmul.f32 %v161, %v2923
    %v2986 = vmul.f32 %v162, %v2923
    %v2987 = vmul.f32 %v163, %v2923
    %v2988 = vmul.f32 %v164, %v2923
    %v2989 = vmul.f32 %v165, %v2923
    %v2990 = vmul.f32 %v166, %v2923
    %v2991 = vmul.f32 %v167, %v2923
    %v2992 = vmul.f32 %v168, %v2923
    %v2993 = vmul.f32 %v169, %v2923
    %v2994 = vmul.f32 %v170, %v2923
    %v2995 = vmul.f32 %v171, %v2923
    %v2996 = vmul.f32 %v172, %v2923
    %v2997 = vmul.f32 %v173, %v2923
    %v2998 = vmul.f32 %v174, %v2923
    %v2999 = vmul.f32 %v175, %v2923
    %v3000 = vmul.f32 %v176, %v2923
    %v3001 = vmul.f32 %v177, %v2923
    %v3002 = vmul.f32 %v178, %v2923
    %v3003 = vmul.f32 %v179, %v2923
    %v3004 = vmul.f32 %v180, %v2923
    %v3005 = vmul.f32 %v181, %v2923
    %v3006 = vmul.f32 %v182, %v2923
    %v3007 = vmul.f32 %v183, %v2923
    %v3008 = vmul.f32 %v184, %v2923
    %v3009 = vmul.f32 %v185, %v2923
    %v3010 = vmul.f32 %v186, %v2923
    %v3011 = vmul.f32 %v187, %v2923
    %v3012 = vmul.f32 %v188, %v2923
    %v3013 = vmul.f32 %v189, %v2923
    %v3014 = vmul.f32 %v190, %v2923
    %v3015 = vmul.f32 %v191, %v2923
    %v3016 = vmul.f32 %v192, %v2923
    %v3017 = vmul.f32 %v193, %v2923
    %v3018 = vmul.f32 %v194, %v2923
    %v3019 = vmul.f32 %v195, %v2923
    %v3020 = vmul.f32 %v196, %v2923
    %v3021 = vmul.f32 %v197, %v2923
    %v3022 = vmul.f32 %v198, %v2923
    %v3023 = vmul.f32 %v199, %v2923
    %v3024 = vmul.f32 %v200, %v2923
    %v3025 = vmul.f32 %v201, %v2923
    %v3026 = vmul.f32 %v202, %v2923
    %v3027 = vmul.f32 %v203, %v2923
    %v3028 = vadd.f32 %v2818, %v2924
    %v3029 = vadd.f32 %v2819, %v2925
    %v3030 = vadd.f32 %v2820, %v2926
    %v3031 = vadd.f32 %v2821, %v2927
    %v3032 = vadd.f32 %v2822, %v2928
    %v3033 = vadd.f32 %v2823, %v2929
    %v3034 = vadd.f32 %v2824, %v2930
    %v3035 = vadd.f32 %v2825, %v2931
    %v3036 = vadd.f32 %v2826, %v2932
    %v3037 = vadd.f32 %v2827, %v2933
    %v3038 = vadd.f32 %v2828, %v2934
    %v3039 = vadd.f32 %v2829, %v2935
    %v3040 = vadd.f32 %v2830, %v2936
    %v3041 = vadd.f32 %v2831, %v2937
    %v3042 = vadd.f32 %v2832, %v2938
    %v3043 = vadd.f32 %v2833, %v2939
    %v3044 = vadd.f32 %v2834, %v2940
    %v3045 = vadd.f32 %v2835, %v2941
    %v3046 = vadd.f32 %v2836, %v2942
    %v3047 = vadd.f32 %v2837, %v2943
    %v3048 = vadd.f32 %v2838, %v2944
    %v3049 = vadd.f32 %v2839, %v2945
    %v3050 = vadd.f32 %v2840, %v2946
    %v3051 = vadd.f32 %v2841, %v2947
    %v3052 = vadd.f32 %v2842, %v2948
    %v3053 = vadd.f32 %v2843, %v2949
    %v3054 = vadd.f32 %v2844, %v2950
    %v3055 = vadd.f32 %v2845, %v2951
    %v3056 = vadd.f32 %v2846, %v2952
    %v3057 = vadd.f32 %v2847, %v2953
    %v3058 = vadd.f32 %v2848, %v2954
    %v3059 = vadd.f32 %v2849, %v2955
    %v3060 = vadd.f32 %v2850, %v2956
    %v3061 = vadd.f32 %v2851, %v2957
    %v3062 = vadd.f32 %v2852, %v2958
    %v3063 = vadd.f32 %v2853, %v2959
    %v3064 = vadd.f32 %v2854, %v2960
    %v3065 = vadd.f32 %v2855, %v2961
    %v3066 = vadd.f32 %v2856, %v2962
    %v3067 = vadd.f32 %v2857, %v2963
    %v3068 = vadd.f32 %v2858, %v2964
    %v3069 = vadd.f32 %v2859, %v2965
    %v3070 = vadd.f32 %v2860, %v2966
    %v3071 = vadd.f32 %v2861, %v2967
    %v3072 = vadd.f32 %v2862, %v2968
    %v3073 = vadd.f32 %v2863, %v2969
    %v3074 = vadd.f32 %v2864, %v2970
    %v3075 = vadd.f32 %v2865, %v2971
    %v3076 = vadd.f32 %v2866, %v2972
    %v3077 = vadd.f32 %v2867, %v2973
    %v3078 = vadd.f32 %v2868, %v2974
    %v3079 = vadd.f32 %v2869, %v2975
    %v3080 = vadd.f32 %v2870, %v2976
    %v3081 = vadd.f32 %v2871, %v2977
    %v3082 = vadd.f32 %v2872, %v2978
    %v3083 = vadd.f32 %v2873, %v2979
    %v3084 = vadd.f32 %v2874, %v2980
    %v3085 = vadd.f32 %v2875, %v2981
    %v3086 = vadd.f32 %v2876, %v2982
    %v3087 = vadd.f32 %v2877, %v2983
    %v3088 = vadd.f32 %v2878, %v2984
    %v3089 = vadd.f32 %v2879, %v2985
    %v3090 = vadd.f32 %v2880, %v2986
    %v3091 = vadd.f32 %v2881, %v2987
    %v3092 = vadd.f32 %v2882, %v2988
    %v3093 = vadd.f32 %v2883, %v2989
    %v3094 = vadd.f32 %v2884, %v2990
    %v3095 = vadd.f32 %v2885, %v2991
    %v3096 = vadd.f32 %v2886, %v2992
    %v3097 = vadd.f32 %v2887, %v2993
    %v3098 = vadd.f32 %v2888, %v2994
    %v3099 = vadd.f32 %v2889, %v2995
    %v3100 = vadd.f32 %v2890, %v2996
    %v3101 = vadd.f32 %v2891, %v2997
    %v3102 = vadd.f32 %v2892, %v2998
    %v3103 = vadd.f32 %v2893, %v2999
    %v3104 = vadd.f32 %v2894, %v3000
    %v3105 = vadd.f32 %v2895, %v3001
    %v3106 = vadd.f32 %v2896, %v3002
    %v3107 = vadd.f32 %v2897, %v3003
    %v3108 = vadd.f32 %v2898, %v3004
    %v3109 = vadd.f32 %v2899, %v3005
    %v3110 = vadd.f32 %v2900, %v3006
    %v3111 = vadd.f32 %v2901, %v3007
    %v3112 = vadd.f32 %v2902, %v3008
    %v3113 = vadd.f32 %v2903, %v3009
    %v3114 = vadd.f32 %v2904, %v3010
    %v3115 = vadd.f32 %v2905, %v3011
    %v3116 = vadd.f32 %v2906, %v3012
    %v3117 = vadd.f32 %v2907, %v3013
    %v3118 = vadd.f32 %v2908, %v3014
    %v3119 = vadd.f32 %v2909, %v3015
    %v3120 = vadd.f32 %v2910, %v3016
    %v3121 = vadd.f32 %v2911, %v3017
    %v3122 = vadd.f32 %v2912, %v3018
    %v3123 = vadd.f32 %v2913, %v3019
    %v3124 = vadd.f32 %v2914, %v3020
    %v3125 = vadd.f32 %v2915, %v3021
    %v3126 = vadd.f32 %v2916, %v3022
    %v3127 = vadd.f32 %v2917, %v3023
    %v3128 = vadd.f32 %v2918, %v3024
    %v3129 = vadd.f32 %v2919, %v3025
    %v3130 = vadd.f32 %v2920, %v3026
    %v3131 = vadd.f32 %v2921, %v3027
    %s3132 = sld [smem:[#allocation9 + $0x7]]
    %v3133 = vstv %s3132
    %v3134 = vmul.f32 %v100, %v3133
    %v3135 = vmul.f32 %v101, %v3133
    %v3136 = vmul.f32 %v102, %v3133
    %v3137 = vmul.f32 %v103, %v3133
    %v3138 = vmul.f32 %v104, %v3133
    %v3139 = vmul.f32 %v105, %v3133
    %v3140 = vmul.f32 %v106, %v3133
    %v3141 = vmul.f32 %v107, %v3133
    %v3142 = vmul.f32 %v108, %v3133
    %v3143 = vmul.f32 %v109, %v3133
    %v3144 = vmul.f32 %v110, %v3133
    %v3145 = vmul.f32 %v111, %v3133
    %v3146 = vmul.f32 %v112, %v3133
    %v3147 = vmul.f32 %v113, %v3133
    %v3148 = vmul.f32 %v114, %v3133
    %v3149 = vmul.f32 %v115, %v3133
    %v3150 = vmul.f32 %v116, %v3133
    %v3151 = vmul.f32 %v117, %v3133
    %v3152 = vmul.f32 %v118, %v3133
    %v3153 = vmul.f32 %v119, %v3133
    %v3154 = vmul.f32 %v120, %v3133
    %v3155 = vmul.f32 %v121, %v3133
    %v3156 = vmul.f32 %v122, %v3133
    %v3157 = vmul.f32 %v123, %v3133
    %v3158 = vmul.f32 %v124, %v3133
    %v3159 = vmul.f32 %v125, %v3133
    %v3160 = vmul.f32 %v126, %v3133
    %v3161 = vmul.f32 %v127, %v3133
    %v3162 = vmul.f32 %v128, %v3133
    %v3163 = vmul.f32 %v129, %v3133
    %v3164 = vmul.f32 %v130, %v3133
    %v3165 = vmul.f32 %v131, %v3133
    %v3166 = vmul.f32 %v132, %v3133
    %v3167 = vmul.f32 %v133, %v3133
    %v3168 = vmul.f32 %v134, %v3133
    %v3169 = vmul.f32 %v135, %v3133
    %v3170 = vmul.f32 %v136, %v3133
    %v3171 = vmul.f32 %v137, %v3133
    %v3172 = vmul.f32 %v138, %v3133
    %v3173 = vmul.f32 %v139, %v3133
    %v3174 = vmul.f32 %v140, %v3133
    %v3175 = vmul.f32 %v141, %v3133
    %v3176 = vmul.f32 %v142, %v3133
    %v3177 = vmul.f32 %v143, %v3133
    %v3178 = vmul.f32 %v144, %v3133
    %v3179 = vmul.f32 %v145, %v3133
    %v3180 = vmul.f32 %v146, %v3133
    %v3181 = vmul.f32 %v147, %v3133
    %v3182 = vmul.f32 %v148, %v3133
    %v3183 = vmul.f32 %v149, %v3133
    %v3184 = vmul.f32 %v150, %v3133
    %v3185 = vmul.f32 %v151, %v3133
    %v3186 = vmul.f32 %v152, %v3133
    %v3187 = vmul.f32 %v153, %v3133
    %v3188 = vmul.f32 %v154, %v3133
    %v3189 = vmul.f32 %v155, %v3133
    %v3190 = vmul.f32 %v156, %v3133
    %v3191 = vmul.f32 %v157, %v3133
    %v3192 = vmul.f32 %v158, %v3133
    %v3193 = vmul.f32 %v159, %v3133
    %v3194 = vmul.f32 %v160, %v3133
    %v3195 = vmul.f32 %v161, %v3133
    %v3196 = vmul.f32 %v162, %v3133
    %v3197 = vmul.f32 %v163, %v3133
    %v3198 = vmul.f32 %v164, %v3133
    %v3199 = vmul.f32 %v165, %v3133
    %v3200 = vmul.f32 %v166, %v3133
    %v3201 = vmul.f32 %v167, %v3133
    %v3202 = vmul.f32 %v168, %v3133
    %v3203 = vmul.f32 %v169, %v3133
    %v3204 = vmul.f32 %v170, %v3133
    %v3205 = vmul.f32 %v171, %v3133
    %v3206 = vmul.f32 %v172, %v3133
    %v3207 = vmul.f32 %v173, %v3133
    %v3208 = vmul.f32 %v174, %v3133
    %v3209 = vmul.f32 %v175, %v3133
    %v3210 = vmul.f32 %v176, %v3133
    %v3211 = vmul.f32 %v177, %v3133
    %v3212 = vmul.f32 %v178, %v3133
    %v3213 = vmul.f32 %v179, %v3133
    %v3214 = vmul.f32 %v180, %v3133
    %v3215 = vmul.f32 %v181, %v3133
    %v3216 = vmul.f32 %v182, %v3133
    %v3217 = vmul.f32 %v183, %v3133
    %v3218 = vmul.f32 %v184, %v3133
    %v3219 = vmul.f32 %v185, %v3133
    %v3220 = vmul.f32 %v186, %v3133
    %v3221 = vmul.f32 %v187, %v3133
    %v3222 = vmul.f32 %v188, %v3133
    %v3223 = vmul.f32 %v189, %v3133
    %v3224 = vmul.f32 %v190, %v3133
    %v3225 = vmul.f32 %v191, %v3133
    %v3226 = vmul.f32 %v192, %v3133
    %v3227 = vmul.f32 %v193, %v3133
    %v3228 = vmul.f32 %v194, %v3133
    %v3229 = vmul.f32 %v195, %v3133
    %v3230 = vmul.f32 %v196, %v3133
    %v3231 = vmul.f32 %v197, %v3133
    %v3232 = vmul.f32 %v198, %v3133
    %v3233 = vmul.f32 %v199, %v3133
    %v3234 = vmul.f32 %v200, %v3133
    %v3235 = vmul.f32 %v201, %v3133
    %v3236 = vmul.f32 %v202, %v3133
    %v3237 = vmul.f32 %v203, %v3133
    %v3342 = vrot.slane %v3134, 1
    %v3343 = vrot.slane %v3135, 1
    %v3344 = vsel %vm520, %v3342, %v3343
    %v3345 = vrot.slane %v3136, 1
    %v3346 = vsel %vm520, %v3343, %v3345
    %v3347 = vrot.slane %v3137, 1
    %v3348 = vsel %vm520, %v3345, %v3347
    %v3349 = vrot.slane %v3138, 1
    %v3350 = vrot.slane %v3139, 1
    %v3351 = vsel %vm520, %v3349, %v3350
    %v3352 = vrot.slane %v3140, 1
    %v3353 = vsel %vm520, %v3350, %v3352
    %v3354 = vrot.slane %v3141, 1
    %v3355 = vsel %vm520, %v3352, %v3354
    %v3356 = vrot.slane %v3142, 1
    %v3357 = vrot.slane %v3143, 1
    %v3358 = vsel %vm520, %v3356, %v3357
    %v3359 = vrot.slane %v3144, 1
    %v3360 = vsel %vm520, %v3357, %v3359
    %v3361 = vrot.slane %v3145, 1
    %v3362 = vsel %vm520, %v3359, %v3361
    %v3363 = vrot.slane %v3146, 1
    %v3364 = vrot.slane %v3147, 1
    %v3365 = vsel %vm520, %v3363, %v3364
    %v3366 = vrot.slane %v3148, 1
    %v3367 = vsel %vm520, %v3364, %v3366
    %v3368 = vrot.slane %v3149, 1
    %v3369 = vsel %vm520, %v3366, %v3368
    %v3370 = vrot.slane %v3150, 1
    %v3371 = vrot.slane %v3151, 1
    %v3372 = vsel %vm520, %v3370, %v3371
    %v3373 = vrot.slane %v3152, 1
    %v3374 = vsel %vm520, %v3371, %v3373
    %v3375 = vrot.slane %v3153, 1
    %v3376 = vsel %vm520, %v3373, %v3375
    %v3377 = vrot.slane %v3154, 1
    %v3378 = vrot.slane %v3155, 1
    %v3379 = vsel %vm520, %v3377, %v3378
    %v3380 = vrot.slane %v3156, 1
    %v3381 = vsel %vm520, %v3378, %v3380
    %v3382 = vrot.slane %v3157, 1
    %v3383 = vsel %vm520, %v3380, %v3382
    %v3384 = vrot.slane %v3158, 1
    %v3385 = vrot.slane %v3159, 1
    %v3386 = vsel %vm520, %v3384, %v3385
    %v3387 = vrot.slane %v3160, 1
    %v3388 = vsel %vm520, %v3385, %v3387
    %v3389 = vrot.slane %v3161, 1
    %v3390 = vsel %vm520, %v3387, %v3389
    %v3391 = vrot.slane %v3162, 1
    %v3392 = vrot.slane %v3163, 1
    %v3393 = vsel %vm520, %v3391, %v3392
    %v3394 = vrot.slane %v3164, 1
    %v3395 = vsel %vm520, %v3392, %v3394
    %v3396 = vrot.slane %v3165, 1
    %v3397 = vsel %vm520, %v3394, %v3396
    %v3398 = vrot.slane %v3166, 1
    %v3399 = vrot.slane %v3167, 1
    %v3400 = vsel %vm520, %v3398, %v3399
    %v3401 = vrot.slane %v3168, 1
    %v3402 = vsel %vm520, %v3399, %v3401
    %v3403 = vrot.slane %v3169, 1
    %v3404 = vsel %vm520, %v3401, %v3403
    %v3405 = vrot.slane %v3170, 1
    %v3406 = vrot.slane %v3171, 1
    %v3407 = vsel %vm520, %v3405, %v3406
    %v3408 = vrot.slane %v3172, 1
    %v3409 = vsel %vm520, %v3406, %v3408
    %v3410 = vrot.slane %v3173, 1
    %v3411 = vsel %vm520, %v3408, %v3410
    %v3412 = vrot.slane %v3174, 1
    %v3413 = vrot.slane %v3175, 1
    %v3414 = vsel %vm520, %v3412, %v3413
    %v3415 = vrot.slane %v3176, 1
    %v3416 = vsel %vm520, %v3413, %v3415
    %v3417 = vrot.slane %v3177, 1
    %v3418 = vsel %vm520, %v3415, %v3417
    %v3419 = vrot.slane %v3178, 1
    %v3420 = vrot.slane %v3179, 1
    %v3421 = vsel %vm520, %v3419, %v3420
    %v3422 = vrot.slane %v3180, 1
    %v3423 = vsel %vm520, %v3420, %v3422
    %v3424 = vrot.slane %v3181, 1
    %v3425 = vsel %vm520, %v3422, %v3424
    %v3426 = vrot.slane %v3182, 1
    %v3427 = vrot.slane %v3183, 1
    %v3428 = vsel %vm520, %v3426, %v3427
    %v3429 = vrot.slane %v3184, 1
    %v3430 = vsel %vm520, %v3427, %v3429
    %v3431 = vrot.slane %v3185, 1
    %v3432 = vsel %vm520, %v3429, %v3431
    %v3433 = vrot.slane %v3186, 1
    %v3434 = vrot.slane %v3187, 1
    %v3435 = vsel %vm520, %v3433, %v3434
    %v3436 = vrot.slane %v3188, 1
    %v3437 = vsel %vm520, %v3434, %v3436
    %v3438 = vrot.slane %v3189, 1
    %v3439 = vsel %vm520, %v3436, %v3438
    %v3440 = vrot.slane %v3190, 1
    %v3441 = vrot.slane %v3191, 1
    %v3442 = vsel %vm520, %v3440, %v3441
    %v3443 = vrot.slane %v3192, 1
    %v3444 = vsel %vm520, %v3441, %v3443
    %v3445 = vrot.slane %v3193, 1
    %v3446 = vsel %vm520, %v3443, %v3445
    %v3447 = vrot.slane %v3194, 1
    %v3448 = vrot.slane %v3195, 1
    %v3449 = vsel %vm520, %v3447, %v3448
    %v3450 = vrot.slane %v3196, 1
    %v3451 = vsel %vm520, %v3448, %v3450
    %v3452 = vrot.slane %v3197, 1
    %v3453 = vsel %vm520, %v3450, %v3452
    %v3454 = vrot.slane %v3198, 1
    %v3455 = vrot.slane %v3199, 1
    %v3456 = vsel %vm520, %v3454, %v3455
    %v3457 = vrot.slane %v3200, 1
    %v3458 = vsel %vm520, %v3455, %v3457
    %v3459 = vrot.slane %v3201, 1
    %v3460 = vsel %vm520, %v3457, %v3459
    %v3461 = vrot.slane %v3202, 1
    %v3462 = vrot.slane %v3203, 1
    %v3463 = vsel %vm520, %v3461, %v3462
    %v3464 = vrot.slane %v3204, 1
    %v3465 = vsel %vm520, %v3462, %v3464
    %v3466 = vrot.slane %v3205, 1
    %v3467 = vsel %vm520, %v3464, %v3466
    %v3468 = vrot.slane %v3206, 1
    %v3469 = vrot.slane %v3207, 1
    %v3470 = vsel %vm520, %v3468, %v3469
    %v3471 = vrot.slane %v3208, 1
    %v3472 = vsel %vm520, %v3469, %v3471
    %v3473 = vrot.slane %v3209, 1
    %v3474 = vsel %vm520, %v3471, %v3473
    %v3475 = vrot.slane %v3210, 1
    %v3476 = vrot.slane %v3211, 1
    %v3477 = vsel %vm520, %v3475, %v3476
    %v3478 = vrot.slane %v3212, 1
    %v3479 = vsel %vm520, %v3476, %v3478
    %v3480 = vrot.slane %v3213, 1
    %v3481 = vsel %vm520, %v3478, %v3480
    %v3482 = vrot.slane %v3214, 1
    %v3483 = vrot.slane %v3215, 1
    %v3484 = vsel %vm520, %v3482, %v3483
    %v3485 = vrot.slane %v3216, 1
    %v3486 = vsel %vm520, %v3483, %v3485
    %v3487 = vrot.slane %v3217, 1
    %v3488 = vsel %vm520, %v3485, %v3487
    %v3489 = vrot.slane %v3218, 1
    %v3490 = vrot.slane %v3219, 1
    %v3491 = vsel %vm520, %v3489, %v3490
    %v3492 = vrot.slane %v3220, 1
    %v3493 = vsel %vm520, %v3490, %v3492
    %v3494 = vrot.slane %v3221, 1
    %v3495 = vsel %vm520, %v3492, %v3494
    %v3496 = vrot.slane %v3222, 1
    %v3497 = vrot.slane %v3223, 1
    %v3498 = vsel %vm520, %v3496, %v3497
    %v3499 = vrot.slane %v3224, 1
    %v3500 = vsel %vm520, %v3497, %v3499
    %v3501 = vrot.slane %v3225, 1
    %v3502 = vsel %vm520, %v3499, %v3501
    %v3503 = vrot.slane %v3226, 1
    %v3504 = vrot.slane %v3227, 1
    %v3505 = vsel %vm520, %v3503, %v3504
    %v3506 = vrot.slane %v3228, 1
    %v3507 = vsel %vm520, %v3504, %v3506
    %v3508 = vrot.slane %v3229, 1
    %v3509 = vsel %vm520, %v3506, %v3508
    %v3510 = vrot.slane %v3230, 1
    %v3511 = vrot.slane %v3231, 1
    %v3512 = vsel %vm520, %v3510, %v3511
    %v3513 = vrot.slane %v3232, 1
    %v3514 = vsel %vm520, %v3511, %v3513
    %v3515 = vrot.slane %v3233, 1
    %v3516 = vsel %vm520, %v3513, %v3515
    %v3517 = vrot.slane %v3234, 1
    %v3518 = vrot.slane %v3235, 1
    %v3519 = vsel %vm520, %v3517, %v3518
    %v3520 = vrot.slane %v3236, 1
    %v3521 = vsel %vm520, %v3518, %v3520
    %v3522 = vrot.slane %v3237, 1
    %v3523 = vsel %vm520, %v3520, %v3522
    %v3628 = vadd.f32 %v3028, %v3344
    %v3629 = vadd.f32 %v3029, %v3346
    %v3630 = vadd.f32 %v3030, %v3348
    %v3631 = vadd.f32 %v3031, %v3347
    %v3632 = vadd.f32 %v3032, %v3351
    %v3633 = vadd.f32 %v3033, %v3353
    %v3634 = vadd.f32 %v3034, %v3355
    %v3635 = vadd.f32 %v3035, %v3354
    %v3636 = vadd.f32 %v3036, %v3358
    %v3637 = vadd.f32 %v3037, %v3360
    %v3638 = vadd.f32 %v3038, %v3362
    %v3639 = vadd.f32 %v3039, %v3361
    %v3640 = vadd.f32 %v3040, %v3365
    %v3641 = vadd.f32 %v3041, %v3367
    %v3642 = vadd.f32 %v3042, %v3369
    %v3643 = vadd.f32 %v3043, %v3368
    %v3644 = vadd.f32 %v3044, %v3372
    %v3645 = vadd.f32 %v3045, %v3374
    %v3646 = vadd.f32 %v3046, %v3376
    %v3647 = vadd.f32 %v3047, %v3375
    %v3648 = vadd.f32 %v3048, %v3379
    %v3649 = vadd.f32 %v3049, %v3381
    %v3650 = vadd.f32 %v3050, %v3383
    %v3651 = vadd.f32 %v3051, %v3382
    %v3652 = vadd.f32 %v3052, %v3386
    %v3653 = vadd.f32 %v3053, %v3388
    %v3654 = vadd.f32 %v3054, %v3390
    %v3655 = vadd.f32 %v3055, %v3389
    %v3656 = vadd.f32 %v3056, %v3393
    %v3657 = vadd.f32 %v3057, %v3395
    %v3658 = vadd.f32 %v3058, %v3397
    %v3659 = vadd.f32 %v3059, %v3396
    %v3660 = vadd.f32 %v3060, %v3400
    %v3661 = vadd.f32 %v3061, %v3402
    %v3662 = vadd.f32 %v3062, %v3404
    %v3663 = vadd.f32 %v3063, %v3403
    %v3664 = vadd.f32 %v3064, %v3407
    %v3665 = vadd.f32 %v3065, %v3409
    %v3666 = vadd.f32 %v3066, %v3411
    %v3667 = vadd.f32 %v3067, %v3410
    %v3668 = vadd.f32 %v3068, %v3414
    %v3669 = vadd.f32 %v3069, %v3416
    %v3670 = vadd.f32 %v3070, %v3418
    %v3671 = vadd.f32 %v3071, %v3417
    %v3672 = vadd.f32 %v3072, %v3421
    %v3673 = vadd.f32 %v3073, %v3423
    %v3674 = vadd.f32 %v3074, %v3425
    %v3675 = vadd.f32 %v3075, %v3424
    %v3676 = vadd.f32 %v3076, %v3428
    %v3677 = vadd.f32 %v3077, %v3430
    %v3678 = vadd.f32 %v3078, %v3432
    %v3679 = vadd.f32 %v3079, %v3431
    %v3680 = vadd.f32 %v3080, %v3435
    %v3681 = vadd.f32 %v3081, %v3437
    %v3682 = vadd.f32 %v3082, %v3439
    %v3683 = vadd.f32 %v3083, %v3438
    %v3684 = vadd.f32 %v3084, %v3442
    %v3685 = vadd.f32 %v3085, %v3444
    %v3686 = vadd.f32 %v3086, %v3446
    %v3687 = vadd.f32 %v3087, %v3445
    %v3688 = vadd.f32 %v3088, %v3449
    %v3689 = vadd.f32 %v3089, %v3451
    %v3690 = vadd.f32 %v3090, %v3453
    %v3691 = vadd.f32 %v3091, %v3452
    %v3692 = vadd.f32 %v3092, %v3456
    %v3693 = vadd.f32 %v3093, %v3458
    %v3694 = vadd.f32 %v3094, %v3460
    %v3695 = vadd.f32 %v3095, %v3459
    %v3696 = vadd.f32 %v3096, %v3463
    %v3697 = vadd.f32 %v3097, %v3465
    %v3698 = vadd.f32 %v3098, %v3467
    %v3699 = vadd.f32 %v3099, %v3466
    %v3700 = vadd.f32 %v3100, %v3470
    %v3701 = vadd.f32 %v3101, %v3472
    %v3702 = vadd.f32 %v3102, %v3474
    %v3703 = vadd.f32 %v3103, %v3473
    %v3704 = vadd.f32 %v3104, %v3477
    %v3705 = vadd.f32 %v3105, %v3479
    %v3706 = vadd.f32 %v3106, %v3481
    %v3707 = vadd.f32 %v3107, %v3480
    %v3708 = vadd.f32 %v3108, %v3484
    %v3709 = vadd.f32 %v3109, %v3486
    %v3710 = vadd.f32 %v3110, %v3488
    %v3711 = vadd.f32 %v3111, %v3487
    %v3712 = vadd.f32 %v3112, %v3491
    %v3713 = vadd.f32 %v3113, %v3493
    %v3714 = vadd.f32 %v3114, %v3495
    %v3715 = vadd.f32 %v3115, %v3494
    %v3716 = vadd.f32 %v3116, %v3498
    %v3717 = vadd.f32 %v3117, %v3500
    %v3718 = vadd.f32 %v3118, %v3502
    %v3719 = vadd.f32 %v3119, %v3501
    %v3720 = vadd.f32 %v3120, %v3505
    %v3721 = vadd.f32 %v3121, %v3507
    %v3722 = vadd.f32 %v3122, %v3509
    %v3723 = vadd.f32 %v3123, %v3508
    %v3724 = vadd.f32 %v3124, %v3512
    %v3725 = vadd.f32 %v3125, %v3514
    %v3726 = vadd.f32 %v3126, %v3516
    %v3727 = vadd.f32 %v3127, %v3515
    %v3728 = vadd.f32 %v3128, %v3519
    %v3729 = vadd.f32 %v3129, %v3521
    %v3730 = vadd.f32 %v3130, %v3523
    %v3731 = vadd.f32 %v3131, %v3522
    %s3732 = sld [smem:[#allocation9 + $0x8]]
    %v3733 = vstv %s3732
    %v3734 = vmul.f32 %v100, %v3733
    %v3735 = vmul.f32 %v101, %v3733
    %v3736 = vmul.f32 %v102, %v3733
    %v3737 = vmul.f32 %v103, %v3733
    %v3738 = vmul.f32 %v104, %v3733
    %v3739 = vmul.f32 %v105, %v3733
    %v3740 = vmul.f32 %v106, %v3733
    %v3741 = vmul.f32 %v107, %v3733
    %v3742 = vmul.f32 %v108, %v3733
    %v3743 = vmul.f32 %v109, %v3733
    %v3744 = vmul.f32 %v110, %v3733
    %v3745 = vmul.f32 %v111, %v3733
    %v3746 = vmul.f32 %v112, %v3733
    %v3747 = vmul.f32 %v113, %v3733
    %v3748 = vmul.f32 %v114, %v3733
    %v3749 = vmul.f32 %v115, %v3733
    %v3750 = vmul.f32 %v116, %v3733
    %v3751 = vmul.f32 %v117, %v3733
    %v3752 = vmul.f32 %v118, %v3733
    %v3753 = vmul.f32 %v119, %v3733
    %v3754 = vmul.f32 %v120, %v3733
    %v3755 = vmul.f32 %v121, %v3733
    %v3756 = vmul.f32 %v122, %v3733
    %v3757 = vmul.f32 %v123, %v3733
    %v3758 = vmul.f32 %v124, %v3733
    %v3759 = vmul.f32 %v125, %v3733
    %v3760 = vmul.f32 %v126, %v3733
    %v3761 = vmul.f32 %v127, %v3733
    %v3762 = vmul.f32 %v128, %v3733
    %v3763 = vmul.f32 %v129, %v3733
    %v3764 = vmul.f32 %v130, %v3733
    %v3765 = vmul.f32 %v131, %v3733
    %v3766 = vmul.f32 %v132, %v3733
    %v3767 = vmul.f32 %v133, %v3733
    %v3768 = vmul.f32 %v134, %v3733
    %v3769 = vmul.f32 %v135, %v3733
    %v3770 = vmul.f32 %v136, %v3733
    %v3771 = vmul.f32 %v137, %v3733
    %v3772 = vmul.f32 %v138, %v3733
    %v3773 = vmul.f32 %v139, %v3733
    %v3774 = vmul.f32 %v140, %v3733
    %v3775 = vmul.f32 %v141, %v3733
    %v3776 = vmul.f32 %v142, %v3733
    %v3777 = vmul.f32 %v143, %v3733
    %v3778 = vmul.f32 %v144, %v3733
    %v3779 = vmul.f32 %v145, %v3733
    %v3780 = vmul.f32 %v146, %v3733
    %v3781 = vmul.f32 %v147, %v3733
    %v3782 = vmul.f32 %v148, %v3733
    %v3783 = vmul.f32 %v149, %v3733
    %v3784 = vmul.f32 %v150, %v3733
    %v3785 = vmul.f32 %v151, %v3733
    %v3786 = vmul.f32 %v152, %v3733
    %v3787 = vmul.f32 %v153, %v3733
    %v3788 = vmul.f32 %v154, %v3733
    %v3789 = vmul.f32 %v155, %v3733
    %v3790 = vmul.f32 %v156, %v3733
    %v3791 = vmul.f32 %v157, %v3733
    %v3792 = vmul.f32 %v158, %v3733
    %v3793 = vmul.f32 %v159, %v3733
    %v3794 = vmul.f32 %v160, %v3733
    %v3795 = vmul.f32 %v161, %v3733
    %v3796 = vmul.f32 %v162, %v3733
    %v3797 = vmul.f32 %v163, %v3733
    %v3798 = vmul.f32 %v164, %v3733
    %v3799 = vmul.f32 %v165, %v3733
    %v3800 = vmul.f32 %v166, %v3733
    %v3801 = vmul.f32 %v167, %v3733
    %v3802 = vmul.f32 %v168, %v3733
    %v3803 = vmul.f32 %v169, %v3733
    %v3804 = vmul.f32 %v170, %v3733
    %v3805 = vmul.f32 %v171, %v3733
    %v3806 = vmul.f32 %v172, %v3733
    %v3807 = vmul.f32 %v173, %v3733
    %v3808 = vmul.f32 %v174, %v3733
    %v3809 = vmul.f32 %v175, %v3733
    %v3810 = vmul.f32 %v176, %v3733
    %v3811 = vmul.f32 %v177, %v3733
    %v3812 = vmul.f32 %v178, %v3733
    %v3813 = vmul.f32 %v179, %v3733
    %v3814 = vmul.f32 %v180, %v3733
    %v3815 = vmul.f32 %v181, %v3733
    %v3816 = vmul.f32 %v182, %v3733
    %v3817 = vmul.f32 %v183, %v3733
    %v3818 = vmul.f32 %v184, %v3733
    %v3819 = vmul.f32 %v185, %v3733
    %v3820 = vmul.f32 %v186, %v3733
    %v3821 = vmul.f32 %v187, %v3733
    %v3822 = vmul.f32 %v188, %v3733
    %v3823 = vmul.f32 %v189, %v3733
    %v3824 = vmul.f32 %v190, %v3733
    %v3825 = vmul.f32 %v191, %v3733
    %v3826 = vmul.f32 %v192, %v3733
    %v3827 = vmul.f32 %v193, %v3733
    %v3828 = vmul.f32 %v194, %v3733
    %v3829 = vmul.f32 %v195, %v3733
    %v3830 = vmul.f32 %v196, %v3733
    %v3831 = vmul.f32 %v197, %v3733
    %v3832 = vmul.f32 %v198, %v3733
    %v3833 = vmul.f32 %v199, %v3733
    %v3834 = vmul.f32 %v200, %v3733
    %v3835 = vmul.f32 %v201, %v3733
    %v3836 = vmul.f32 %v202, %v3733
    %v3837 = vmul.f32 %v203, %v3733
    %v3942 = vrot.slane %v3734, 2
    %v3943 = vrot.slane %v3735, 2
    %v3944 = vsel %vm1121, %v3942, %v3943
    %v3945 = vrot.slane %v3736, 2
    %v3946 = vsel %vm1121, %v3943, %v3945
    %v3947 = vrot.slane %v3737, 2
    %v3948 = vsel %vm1121, %v3945, %v3947
    %v3949 = vrot.slane %v3738, 2
    %v3950 = vrot.slane %v3739, 2
    %v3951 = vsel %vm1121, %v3949, %v3950
    %v3952 = vrot.slane %v3740, 2
    %v3953 = vsel %vm1121, %v3950, %v3952
    %v3954 = vrot.slane %v3741, 2
    %v3955 = vsel %vm1121, %v3952, %v3954
    %v3956 = vrot.slane %v3742, 2
    %v3957 = vrot.slane %v3743, 2
    %v3958 = vsel %vm1121, %v3956, %v3957
    %v3959 = vrot.slane %v3744, 2
    %v3960 = vsel %vm1121, %v3957, %v3959
    %v3961 = vrot.slane %v3745, 2
    %v3962 = vsel %vm1121, %v3959, %v3961
    %v3963 = vrot.slane %v3746, 2
    %v3964 = vrot.slane %v3747, 2
    %v3965 = vsel %vm1121, %v3963, %v3964
    %v3966 = vrot.slane %v3748, 2
    %v3967 = vsel %vm1121, %v3964, %v3966
    %v3968 = vrot.slane %v3749, 2
    %v3969 = vsel %vm1121, %v3966, %v3968
    %v3970 = vrot.slane %v3750, 2
    %v3971 = vrot.slane %v3751, 2
    %v3972 = vsel %vm1121, %v3970, %v3971
    %v3973 = vrot.slane %v3752, 2
    %v3974 = vsel %vm1121, %v3971, %v3973
    %v3975 = vrot.slane %v3753, 2
    %v3976 = vsel %vm1121, %v3973, %v3975
    %v3977 = vrot.slane %v3754, 2
    %v3978 = vrot.slane %v3755, 2
    %v3979 = vsel %vm1121, %v3977, %v3978
    %v3980 = vrot.slane %v3756, 2
    %v3981 = vsel %vm1121, %v3978, %v3980
    %v3982 = vrot.slane %v3757, 2
    %v3983 = vsel %vm1121, %v3980, %v3982
    %v3984 = vrot.slane %v3758, 2
    %v3985 = vrot.slane %v3759, 2
    %v3986 = vsel %vm1121, %v3984, %v3985
    %v3987 = vrot.slane %v3760, 2
    %v3988 = vsel %vm1121, %v3985, %v3987
    %v3989 = vrot.slane %v3761, 2
    %v3990 = vsel %vm1121, %v3987, %v3989
    %v3991 = vrot.slane %v3762, 2
    %v3992 = vrot.slane %v3763, 2
    %v3993 = vsel %vm1121, %v3991, %v3992
    %v3994 = vrot.slane %v3764, 2
    %v3995 = vsel %vm1121, %v3992, %v3994
    %v3996 = vrot.slane %v3765, 2
    %v3997 = vsel %vm1121, %v3994, %v3996
    %v3998 = vrot.slane %v3766, 2
    %v3999 = vrot.slane %v3767, 2
    %v4000 = vsel %vm1121, %v3998, %v3999
    %v4001 = vrot.slane %v3768, 2
    %v4002 = vsel %vm1121, %v3999, %v4001
    %v4003 = vrot.slane %v3769, 2
    %v4004 = vsel %vm1121, %v4001, %v4003
    %v4005 = vrot.slane %v3770, 2
    %v4006 = vrot.slane %v3771, 2
    %v4007 = vsel %vm1121, %v4005, %v4006
    %v4008 = vrot.slane %v3772, 2
    %v4009 = vsel %vm1121, %v4006, %v4008
    %v4010 = vrot.slane %v3773, 2
    %v4011 = vsel %vm1121, %v4008, %v4010
    %v4012 = vrot.slane %v3774, 2
    %v4013 = vrot.slane %v3775, 2
    %v4014 = vsel %vm1121, %v4012, %v4013
    %v4015 = vrot.slane %v3776, 2
    %v4016 = vsel %vm1121, %v4013, %v4015
    %v4017 = vrot.slane %v3777, 2
    %v4018 = vsel %vm1121, %v4015, %v4017
    %v4019 = vrot.slane %v3778, 2
    %v4020 = vrot.slane %v3779, 2
    %v4021 = vsel %vm1121, %v4019, %v4020
    %v4022 = vrot.slane %v3780, 2
    %v4023 = vsel %vm1121, %v4020, %v4022
    %v4024 = vrot.slane %v3781, 2
    %v4025 = vsel %vm1121, %v4022, %v4024
    %v4026 = vrot.slane %v3782, 2
    %v4027 = vrot.slane %v3783, 2
    %v4028 = vsel %vm1121, %v4026, %v4027
    %v4029 = vrot.slane %v3784, 2
    %v4030 = vsel %vm1121, %v4027, %v4029
    %v4031 = vrot.slane %v3785, 2
    %v4032 = vsel %vm1121, %v4029, %v4031
    %v4033 = vrot.slane %v3786, 2
    %v4034 = vrot.slane %v3787, 2
    %v4035 = vsel %vm1121, %v4033, %v4034
    %v4036 = vrot.slane %v3788, 2
    %v4037 = vsel %vm1121, %v4034, %v4036
    %v4038 = vrot.slane %v3789, 2
    %v4039 = vsel %vm1121, %v4036, %v4038
    %v4040 = vrot.slane %v3790, 2
    %v4041 = vrot.slane %v3791, 2
    %v4042 = vsel %vm1121, %v4040, %v4041
    %v4043 = vrot.slane %v3792, 2
    %v4044 = vsel %vm1121, %v4041, %v4043
    %v4045 = vrot.slane %v3793, 2
    %v4046 = vsel %vm1121, %v4043, %v4045
    %v4047 = vrot.slane %v3794, 2
    %v4048 = vrot.slane %v3795, 2
    %v4049 = vsel %vm1121, %v4047, %v4048
    %v4050 = vrot.slane %v3796, 2
    %v4051 = vsel %vm1121, %v4048, %v4050
    %v4052 = vrot.slane %v3797, 2
    %v4053 = vsel %vm1121, %v4050, %v4052
    %v4054 = vrot.slane %v3798, 2
    %v4055 = vrot.slane %v3799, 2
    %v4056 = vsel %vm1121, %v4054, %v4055
    %v4057 = vrot.slane %v3800, 2
    %v4058 = vsel %vm1121, %v4055, %v4057
    %v4059 = vrot.slane %v3801, 2
    %v4060 = vsel %vm1121, %v4057, %v4059
    %v4061 = vrot.slane %v3802, 2
    %v4062 = vrot.slane %v3803, 2
    %v4063 = vsel %vm1121, %v4061, %v4062
    %v4064 = vrot.slane %v3804, 2
    %v4065 = vsel %vm1121, %v4062, %v4064
    %v4066 = vrot.slane %v3805, 2
    %v4067 = vsel %vm1121, %v4064, %v4066
    %v4068 = vrot.slane %v3806, 2
    %v4069 = vrot.slane %v3807, 2
    %v4070 = vsel %vm1121, %v4068, %v4069
    %v4071 = vrot.slane %v3808, 2
    %v4072 = vsel %vm1121, %v4069, %v4071
    %v4073 = vrot.slane %v3809, 2
    %v4074 = vsel %vm1121, %v4071, %v4073
    %v4075 = vrot.slane %v3810, 2
    %v4076 = vrot.slane %v3811, 2
    %v4077 = vsel %vm1121, %v4075, %v4076
    %v4078 = vrot.slane %v3812, 2
    %v4079 = vsel %vm1121, %v4076, %v4078
    %v4080 = vrot.slane %v3813, 2
    %v4081 = vsel %vm1121, %v4078, %v4080
    %v4082 = vrot.slane %v3814, 2
    %v4083 = vrot.slane %v3815, 2
    %v4084 = vsel %vm1121, %v4082, %v4083
    %v4085 = vrot.slane %v3816, 2
    %v4086 = vsel %vm1121, %v4083, %v4085
    %v4087 = vrot.slane %v3817, 2
    %v4088 = vsel %vm1121, %v4085, %v4087
    %v4089 = vrot.slane %v3818, 2
    %v4090 = vrot.slane %v3819, 2
    %v4091 = vsel %vm1121, %v4089, %v4090
    %v4092 = vrot.slane %v3820, 2
    %v4093 = vsel %vm1121, %v4090, %v4092
    %v4094 = vrot.slane %v3821, 2
    %v4095 = vsel %vm1121, %v4092, %v4094
    %v4096 = vrot.slane %v3822, 2
    %v4097 = vrot.slane %v3823, 2
    %v4098 = vsel %vm1121, %v4096, %v4097
    %v4099 = vrot.slane %v3824, 2
    %v4100 = vsel %vm1121, %v4097, %v4099
    %v4101 = vrot.slane %v3825, 2
    %v4102 = vsel %vm1121, %v4099, %v4101
    %v4103 = vrot.slane %v3826, 2
    %v4104 = vrot.slane %v3827, 2
    %v4105 = vsel %vm1121, %v4103, %v4104
    %v4106 = vrot.slane %v3828, 2
    %v4107 = vsel %vm1121, %v4104, %v4106
    %v4108 = vrot.slane %v3829, 2
    %v4109 = vsel %vm1121, %v4106, %v4108
    %v4110 = vrot.slane %v3830, 2
    %v4111 = vrot.slane %v3831, 2
    %v4112 = vsel %vm1121, %v4110, %v4111
    %v4113 = vrot.slane %v3832, 2
    %v4114 = vsel %vm1121, %v4111, %v4113
    %v4115 = vrot.slane %v3833, 2
    %v4116 = vsel %vm1121, %v4113, %v4115
    %v4117 = vrot.slane %v3834, 2
    %v4118 = vrot.slane %v3835, 2
    %v4119 = vsel %vm1121, %v4117, %v4118
    %v4120 = vrot.slane %v3836, 2
    %v4121 = vsel %vm1121, %v4118, %v4120
    %v4122 = vrot.slane %v3837, 2
    %v4123 = vsel %vm1121, %v4120, %v4122
    %v4228 = vadd.f32 %v3628, %v3944
    %v4229 = vadd.f32 %v3629, %v3946
    %v4230 = vadd.f32 %v3630, %v3948
    %v4231 = vadd.f32 %v3631, %v3947
    %v4232 = vadd.f32 %v3632, %v3951
    %v4233 = vadd.f32 %v3633, %v3953
    %v4234 = vadd.f32 %v3634, %v3955
    %v4235 = vadd.f32 %v3635, %v3954
    %v4236 = vadd.f32 %v3636, %v3958
    %v4237 = vadd.f32 %v3637, %v3960
    %v4238 = vadd.f32 %v3638, %v3962
    %v4239 = vadd.f32 %v3639, %v3961
    %v4240 = vadd.f32 %v3640, %v3965
    %v4241 = vadd.f32 %v3641, %v3967
    %v4242 = vadd.f32 %v3642, %v3969
    %v4243 = vadd.f32 %v3643, %v3968
    %v4244 = vadd.f32 %v3644, %v3972
    %v4245 = vadd.f32 %v3645, %v3974
    %v4246 = vadd.f32 %v3646, %v3976
    %v4247 = vadd.f32 %v3647, %v3975
    %v4248 = vadd.f32 %v3648, %v3979
    %v4249 = vadd.f32 %v3649, %v3981
    %v4250 = vadd.f32 %v3650, %v3983
    %v4251 = vadd.f32 %v3651, %v3982
    %v4252 = vadd.f32 %v3652, %v3986
    %v4253 = vadd.f32 %v3653, %v3988
    %v4254 = vadd.f32 %v3654, %v3990
    %v4255 = vadd.f32 %v3655, %v3989
    %v4256 = vadd.f32 %v3656, %v3993
    %v4257 = vadd.f32 %v3657, %v3995
    %v4258 = vadd.f32 %v3658, %v3997
    %v4259 = vadd.f32 %v3659, %v3996
    %v4260 = vadd.f32 %v3660, %v4000
    %v4261 = vadd.f32 %v3661, %v4002
    %v4262 = vadd.f32 %v3662, %v4004
    %v4263 = vadd.f32 %v3663, %v4003
    %v4264 = vadd.f32 %v3664, %v4007
    %v4265 = vadd.f32 %v3665, %v4009
    %v4266 = vadd.f32 %v3666, %v4011
    %v4267 = vadd.f32 %v3667, %v4010
    %v4268 = vadd.f32 %v3668, %v4014
    %v4269 = vadd.f32 %v3669, %v4016
    %v4270 = vadd.f32 %v3670, %v4018
    %v4271 = vadd.f32 %v3671, %v4017
    %v4272 = vadd.f32 %v3672, %v4021
    %v4273 = vadd.f32 %v3673, %v4023
    %v4274 = vadd.f32 %v3674, %v4025
    %v4275 = vadd.f32 %v3675, %v4024
    %v4276 = vadd.f32 %v3676, %v4028
    %v4277 = vadd.f32 %v3677, %v4030
    %v4278 = vadd.f32 %v3678, %v4032
    %v4279 = vadd.f32 %v3679, %v4031
    %v4280 = vadd.f32 %v3680, %v4035
    %v4281 = vadd.f32 %v3681, %v4037
    %v4282 = vadd.f32 %v3682, %v4039
    %v4283 = vadd.f32 %v3683, %v4038
    %v4284 = vadd.f32 %v3684, %v4042
    %v4285 = vadd.f32 %v3685, %v4044
    %v4286 = vadd.f32 %v3686, %v4046
    %v4287 = vadd.f32 %v3687, %v4045
    %v4288 = vadd.f32 %v3688, %v4049
    %v4289 = vadd.f32 %v3689, %v4051
    %v4290 = vadd.f32 %v3690, %v4053
    %v4291 = vadd.f32 %v3691, %v4052
    %v4292 = vadd.f32 %v3692, %v4056
    %v4293 = vadd.f32 %v3693, %v4058
    %v4294 = vadd.f32 %v3694, %v4060
    %v4295 = vadd.f32 %v3695, %v4059
    %v4296 = vadd.f32 %v3696, %v4063
    %v4297 = vadd.f32 %v3697, %v4065
    %v4298 = vadd.f32 %v3698, %v4067
    %v4299 = vadd.f32 %v3699, %v4066
    %v4300 = vadd.f32 %v3700, %v4070
    %v4301 = vadd.f32 %v3701, %v4072
    %v4302 = vadd.f32 %v3702, %v4074
    %v4303 = vadd.f32 %v3703, %v4073
    %v4304 = vadd.f32 %v3704, %v4077
    %v4305 = vadd.f32 %v3705, %v4079
    %v4306 = vadd.f32 %v3706, %v4081
    %v4307 = vadd.f32 %v3707, %v4080
    %v4308 = vadd.f32 %v3708, %v4084
    %v4309 = vadd.f32 %v3709, %v4086
    %v4310 = vadd.f32 %v3710, %v4088
    %v4311 = vadd.f32 %v3711, %v4087
    %v4312 = vadd.f32 %v3712, %v4091
    %v4313 = vadd.f32 %v3713, %v4093
    %v4314 = vadd.f32 %v3714, %v4095
    %v4315 = vadd.f32 %v3715, %v4094
    %v4316 = vadd.f32 %v3716, %v4098
    %v4317 = vadd.f32 %v3717, %v4100
    %v4318 = vadd.f32 %v3718, %v4102
    %v4319 = vadd.f32 %v3719, %v4101
    %v4320 = vadd.f32 %v3720, %v4105
    %v4321 = vadd.f32 %v3721, %v4107
    %v4322 = vadd.f32 %v3722, %v4109
    %v4323 = vadd.f32 %v3723, %v4108
    %v4324 = vadd.f32 %v3724, %v4112
    %v4325 = vadd.f32 %v3725, %v4114
    %v4326 = vadd.f32 %v3726, %v4116
    %v4327 = vadd.f32 %v3727, %v4115
    %v4328 = vadd.f32 %v3728, %v4119
    %v4329 = vadd.f32 %v3729, %v4121
    %v4330 = vadd.f32 %v3730, %v4123
    %v4331 = vadd.f32 %v3731, %v4122
    %s4332 = sld [smem:[#allocation3]]
    %v4333 = vstv %s4332
    %v4334 = vadd.f32 %v4228, %v4333
    %v4335 = vadd.f32 %v4229, %v4333
    %v4336 = vadd.f32 %v4230, %v4333
    %v4337 = vadd.f32 %v4231, %v4333
    %v4338 = vadd.f32 %v4232, %v4333
    %v4339 = vadd.f32 %v4233, %v4333
    %v4340 = vadd.f32 %v4234, %v4333
    %v4341 = vadd.f32 %v4235, %v4333
    %v4342 = vadd.f32 %v4236, %v4333
    %v4343 = vadd.f32 %v4237, %v4333
    %v4344 = vadd.f32 %v4238, %v4333
    %v4345 = vadd.f32 %v4239, %v4333
    %v4346 = vadd.f32 %v4240, %v4333
    %v4347 = vadd.f32 %v4241, %v4333
    %v4348 = vadd.f32 %v4242, %v4333
    %v4349 = vadd.f32 %v4243, %v4333
    %v4350 = vadd.f32 %v4244, %v4333
    %v4351 = vadd.f32 %v4245, %v4333
    %v4352 = vadd.f32 %v4246, %v4333
    %v4353 = vadd.f32 %v4247, %v4333
    %v4354 = vadd.f32 %v4248, %v4333
    %v4355 = vadd.f32 %v4249, %v4333
    %v4356 = vadd.f32 %v4250, %v4333
    %v4357 = vadd.f32 %v4251, %v4333
    %v4358 = vadd.f32 %v4252, %v4333
    %v4359 = vadd.f32 %v4253, %v4333
    %v4360 = vadd.f32 %v4254, %v4333
    %v4361 = vadd.f32 %v4255, %v4333
    %v4362 = vadd.f32 %v4256, %v4333
    %v4363 = vadd.f32 %v4257, %v4333
    %v4364 = vadd.f32 %v4258, %v4333
    %v4365 = vadd.f32 %v4259, %v4333
    %v4366 = vadd.f32 %v4260, %v4333
    %v4367 = vadd.f32 %v4261, %v4333
    %v4368 = vadd.f32 %v4262, %v4333
    %v4369 = vadd.f32 %v4263, %v4333
    %v4370 = vadd.f32 %v4264, %v4333
    %v4371 = vadd.f32 %v4265, %v4333
    %v4372 = vadd.f32 %v4266, %v4333
    %v4373 = vadd.f32 %v4267, %v4333
    %v4374 = vadd.f32 %v4268, %v4333
    %v4375 = vadd.f32 %v4269, %v4333
    %v4376 = vadd.f32 %v4270, %v4333
    %v4377 = vadd.f32 %v4271, %v4333
    %v4378 = vadd.f32 %v4272, %v4333
    %v4379 = vadd.f32 %v4273, %v4333
    %v4380 = vadd.f32 %v4274, %v4333
    %v4381 = vadd.f32 %v4275, %v4333
    %v4382 = vadd.f32 %v4276, %v4333
    %v4383 = vadd.f32 %v4277, %v4333
    %v4384 = vadd.f32 %v4278, %v4333
    %v4385 = vadd.f32 %v4279, %v4333
    %v4386 = vadd.f32 %v4280, %v4333
    %v4387 = vadd.f32 %v4281, %v4333
    %v4388 = vadd.f32 %v4282, %v4333
    %v4389 = vadd.f32 %v4283, %v4333
    %v4390 = vadd.f32 %v4284, %v4333
    %v4391 = vadd.f32 %v4285, %v4333
    %v4392 = vadd.f32 %v4286, %v4333
    %v4393 = vadd.f32 %v4287, %v4333
    %v4394 = vadd.f32 %v4288, %v4333
    %v4395 = vadd.f32 %v4289, %v4333
    %v4396 = vadd.f32 %v4290, %v4333
    %v4397 = vadd.f32 %v4291, %v4333
    %v4398 = vadd.f32 %v4292, %v4333
    %v4399 = vadd.f32 %v4293, %v4333
    %v4400 = vadd.f32 %v4294, %v4333
    %v4401 = vadd.f32 %v4295, %v4333
    %v4402 = vadd.f32 %v4296, %v4333
    %v4403 = vadd.f32 %v4297, %v4333
    %v4404 = vadd.f32 %v4298, %v4333
    %v4405 = vadd.f32 %v4299, %v4333
    %v4406 = vadd.f32 %v4300, %v4333
    %v4407 = vadd.f32 %v4301, %v4333
    %v4408 = vadd.f32 %v4302, %v4333
    %v4409 = vadd.f32 %v4303, %v4333
    %v4410 = vadd.f32 %v4304, %v4333
    %v4411 = vadd.f32 %v4305, %v4333
    %v4412 = vadd.f32 %v4306, %v4333
    %v4413 = vadd.f32 %v4307, %v4333
    %v4414 = vadd.f32 %v4308, %v4333
    %v4415 = vadd.f32 %v4309, %v4333
    %v4416 = vadd.f32 %v4310, %v4333
    %v4417 = vadd.f32 %v4311, %v4333
    %v4418 = vadd.f32 %v4312, %v4333
    %v4419 = vadd.f32 %v4313, %v4333
    %v4420 = vadd.f32 %v4314, %v4333
    %v4421 = vadd.f32 %v4315, %v4333
    %v4422 = vadd.f32 %v4316, %v4333
    %v4423 = vadd.f32 %v4317, %v4333
    %v4424 = vadd.f32 %v4318, %v4333
    %v4425 = vadd.f32 %v4319, %v4333
    %v4426 = vadd.f32 %v4320, %v4333
    %v4427 = vadd.f32 %v4321, %v4333
    %v4428 = vadd.f32 %v4322, %v4333
    %v4429 = vadd.f32 %v4323, %v4333
    %v4430 = vadd.f32 %v4324, %v4333
    %v4431 = vadd.f32 %v4325, %v4333
    %v4432 = vadd.f32 %v4326, %v4333
    %v4433 = vadd.f32 %v4327, %v4333
    %v4434 = vadd.f32 %v4328, %v4333
    %v4435 = vadd.f32 %v4329, %v4333
    %v4436 = vadd.f32 %v4330, %v4333
    %v4437 = vadd.f32 %v4331, %v4333
    %v4438 = vmax.f32 %v4334, 0.0
    %v4439 = vmax.f32 %v4335, 0.0
    %v4440 = vmax.f32 %v4336, 0.0
    %v4441 = vmax.f32 %v4337, 0.0
    %v4442 = vmax.f32 %v4338, 0.0
    %v4443 = vmax.f32 %v4339, 0.0
    %v4444 = vmax.f32 %v4340, 0.0
    %v4445 = vmax.f32 %v4341, 0.0
    %v4446 = vmax.f32 %v4342, 0.0
    %v4447 = vmax.f32 %v4343, 0.0
    %v4448 = vmax.f32 %v4344, 0.0
    %v4449 = vmax.f32 %v4345, 0.0
    %v4450 = vmax.f32 %v4346, 0.0
    %v4451 = vmax.f32 %v4347, 0.0
    %v4452 = vmax.f32 %v4348, 0.0
    %v4453 = vmax.f32 %v4349, 0.0
    %v4454 = vmax.f32 %v4350, 0.0
    %v4455 = vmax.f32 %v4351, 0.0
    %v4456 = vmax.f32 %v4352, 0.0
    %v4457 = vmax.f32 %v4353, 0.0
    %v4458 = vmax.f32 %v4354, 0.0
    %v4459 = vmax.f32 %v4355, 0.0
    %v4460 = vmax.f32 %v4356, 0.0
    %v4461 = vmax.f32 %v4357, 0.0
    %v4462 = vmax.f32 %v4358, 0.0
    %v4463 = vmax.f32 %v4359, 0.0
    %v4464 = vmax.f32 %v4360, 0.0
    %v4465 = vmax.f32 %v4361, 0.0
    %v4466 = vmax.f32 %v4362, 0.0
    %v4467 = vmax.f32 %v4363, 0.0
    %v4468 = vmax.f32 %v4364, 0.0
    %v4469 = vmax.f32 %v4365, 0.0
    %v4470 = vmax.f32 %v4366, 0.0
    %v4471 = vmax.f32 %v4367, 0.0
    %v4472 = vmax.f32 %v4368, 0.0
    %v4473 = vmax.f32 %v4369, 0.0
    %v4474 = vmax.f32 %v4370, 0.0
    %v4475 = vmax.f32 %v4371, 0.0
    %v4476 = vmax.f32 %v4372, 0.0
    %v4477 = vmax.f32 %v4373, 0.0
    %v4478 = vmax.f32 %v4374, 0.0
    %v4479 = vmax.f32 %v4375, 0.0
    %v4480 = vmax.f32 %v4376, 0.0
    %v4481 = vmax.f32 %v4377, 0.0
    %v4482 = vmax.f32 %v4378, 0.0
    %v4483 = vmax.f32 %v4379, 0.0
    %v4484 = vmax.f32 %v4380, 0.0
    %v4485 = vmax.f32 %v4381, 0.0
    %v4486 = vmax.f32 %v4382, 0.0
    %v4487 = vmax.f32 %v4383, 0.0
    %v4488 = vmax.f32 %v4384, 0.0
    %v4489 = vmax.f32 %v4385, 0.0
    %v4490 = vmax.f32 %v4386, 0.0
    %v4491 = vmax.f32 %v4387, 0.0
    %v4492 = vmax.f32 %v4388, 0.0
    %v4493 = vmax.f32 %v4389, 0.0
    %v4494 = vmax.f32 %v4390, 0.0
    %v4495 = vmax.f32 %v4391, 0.0
    %v4496 = vmax.f32 %v4392, 0.0
    %v4497 = vmax.f32 %v4393, 0.0
    %v4498 = vmax.f32 %v4394, 0.0
    %v4499 = vmax.f32 %v4395, 0.0
    %v4500 = vmax.f32 %v4396, 0.0
    %v4501 = vmax.f32 %v4397, 0.0
    %v4502 = vmax.f32 %v4398, 0.0
    %v4503 = vmax.f32 %v4399, 0.0
    %v4504 = vmax.f32 %v4400, 0.0
    %v4505 = vmax.f32 %v4401, 0.0
    %v4506 = vmax.f32 %v4402, 0.0
    %v4507 = vmax.f32 %v4403, 0.0
    %v4508 = vmax.f32 %v4404, 0.0
    %v4509 = vmax.f32 %v4405, 0.0
    %v4510 = vmax.f32 %v4406, 0.0
    %v4511 = vmax.f32 %v4407, 0.0
    %v4512 = vmax.f32 %v4408, 0.0
    %v4513 = vmax.f32 %v4409, 0.0
    %v4514 = vmax.f32 %v4410, 0.0
    %v4515 = vmax.f32 %v4411, 0.0
    %v4516 = vmax.f32 %v4412, 0.0
    %v4517 = vmax.f32 %v4413, 0.0
    %v4518 = vmax.f32 %v4414, 0.0
    %v4519 = vmax.f32 %v4415, 0.0
    %v4520 = vmax.f32 %v4416, 0.0
    %v4521 = vmax.f32 %v4417, 0.0
    %v4522 = vmax.f32 %v4418, 0.0
    %v4523 = vmax.f32 %v4419, 0.0
    %v4524 = vmax.f32 %v4420, 0.0
    %v4525 = vmax.f32 %v4421, 0.0
    %v4526 = vmax.f32 %v4422, 0.0
    %v4527 = vmax.f32 %v4423, 0.0
    %v4528 = vmax.f32 %v4424, 0.0
    %v4529 = vmax.f32 %v4425, 0.0
    %v4530 = vmax.f32 %v4426, 0.0
    %v4531 = vmax.f32 %v4427, 0.0
    %v4532 = vmax.f32 %v4428, 0.0
    %v4533 = vmax.f32 %v4429, 0.0
    %v4534 = vmax.f32 %v4430, 0.0
    %v4535 = vmax.f32 %v4431, 0.0
    %v4536 = vmax.f32 %v4432, 0.0
    %v4537 = vmax.f32 %v4433, 0.0
    %v4538 = vmax.f32 %v4434, 0.0
    %v4539 = vmax.f32 %v4435, 0.0
    %v4540 = vmax.f32 %v4436, 0.0
    %v4541 = vmax.f32 %v4437, 0.0
    %s4542 = sld [smem:[#allocation10]]
    %v4543 = vstv %s4542
    %v4544 = vmul.f32 %v4438, %v4543
    %v4545 = vmul.f32 %v4439, %v4543
    %v4546 = vmul.f32 %v4440, %v4543
    %v4547 = vmul.f32 %v4442, %v4543
    %v4548 = vmul.f32 %v4443, %v4543
    %v4549 = vmul.f32 %v4444, %v4543
    %v4550 = vmul.f32 %v4446, %v4543
    %v4551 = vmul.f32 %v4447, %v4543
    %v4552 = vmul.f32 %v4448, %v4543
    %v4553 = vmul.f32 %v4450, %v4543
    %v4554 = vmul.f32 %v4451, %v4543
    %v4555 = vmul.f32 %v4452, %v4543
    %v4556 = vmul.f32 %v4454, %v4543
    %v4557 = vmul.f32 %v4455, %v4543
    %v4558 = vmul.f32 %v4456, %v4543
    %v4559 = vmul.f32 %v4458, %v4543
    %v4560 = vmul.f32 %v4459, %v4543
    %v4561 = vmul.f32 %v4460, %v4543
    %v4562 = vmul.f32 %v4462, %v4543
    %v4563 = vmul.f32 %v4463, %v4543
    %v4564 = vmul.f32 %v4464, %v4543
    %v4565 = vmul.f32 %v4466, %v4543
    %v4566 = vmul.f32 %v4467, %v4543
    %v4567 = vmul.f32 %v4468, %v4543
    %v4568 = vmul.f32 %v4470, %v4543
    %v4569 = vmul.f32 %v4471, %v4543
    %v4570 = vmul.f32 %v4472, %v4543
    %v4571 = vmul.f32 %v4474, %v4543
    %v4572 = vmul.f32 %v4475, %v4543
    %v4573 = vmul.f32 %v4476, %v4543
    %v4574 = vmul.f32 %v4478, %v4543
    %v4575 = vmul.f32 %v4479, %v4543
    %v4576 = vmul.f32 %v4480, %v4543
    %v4577 = vmul.f32 %v4482, %v4543
    %v4578 = vmul.f32 %v4483, %v4543
    %v4579 = vmul.f32 %v4484, %v4543
    %v4580 = vmul.f32 %v4486, %v4543
    %v4581 = vmul.f32 %v4487, %v4543
    %v4582 = vmul.f32 %v4488, %v4543
    %v4583 = vmul.f32 %v4490, %v4543
    %v4584 = vmul.f32 %v4491, %v4543
    %v4585 = vmul.f32 %v4492, %v4543
    %v4586 = vmul.f32 %v4494, %v4543
    %v4587 = vmul.f32 %v4495, %v4543
    %v4588 = vmul.f32 %v4496, %v4543
    %v4589 = vmul.f32 %v4498, %v4543
    %v4590 = vmul.f32 %v4499, %v4543
    %v4591 = vmul.f32 %v4500, %v4543
    %v4592 = vmul.f32 %v4502, %v4543
    %v4593 = vmul.f32 %v4503, %v4543
    %v4594 = vmul.f32 %v4504, %v4543
    %v4595 = vmul.f32 %v4506, %v4543
    %v4596 = vmul.f32 %v4507, %v4543
    %v4597 = vmul.f32 %v4508, %v4543
    %v4598 = vmul.f32 %v4510, %v4543
    %v4599 = vmul.f32 %v4511, %v4543
    %v4600 = vmul.f32 %v4512, %v4543
    %v4601 = vmul.f32 %v4514, %v4543
    %v4602 = vmul.f32 %v4515, %v4543
    %v4603 = vmul.f32 %v4516, %v4543
    %v4604 = vmul.f32 %v4518, %v4543
    %v4605 = vmul.f32 %v4519, %v4543
    %v4606 = vmul.f32 %v4520, %v4543
    %v4607 = vmul.f32 %v4522, %v4543
    %v4608 = vmul.f32 %v4523, %v4543
    %v4609 = vmul.f32 %v4524, %v4543
    %v4610 = vmul.f32 %v4526, %v4543
    %v4611 = vmul.f32 %v4527, %v4543
    %v4612 = vmul.f32 %v4528, %v4543
    %v4613 = vmul.f32 %v4530, %v4543
    %v4614 = vmul.f32 %v4531, %v4543
    %v4615 = vmul.f32 %v4532, %v4543
    %s4616 = sld [smem:[#allocation10 + $0x1]]
    %v4617 = vstv %s4616
    %v4618 = vmul.f32 %v4438, %v4617
    %v4619 = vmul.f32 %v4439, %v4617
    %v4620 = vmul.f32 %v4440, %v4617
    %v4621 = vmul.f32 %v4441, %v4617
    %v4622 = vmul.f32 %v4442, %v4617
    %v4623 = vmul.f32 %v4443, %v4617
    %v4624 = vmul.f32 %v4444, %v4617
    %v4625 = vmul.f32 %v4445, %v4617
    %v4626 = vmul.f32 %v4446, %v4617
    %v4627 = vmul.f32 %v4447, %v4617
    %v4628 = vmul.f32 %v4448, %v4617
    %v4629 = vmul.f32 %v4449, %v4617
    %v4630 = vmul.f32 %v4450, %v4617
    %v4631 = vmul.f32 %v4451, %v4617
    %v4632 = vmul.f32 %v4452, %v4617
    %v4633 = vmul.f32 %v4453, %v4617
    %v4634 = vmul.f32 %v4454, %v4617
    %v4635 = vmul.f32 %v4455, %v4617
    %v4636 = vmul.f32 %v4456, %v4617
    %v4637 = vmul.f32 %v4457, %v4617
    %v4638 = vmul.f32 %v4458, %v4617
    %v4639 = vmul.f32 %v4459, %v4617
    %v4640 = vmul.f32 %v4460, %v4617
    %v4641 = vmul.f32 %v4461, %v4617
    %v4642 = vmul.f32 %v4462, %v4617
    %v4643 = vmul.f32 %v4463, %v4617
    %v4644 = vmul.f32 %v4464, %v4617
    %v4645 = vmul.f32 %v4465, %v4617
    %v4646 = vmul.f32 %v4466, %v4617
    %v4647 = vmul.f32 %v4467, %v4617
    %v4648 = vmul.f32 %v4468, %v4617
    %v4649 = vmul.f32 %v4469, %v4617
    %v4650 = vmul.f32 %v4470, %v4617
    %v4651 = vmul.f32 %v4471, %v4617
    %v4652 = vmul.f32 %v4472, %v4617
    %v4653 = vmul.f32 %v4473, %v4617
    %v4654 = vmul.f32 %v4474, %v4617
    %v4655 = vmul.f32 %v4475, %v4617
    %v4656 = vmul.f32 %v4476, %v4617
    %v4657 = vmul.f32 %v4477, %v4617
    %v4658 = vmul.f32 %v4478, %v4617
    %v4659 = vmul.f32 %v4479, %v4617
    %v4660 = vmul.f32 %v4480, %v4617
    %v4661 = vmul.f32 %v4481, %v4617
    %v4662 = vmul.f32 %v4482, %v4617
    %v4663 = vmul.f32 %v4483, %v4617
    %v4664 = vmul.f32 %v4484, %v4617
    %v4665 = vmul.f32 %v4485, %v4617
    %v4666 = vmul.f32 %v4486, %v4617
    %v4667 = vmul.f32 %v4487, %v4617
    %v4668 = vmul.f32 %v4488, %v4617
    %v4669 = vmul.f32 %v4489, %v4617
    %v4670 = vmul.f32 %v4490, %v4617
    %v4671 = vmul.f32 %v4491, %v4617
    %v4672 = vmul.f32 %v4492, %v4617
    %v4673 = vmul.f32 %v4493, %v4617
    %v4674 = vmul.f32 %v4494, %v4617
    %v4675 = vmul.f32 %v4495, %v4617
    %v4676 = vmul.f32 %v4496, %v4617
    %v4677 = vmul.f32 %v4497, %v4617
    %v4678 = vmul.f32 %v4498, %v4617
    %v4679 = vmul.f32 %v4499, %v4617
    %v4680 = vmul.f32 %v4500, %v4617
    %v4681 = vmul.f32 %v4501, %v4617
    %v4682 = vmul.f32 %v4502, %v4617
    %v4683 = vmul.f32 %v4503, %v4617
    %v4684 = vmul.f32 %v4504, %v4617
    %v4685 = vmul.f32 %v4505, %v4617
    %v4686 = vmul.f32 %v4506, %v4617
    %v4687 = vmul.f32 %v4507, %v4617
    %v4688 = vmul.f32 %v4508, %v4617
    %v4689 = vmul.f32 %v4509, %v4617
    %v4690 = vmul.f32 %v4510, %v4617
    %v4691 = vmul.f32 %v4511, %v4617
    %v4692 = vmul.f32 %v4512, %v4617
    %v4693 = vmul.f32 %v4513, %v4617
    %v4694 = vmul.f32 %v4514, %v4617
    %v4695 = vmul.f32 %v4515, %v4617
    %v4696 = vmul.f32 %v4516, %v4617
    %v4697 = vmul.f32 %v4517, %v4617
    %v4698 = vmul.f32 %v4518, %v4617
    %v4699 = vmul.f32 %v4519, %v4617
    %v4700 = vmul.f32 %v4520, %v4617
    %v4701 = vmul.f32 %v4521, %v4617
    %v4702 = vmul.f32 %v4522, %v4617
    %v4703 = vmul.f32 %v4523, %v4617
    %v4704 = vmul.f32 %v4524, %v4617
    %v4705 = vmul.f32 %v4525, %v4617
    %v4706 = vmul.f32 %v4526, %v4617
    %v4707 = vmul.f32 %v4527, %v4617
    %v4708 = vmul.f32 %v4528, %v4617
    %v4709 = vmul.f32 %v4529, %v4617
    %v4710 = vmul.f32 %v4530, %v4617
    %v4711 = vmul.f32 %v4531, %v4617
    %v4712 = vmul.f32 %v4532, %v4617
    %v4713 = vmul.f32 %v4533, %v4617
    %v4810 = vrot.slane %v4618, 1
    %v4811 = vrot.slane %v4619, 1
    %v4812 = vsel %vm520, %v4810, %v4811
    %v4813 = vrot.slane %v4620, 1
    %v4814 = vsel %vm520, %v4811, %v4813
    %v4815 = vrot.slane %v4621, 1
    %v4816 = vsel %vm520, %v4813, %v4815
    %v4817 = vrot.slane %v4622, 1
    %v4818 = vrot.slane %v4623, 1
    %v4819 = vsel %vm520, %v4817, %v4818
    %v4820 = vrot.slane %v4624, 1
    %v4821 = vsel %vm520, %v4818, %v4820
    %v4822 = vrot.slane %v4625, 1
    %v4823 = vsel %vm520, %v4820, %v4822
    %v4824 = vrot.slane %v4626, 1
    %v4825 = vrot.slane %v4627, 1
    %v4826 = vsel %vm520, %v4824, %v4825
    %v4827 = vrot.slane %v4628, 1
    %v4828 = vsel %vm520, %v4825, %v4827
    %v4829 = vrot.slane %v4629, 1
    %v4830 = vsel %vm520, %v4827, %v4829
    %v4831 = vrot.slane %v4630, 1
    %v4832 = vrot.slane %v4631, 1
    %v4833 = vsel %vm520, %v4831, %v4832
    %v4834 = vrot.slane %v4632, 1
    %v4835 = vsel %vm520, %v4832, %v4834
    %v4836 = vrot.slane %v4633, 1
    %v4837 = vsel %vm520, %v4834, %v4836
    %v4838 = vrot.slane %v4634, 1
    %v4839 = vrot.slane %v4635, 1
    %v4840 = vsel %vm520, %v4838, %v4839
    %v4841 = vrot.slane %v4636, 1
    %v4842 = vsel %vm520, %v4839, %v4841
    %v4843 = vrot.slane %v4637, 1
    %v4844 = vsel %vm520, %v4841, %v4843
    %v4845 = vrot.slane %v4638, 1
    %v4846 = vrot.slane %v4639, 1
    %v4847 = vsel %vm520, %v4845, %v4846
    %v4848 = vrot.slane %v4640, 1
    %v4849 = vsel %vm520, %v4846, %v4848
    %v4850 = vrot.slane %v4641, 1
    %v4851 = vsel %vm520, %v4848, %v4850
    %v4852 = vrot.slane %v4642, 1
    %v4853 = vrot.slane %v4643, 1
    %v4854 = vsel %vm520, %v4852, %v4853
    %v4855 = vrot.slane %v4644, 1
    %v4856 = vsel %vm520, %v4853, %v4855
    %v4857 = vrot.slane %v4645, 1
    %v4858 = vsel %vm520, %v4855, %v4857
    %v4859 = vrot.slane %v4646, 1
    %v4860 = vrot.slane %v4647, 1
    %v4861 = vsel %vm520, %v4859, %v4860
    %v4862 = vrot.slane %v4648, 1
    %v4863 = vsel %vm520, %v4860, %v4862
    %v4864 = vrot.slane %v4649, 1
    %v4865 = vsel %vm520, %v4862, %v4864
    %v4866 = vrot.slane %v4650, 1
    %v4867 = vrot.slane %v4651, 1
    %v4868 = vsel %vm520, %v4866, %v4867
    %v4869 = vrot.slane %v4652, 1
    %v4870 = vsel %vm520, %v4867, %v4869
    %v4871 = vrot.slane %v4653, 1
    %v4872 = vsel %vm520, %v4869, %v4871
    %v4873 = vrot.slane %v4654, 1
    %v4874 = vrot.slane %v4655, 1
    %v4875 = vsel %vm520, %v4873, %v4874
    %v4876 = vrot.slane %v4656, 1
    %v4877 = vsel %vm520, %v4874, %v4876
    %v4878 = vrot.slane %v4657, 1
    %v4879 = vsel %vm520, %v4876, %v4878
    %v4880 = vrot.slane %v4658, 1
    %v4881 = vrot.slane %v4659, 1
    %v4882 = vsel %vm520, %v4880, %v4881
    %v4883 = vrot.slane %v4660, 1
    %v4884 = vsel %vm520, %v4881, %v4883
    %v4885 = vrot.slane %v4661, 1
    %v4886 = vsel %vm520, %v4883, %v4885
    %v4887 = vrot.slane %v4662, 1
    %v4888 = vrot.slane %v4663, 1
    %v4889 = vsel %vm520, %v4887, %v4888
    %v4890 = vrot.slane %v4664, 1
    %v4891 = vsel %vm520, %v4888, %v4890
    %v4892 = vrot.slane %v4665, 1
    %v4893 = vsel %vm520, %v4890, %v4892
    %v4894 = vrot.slane %v4666, 1
    %v4895 = vrot.slane %v4667, 1
    %v4896 = vsel %vm520, %v4894, %v4895
    %v4897 = vrot.slane %v4668, 1
    %v4898 = vsel %vm520, %v4895, %v4897
    %v4899 = vrot.slane %v4669, 1
    %v4900 = vsel %vm520, %v4897, %v4899
    %v4901 = vrot.slane %v4670, 1
    %v4902 = vrot.slane %v4671, 1
    %v4903 = vsel %vm520, %v4901, %v4902
    %v4904 = vrot.slane %v4672, 1
    %v4905 = vsel %vm520, %v4902, %v4904
    %v4906 = vrot.slane %v4673, 1
    %v4907 = vsel %vm520, %v4904, %v4906
    %v4908 = vrot.slane %v4674, 1
    %v4909 = vrot.slane %v4675, 1
    %v4910 = vsel %vm520, %v4908, %v4909
    %v4911 = vrot.slane %v4676, 1
    %v4912 = vsel %vm520, %v4909, %v4911
    %v4913 = vrot.slane %v4677, 1
    %v4914 = vsel %vm520, %v4911, %v4913
    %v4915 = vrot.slane %v4678, 1
    %v4916 = vrot.slane %v4679, 1
    %v4917 = vsel %vm520, %v4915, %v4916
    %v4918 = vrot.slane %v4680, 1
    %v4919 = vsel %vm520, %v4916, %v4918
    %v4920 = vrot.slane %v4681, 1
    %v4921 = vsel %vm520, %v4918, %v4920
    %v4922 = vrot.slane %v4682, 1
    %v4923 = vrot.slane %v4683, 1
    %v4924 = vsel %vm520, %v4922, %v4923
    %v4925 = vrot.slane %v4684, 1
    %v4926 = vsel %vm520, %v4923, %v4925
    %v4927 = vrot.slane %v4685, 1
    %v4928 = vsel %vm520, %v4925, %v4927
    %v4929 = vrot.slane %v4686, 1
    %v4930 = vrot.slane %v4687, 1
    %v4931 = vsel %vm520, %v4929, %v4930
    %v4932 = vrot.slane %v4688, 1
    %v4933 = vsel %vm520, %v4930, %v4932
    %v4934 = vrot.slane %v4689, 1
    %v4935 = vsel %vm520, %v4932, %v4934
    %v4936 = vrot.slane %v4690, 1
    %v4937 = vrot.slane %v4691, 1
    %v4938 = vsel %vm520, %v4936, %v4937
    %v4939 = vrot.slane %v4692, 1
    %v4940 = vsel %vm520, %v4937, %v4939
    %v4941 = vrot.slane %v4693, 1
    %v4942 = vsel %vm520, %v4939, %v4941
    %v4943 = vrot.slane %v4694, 1
    %v4944 = vrot.slane %v4695, 1
    %v4945 = vsel %vm520, %v4943, %v4944
    %v4946 = vrot.slane %v4696, 1
    %v4947 = vsel %vm520, %v4944, %v4946
    %v4948 = vrot.slane %v4697, 1
    %v4949 = vsel %vm520, %v4946, %v4948
    %v4950 = vrot.slane %v4698, 1
    %v4951 = vrot.slane %v4699, 1
    %v4952 = vsel %vm520, %v4950, %v4951
    %v4953 = vrot.slane %v4700, 1
    %v4954 = vsel %vm520, %v4951, %v4953
    %v4955 = vrot.slane %v4701, 1
    %v4956 = vsel %vm520, %v4953, %v4955
    %v4957 = vrot.slane %v4702, 1
    %v4958 = vrot.slane %v4703, 1
    %v4959 = vsel %vm520, %v4957, %v4958
    %v4960 = vrot.slane %v4704, 1
    %v4961 = vsel %vm520, %v4958, %v4960
    %v4962 = vrot.slane %v4705, 1
    %v4963 = vsel %vm520, %v4960, %v4962
    %v4964 = vrot.slane %v4706, 1
    %v4965 = vrot.slane %v4707, 1
    %v4966 = vsel %vm520, %v4964, %v4965
    %v4967 = vrot.slane %v4708, 1
    %v4968 = vsel %vm520, %v4965, %v4967
    %v4969 = vrot.slane %v4709, 1
    %v4970 = vsel %vm520, %v4967, %v4969
    %v4971 = vrot.slane %v4710, 1
    %v4972 = vrot.slane %v4711, 1
    %v4973 = vsel %vm520, %v4971, %v4972
    %v4974 = vrot.slane %v4712, 1
    %v4975 = vsel %vm520, %v4972, %v4974
    %v4976 = vrot.slane %v4713, 1
    %v4977 = vsel %vm520, %v4974, %v4976
    %v5050 = vadd.f32 %v4544, %v4812
    %v5051 = vadd.f32 %v4545, %v4814
    %v5052 = vadd.f32 %v4546, %v4816
    %v5053 = vadd.f32 %v4547, %v4819
    %v5054 = vadd.f32 %v4548, %v4821
    %v5055 = vadd.f32 %v4549, %v4823
    %v5056 = vadd.f32 %v4550, %v4826
    %v5057 = vadd.f32 %v4551, %v4828
    %v5058 = vadd.f32 %v4552, %v4830
    %v5059 = vadd.f32 %v4553, %v4833
    %v5060 = vadd.f32 %v4554, %v4835
    %v5061 = vadd.f32 %v4555, %v4837
    %v5062 = vadd.f32 %v4556, %v4840
    %v5063 = vadd.f32 %v4557, %v4842
    %v5064 = vadd.f32 %v4558, %v4844
    %v5065 = vadd.f32 %v4559, %v4847
    %v5066 = vadd.f32 %v4560, %v4849
    %v5067 = vadd.f32 %v4561, %v4851
    %v5068 = vadd.f32 %v4562, %v4854
    %v5069 = vadd.f32 %v4563, %v4856
    %v5070 = vadd.f32 %v4564, %v4858
    %v5071 = vadd.f32 %v4565, %v4861
    %v5072 = vadd.f32 %v4566, %v4863
    %v5073 = vadd.f32 %v4567, %v4865
    %v5074 = vadd.f32 %v4568, %v4868
    %v5075 = vadd.f32 %v4569, %v4870
    %v5076 = vadd.f32 %v4570, %v4872
    %v5077 = vadd.f32 %v4571, %v4875
    %v5078 = vadd.f32 %v4572, %v4877
    %v5079 = vadd.f32 %v4573, %v4879
    %v5080 = vadd.f32 %v4574, %v4882
    %v5081 = vadd.f32 %v4575, %v4884
    %v5082 = vadd.f32 %v4576, %v4886
    %v5083 = vadd.f32 %v4577, %v4889
    %v5084 = vadd.f32 %v4578, %v4891
    %v5085 = vadd.f32 %v4579, %v4893
    %v5086 = vadd.f32 %v4580, %v4896
    %v5087 = vadd.f32 %v4581, %v4898
    %v5088 = vadd.f32 %v4582, %v4900
    %v5089 = vadd.f32 %v4583, %v4903
    %v5090 = vadd.f32 %v4584, %v4905
    %v5091 = vadd.f32 %v4585, %v4907
    %v5092 = vadd.f32 %v4586, %v4910
    %v5093 = vadd.f32 %v4587, %v4912
    %v5094 = vadd.f32 %v4588, %v4914
    %v5095 = vadd.f32 %v4589, %v4917
    %v5096 = vadd.f32 %v4590, %v4919
    %v5097 = vadd.f32 %v4591, %v4921
    %v5098 = vadd.f32 %v4592, %v4924
    %v5099 = vadd.f32 %v4593, %v4926
    %v5100 = vadd.f32 %v4594, %v4928
    %v5101 = vadd.f32 %v4595, %v4931
    %v5102 = vadd.f32 %v4596, %v4933
    %v5103 = vadd.f32 %v4597, %v4935
    %v5104 = vadd.f32 %v4598, %v4938
    %v5105 = vadd.f32 %v4599, %v4940
    %v5106 = vadd.f32 %v4600, %v4942
    %v5107 = vadd.f32 %v4601, %v4945
    %v5108 = vadd.f32 %v4602, %v4947
    %v5109 = vadd.f32 %v4603, %v4949
    %v5110 = vadd.f32 %v4604, %v4952
    %v5111 = vadd.f32 %v4605, %v4954
    %v5112 = vadd.f32 %v4606, %v4956
    %v5113 = vadd.f32 %v4607, %v4959
    %v5114 = vadd.f32 %v4608, %v4961
    %v5115 = vadd.f32 %v4609, %v4963
    %v5116 = vadd.f32 %v4610, %v4966
    %v5117 = vadd.f32 %v4611, %v4968
    %v5118 = vadd.f32 %v4612, %v4970
    %v5119 = vadd.f32 %v4613, %v4973
    %v5120 = vadd.f32 %v4614, %v4975
    %v5121 = vadd.f32 %v4615, %v4977
    %s5122 = sld [smem:[#allocation10 + $0x2]]
    %v5123 = vstv %s5122
    %v5124 = vmul.f32 %v4438, %v5123
    %v5125 = vmul.f32 %v4439, %v5123
    %v5126 = vmul.f32 %v4440, %v5123
    %v5127 = vmul.f32 %v4441, %v5123
    %v5128 = vmul.f32 %v4442, %v5123
    %v5129 = vmul.f32 %v4443, %v5123
    %v5130 = vmul.f32 %v4444, %v5123
    %v5131 = vmul.f32 %v4445, %v5123
    %v5132 = vmul.f32 %v4446, %v5123
    %v5133 = vmul.f32 %v4447, %v5123
    %v5134 = vmul.f32 %v4448, %v5123
    %v5135 = vmul.f32 %v4449, %v5123
    %v5136 = vmul.f32 %v4450, %v5123
    %v5137 = vmul.f32 %v4451, %v5123
    %v5138 = vmul.f32 %v4452, %v5123
    %v5139 = vmul.f32 %v4453, %v5123
    %v5140 = vmul.f32 %v4454, %v5123
    %v5141 = vmul.f32 %v4455, %v5123
    %v5142 = vmul.f32 %v4456, %v5123
    %v5143 = vmul.f32 %v4457, %v5123
    %v5144 = vmul.f32 %v4458, %v5123
    %v5145 = vmul.f32 %v4459, %v5123
    %v5146 = vmul.f32 %v4460, %v5123
    %v5147 = vmul.f32 %v4461, %v5123
    %v5148 = vmul.f32 %v4462, %v5123
    %v5149 = vmul.f32 %v4463, %v5123
    %v5150 = vmul.f32 %v4464, %v5123
    %v5151 = vmul.f32 %v4465, %v5123
    %v5152 = vmul.f32 %v4466, %v5123
    %v5153 = vmul.f32 %v4467, %v5123
    %v5154 = vmul.f32 %v4468, %v5123
    %v5155 = vmul.f32 %v4469, %v5123
    %v5156 = vmul.f32 %v4470, %v5123
    %v5157 = vmul.f32 %v4471, %v5123
    %v5158 = vmul.f32 %v4472, %v5123
    %v5159 = vmul.f32 %v4473, %v5123
    %v5160 = vmul.f32 %v4474, %v5123
    %v5161 = vmul.f32 %v4475, %v5123
    %v5162 = vmul.f32 %v4476, %v5123
    %v5163 = vmul.f32 %v4477, %v5123
    %v5164 = vmul.f32 %v4478, %v5123
    %v5165 = vmul.f32 %v4479, %v5123
    %v5166 = vmul.f32 %v4480, %v5123
    %v5167 = vmul.f32 %v4481, %v5123
    %v5168 = vmul.f32 %v4482, %v5123
    %v5169 = vmul.f32 %v4483, %v5123
    %v5170 = vmul.f32 %v4484, %v5123
    %v5171 = vmul.f32 %v4485, %v5123
    %v5172 = vmul.f32 %v4486, %v5123
    %v5173 = vmul.f32 %v4487, %v5123
    %v5174 = vmul.f32 %v4488, %v5123
    %v5175 = vmul.f32 %v4489, %v5123
    %v5176 = vmul.f32 %v4490, %v5123
    %v5177 = vmul.f32 %v4491, %v5123
    %v5178 = vmul.f32 %v4492, %v5123
    %v5179 = vmul.f32 %v4493, %v5123
    %v5180 = vmul.f32 %v4494, %v5123
    %v5181 = vmul.f32 %v4495, %v5123
    %v5182 = vmul.f32 %v4496, %v5123
    %v5183 = vmul.f32 %v4497, %v5123
    %v5184 = vmul.f32 %v4498, %v5123
    %v5185 = vmul.f32 %v4499, %v5123
    %v5186 = vmul.f32 %v4500, %v5123
    %v5187 = vmul.f32 %v4501, %v5123
    %v5188 = vmul.f32 %v4502, %v5123
    %v5189 = vmul.f32 %v4503, %v5123
    %v5190 = vmul.f32 %v4504, %v5123
    %v5191 = vmul.f32 %v4505, %v5123
    %v5192 = vmul.f32 %v4506, %v5123
    %v5193 = vmul.f32 %v4507, %v5123
    %v5194 = vmul.f32 %v4508, %v5123
    %v5195 = vmul.f32 %v4509, %v5123
    %v5196 = vmul.f32 %v4510, %v5123
    %v5197 = vmul.f32 %v4511, %v5123
    %v5198 = vmul.f32 %v4512, %v5123
    %v5199 = vmul.f32 %v4513, %v5123
    %v5200 = vmul.f32 %v4514, %v5123
    %v5201 = vmul.f32 %v4515, %v5123
    %v5202 = vmul.f32 %v4516, %v5123
    %v5203 = vmul.f32 %v4517, %v5123
    %v5204 = vmul.f32 %v4518, %v5123
    %v5205 = vmul.f32 %v4519, %v5123
    %v5206 = vmul.f32 %v4520, %v5123
    %v5207 = vmul.f32 %v4521, %v5123
    %v5208 = vmul.f32 %v4522, %v5123
    %v5209 = vmul.f32 %v4523, %v5123
    %v5210 = vmul.f32 %v4524, %v5123
    %v5211 = vmul.f32 %v4525, %v5123
    %v5212 = vmul.f32 %v4526, %v5123
    %v5213 = vmul.f32 %v4527, %v5123
    %v5214 = vmul.f32 %v4528, %v5123
    %v5215 = vmul.f32 %v4529, %v5123
    %v5216 = vmul.f32 %v4530, %v5123
    %v5217 = vmul.f32 %v4531, %v5123
    %v5218 = vmul.f32 %v4532, %v5123
    %v5219 = vmul.f32 %v4533, %v5123
    %v5316 = vrot.slane %v5124, 2
    %v5317 = vrot.slane %v5125, 2
    %v5318 = vsel %vm1121, %v5316, %v5317
    %v5319 = vrot.slane %v5126, 2
    %v5320 = vsel %vm1121, %v5317, %v5319
    %v5321 = vrot.slane %v5127, 2
    %v5322 = vsel %vm1121, %v5319, %v5321
    %v5323 = vrot.slane %v5128, 2
    %v5324 = vrot.slane %v5129, 2
    %v5325 = vsel %vm1121, %v5323, %v5324
    %v5326 = vrot.slane %v5130, 2
    %v5327 = vsel %vm1121, %v5324, %v5326
    %v5328 = vrot.slane %v5131, 2
    %v5329 = vsel %vm1121, %v5326, %v5328
    %v5330 = vrot.slane %v5132, 2
    %v5331 = vrot.slane %v5133, 2
    %v5332 = vsel %vm1121, %v5330, %v5331
    %v5333 = vrot.slane %v5134, 2
    %v5334 = vsel %vm1121, %v5331, %v5333
    %v5335 = vrot.slane %v5135, 2
    %v5336 = vsel %vm1121, %v5333, %v5335
    %v5337 = vrot.slane %v5136, 2
    %v5338 = vrot.slane %v5137, 2
    %v5339 = vsel %vm1121, %v5337, %v5338
    %v5340 = vrot.slane %v5138, 2
    %v5341 = vsel %vm1121, %v5338, %v5340
    %v5342 = vrot.slane %v5139, 2
    %v5343 = vsel %vm1121, %v5340, %v5342
    %v5344 = vrot.slane %v5140, 2
    %v5345 = vrot.slane %v5141, 2
    %v5346 = vsel %vm1121, %v5344, %v5345
    %v5347 = vrot.slane %v5142, 2
    %v5348 = vsel %vm1121, %v5345, %v5347
    %v5349 = vrot.slane %v5143, 2
    %v5350 = vsel %vm1121, %v5347, %v5349
    %v5351 = vrot.slane %v5144, 2
    %v5352 = vrot.slane %v5145, 2
    %v5353 = vsel %vm1121, %v5351, %v5352
    %v5354 = vrot.slane %v5146, 2
    %v5355 = vsel %vm1121, %v5352, %v5354
    %v5356 = vrot.slane %v5147, 2
    %v5357 = vsel %vm1121, %v5354, %v5356
    %v5358 = vrot.slane %v5148, 2
    %v5359 = vrot.slane %v5149, 2
    %v5360 = vsel %vm1121, %v5358, %v5359
    %v5361 = vrot.slane %v5150, 2
    %v5362 = vsel %vm1121, %v5359, %v5361
    %v5363 = vrot.slane %v5151, 2
    %v5364 = vsel %vm1121, %v5361, %v5363
    %v5365 = vrot.slane %v5152, 2
    %v5366 = vrot.slane %v5153, 2
    %v5367 = vsel %vm1121, %v5365, %v5366
    %v5368 = vrot.slane %v5154, 2
    %v5369 = vsel %vm1121, %v5366, %v5368
    %v5370 = vrot.slane %v5155, 2
    %v5371 = vsel %vm1121, %v5368, %v5370
    %v5372 = vrot.slane %v5156, 2
    %v5373 = vrot.slane %v5157, 2
    %v5374 = vsel %vm1121, %v5372, %v5373
    %v5375 = vrot.slane %v5158, 2
    %v5376 = vsel %vm1121, %v5373, %v5375
    %v5377 = vrot.slane %v5159, 2
    %v5378 = vsel %vm1121, %v5375, %v5377
    %v5379 = vrot.slane %v5160, 2
    %v5380 = vrot.slane %v5161, 2
    %v5381 = vsel %vm1121, %v5379, %v5380
    %v5382 = vrot.slane %v5162, 2
    %v5383 = vsel %vm1121, %v5380, %v5382
    %v5384 = vrot.slane %v5163, 2
    %v5385 = vsel %vm1121, %v5382, %v5384
    %v5386 = vrot.slane %v5164, 2
    %v5387 = vrot.slane %v5165, 2
    %v5388 = vsel %vm1121, %v5386, %v5387
    %v5389 = vrot.slane %v5166, 2
    %v5390 = vsel %vm1121, %v5387, %v5389
    %v5391 = vrot.slane %v5167, 2
    %v5392 = vsel %vm1121, %v5389, %v5391
    %v5393 = vrot.slane %v5168, 2
    %v5394 = vrot.slane %v5169, 2
    %v5395 = vsel %vm1121, %v5393, %v5394
    %v5396 = vrot.slane %v5170, 2
    %v5397 = vsel %vm1121, %v5394, %v5396
    %v5398 = vrot.slane %v5171, 2
    %v5399 = vsel %vm1121, %v5396, %v5398
    %v5400 = vrot.slane %v5172, 2
    %v5401 = vrot.slane %v5173, 2
    %v5402 = vsel %vm1121, %v5400, %v5401
    %v5403 = vrot.slane %v5174, 2
    %v5404 = vsel %vm1121, %v5401, %v5403
    %v5405 = vrot.slane %v5175, 2
    %v5406 = vsel %vm1121, %v5403, %v5405
    %v5407 = vrot.slane %v5176, 2
    %v5408 = vrot.slane %v5177, 2
    %v5409 = vsel %vm1121, %v5407, %v5408
    %v5410 = vrot.slane %v5178, 2
    %v5411 = vsel %vm1121, %v5408, %v5410
    %v5412 = vrot.slane %v5179, 2
    %v5413 = vsel %vm1121, %v5410, %v5412
    %v5414 = vrot.slane %v5180, 2
    %v5415 = vrot.slane %v5181, 2
    %v5416 = vsel %vm1121, %v5414, %v5415
    %v5417 = vrot.slane %v5182, 2
    %v5418 = vsel %vm1121, %v5415, %v5417
    %v5419 = vrot.slane %v5183, 2
    %v5420 = vsel %vm1121, %v5417, %v5419
    %v5421 = vrot.slane %v5184, 2
    %v5422 = vrot.slane %v5185, 2
    %v5423 = vsel %vm1121, %v5421, %v5422
    %v5424 = vrot.slane %v5186, 2
    %v5425 = vsel %vm1121, %v5422, %v5424
    %v5426 = vrot.slane %v5187, 2
    %v5427 = vsel %vm1121, %v5424, %v5426
    %v5428 = vrot.slane %v5188, 2
    %v5429 = vrot.slane %v5189, 2
    %v5430 = vsel %vm1121, %v5428, %v5429
    %v5431 = vrot.slane %v5190, 2
    %v5432 = vsel %vm1121, %v5429, %v5431
    %v5433 = vrot.slane %v5191, 2
    %v5434 = vsel %vm1121, %v5431, %v5433
    %v5435 = vrot.slane %v5192, 2
    %v5436 = vrot.slane %v5193, 2
    %v5437 = vsel %vm1121, %v5435, %v5436
    %v5438 = vrot.slane %v5194, 2
    %v5439 = vsel %vm1121, %v5436, %v5438
    %v5440 = vrot.slane %v5195, 2
    %v5441 = vsel %vm1121, %v5438, %v5440
    %v5442 = vrot.slane %v5196, 2
    %v5443 = vrot.slane %v5197, 2
    %v5444 = vsel %vm1121, %v5442, %v5443
    %v5445 = vrot.slane %v5198, 2
    %v5446 = vsel %vm1121, %v5443, %v5445
    %v5447 = vrot.slane %v5199, 2
    %v5448 = vsel %vm1121, %v5445, %v5447
    %v5449 = vrot.slane %v5200, 2
    %v5450 = vrot.slane %v5201, 2
    %v5451 = vsel %vm1121, %v5449, %v5450
    %v5452 = vrot.slane %v5202, 2
    %v5453 = vsel %vm1121, %v5450, %v5452
    %v5454 = vrot.slane %v5203, 2
    %v5455 = vsel %vm1121, %v5452, %v5454
    %v5456 = vrot.slane %v5204, 2
    %v5457 = vrot.slane %v5205, 2
    %v5458 = vsel %vm1121, %v5456, %v5457
    %v5459 = vrot.slane %v5206, 2
    %v5460 = vsel %vm1121, %v5457, %v5459
    %v5461 = vrot.slane %v5207, 2
    %v5462 = vsel %vm1121, %v5459, %v5461
    %v5463 = vrot.slane %v5208, 2
    %v5464 = vrot.slane %v5209, 2
    %v5465 = vsel %vm1121, %v5463, %v5464
    %v5466 = vrot.slane %v5210, 2
    %v5467 = vsel %vm1121, %v5464, %v5466
    %v5468 = vrot.slane %v5211, 2
    %v5469 = vsel %vm1121, %v5466, %v5468
    %v5470 = vrot.slane %v5212, 2
    %v5471 = vrot.slane %v5213, 2
    %v5472 = vsel %vm1121, %v5470, %v5471
    %v5473 = vrot.slane %v5214, 2
    %v5474 = vsel %vm1121, %v5471, %v5473
    %v5475 = vrot.slane %v5215, 2
    %v5476 = vsel %vm1121, %v5473, %v5475
    %v5477 = vrot.slane %v5216, 2
    %v5478 = vrot.slane %v5217, 2
    %v5479 = vsel %vm1121, %v5477, %v5478
    %v5480 = vrot.slane %v5218, 2
    %v5481 = vsel %vm1121, %v5478, %v5480
    %v5482 = vrot.slane %v5219, 2
    %v5483 = vsel %vm1121, %v5480, %v5482
    %v5556 = vadd.f32 %v5050, %v5318
    %v5557 = vadd.f32 %v5051, %v5320
    %v5558 = vadd.f32 %v5052, %v5322
    %v5559 = vadd.f32 %v5053, %v5325
    %v5560 = vadd.f32 %v5054, %v5327
    %v5561 = vadd.f32 %v5055, %v5329
    %v5562 = vadd.f32 %v5056, %v5332
    %v5563 = vadd.f32 %v5057, %v5334
    %v5564 = vadd.f32 %v5058, %v5336
    %v5565 = vadd.f32 %v5059, %v5339
    %v5566 = vadd.f32 %v5060, %v5341
    %v5567 = vadd.f32 %v5061, %v5343
    %v5568 = vadd.f32 %v5062, %v5346
    %v5569 = vadd.f32 %v5063, %v5348
    %v5570 = vadd.f32 %v5064, %v5350
    %v5571 = vadd.f32 %v5065, %v5353
    %v5572 = vadd.f32 %v5066, %v5355
    %v5573 = vadd.f32 %v5067, %v5357
    %v5574 = vadd.f32 %v5068, %v5360
    %v5575 = vadd.f32 %v5069, %v5362
    %v5576 = vadd.f32 %v5070, %v5364
    %v5577 = vadd.f32 %v5071, %v5367
    %v5578 = vadd.f32 %v5072, %v5369
    %v5579 = vadd.f32 %v5073, %v5371
    %v5580 = vadd.f32 %v5074, %v5374
    %v5581 = vadd.f32 %v5075, %v5376
    %v5582 = vadd.f32 %v5076, %v5378
    %v5583 = vadd.f32 %v5077, %v5381
    %v5584 = vadd.f32 %v5078, %v5383
    %v5585 = vadd.f32 %v5079, %v5385
    %v5586 = vadd.f32 %v5080, %v5388
    %v5587 = vadd.f32 %v5081, %v5390
    %v5588 = vadd.f32 %v5082, %v5392
    %v5589 = vadd.f32 %v5083, %v5395
    %v5590 = vadd.f32 %v5084, %v5397
    %v5591 = vadd.f32 %v5085, %v5399
    %v5592 = vadd.f32 %v5086, %v5402
    %v5593 = vadd.f32 %v5087, %v5404
    %v5594 = vadd.f32 %v5088, %v5406
    %v5595 = vadd.f32 %v5089, %v5409
    %v5596 = vadd.f32 %v5090, %v5411
    %v5597 = vadd.f32 %v5091, %v5413
    %v5598 = vadd.f32 %v5092, %v5416
    %v5599 = vadd.f32 %v5093, %v5418
    %v5600 = vadd.f32 %v5094, %v5420
    %v5601 = vadd.f32 %v5095, %v5423
    %v5602 = vadd.f32 %v5096, %v5425
    %v5603 = vadd.f32 %v5097, %v5427
    %v5604 = vadd.f32 %v5098, %v5430
    %v5605 = vadd.f32 %v5099, %v5432
    %v5606 = vadd.f32 %v5100, %v5434
    %v5607 = vadd.f32 %v5101, %v5437
    %v5608 = vadd.f32 %v5102, %v5439
    %v5609 = vadd.f32 %v5103, %v5441
    %v5610 = vadd.f32 %v5104, %v5444
    %v5611 = vadd.f32 %v5105, %v5446
    %v5612 = vadd.f32 %v5106, %v5448
    %v5613 = vadd.f32 %v5107, %v5451
    %v5614 = vadd.f32 %v5108, %v5453
    %v5615 = vadd.f32 %v5109, %v5455
    %v5616 = vadd.f32 %v5110, %v5458
    %v5617 = vadd.f32 %v5111, %v5460
    %v5618 = vadd.f32 %v5112, %v5462
    %v5619 = vadd.f32 %v5113, %v5465
    %v5620 = vadd.f32 %v5114, %v5467
    %v5621 = vadd.f32 %v5115, %v5469
    %v5622 = vadd.f32 %v5116, %v5472
    %v5623 = vadd.f32 %v5117, %v5474
    %v5624 = vadd.f32 %v5118, %v5476
    %v5625 = vadd.f32 %v5119, %v5479
    %v5626 = vadd.f32 %v5120, %v5481
    %v5627 = vadd.f32 %v5121, %v5483
    %s5628 = sld [smem:[#allocation10 + $0x3]]
    %v5629 = vstv %s5628
    %v5630 = vmul.f32 %v4442, %v5629
    %v5631 = vmul.f32 %v4443, %v5629
    %v5632 = vmul.f32 %v4444, %v5629
    %v5633 = vmul.f32 %v4446, %v5629
    %v5634 = vmul.f32 %v4447, %v5629
    %v5635 = vmul.f32 %v4448, %v5629
    %v5636 = vmul.f32 %v4450, %v5629
    %v5637 = vmul.f32 %v4451, %v5629
    %v5638 = vmul.f32 %v4452, %v5629
    %v5639 = vmul.f32 %v4454, %v5629
    %v5640 = vmul.f32 %v4455, %v5629
    %v5641 = vmul.f32 %v4456, %v5629
    %v5642 = vmul.f32 %v4458, %v5629
    %v5643 = vmul.f32 %v4459, %v5629
    %v5644 = vmul.f32 %v4460, %v5629
    %v5645 = vmul.f32 %v4462, %v5629
    %v5646 = vmul.f32 %v4463, %v5629
    %v5647 = vmul.f32 %v4464, %v5629
    %v5648 = vmul.f32 %v4466, %v5629
    %v5649 = vmul.f32 %v4467, %v5629
    %v5650 = vmul.f32 %v4468, %v5629
    %v5651 = vmul.f32 %v4470, %v5629
    %v5652 = vmul.f32 %v4471, %v5629
    %v5653 = vmul.f32 %v4472, %v5629
    %v5654 = vmul.f32 %v4474, %v5629
    %v5655 = vmul.f32 %v4475, %v5629
    %v5656 = vmul.f32 %v4476, %v5629
    %v5657 = vmul.f32 %v4478, %v5629
    %v5658 = vmul.f32 %v4479, %v5629
    %v5659 = vmul.f32 %v4480, %v5629
    %v5660 = vmul.f32 %v4482, %v5629
    %v5661 = vmul.f32 %v4483, %v5629
    %v5662 = vmul.f32 %v4484, %v5629
    %v5663 = vmul.f32 %v4486, %v5629
    %v5664 = vmul.f32 %v4487, %v5629
    %v5665 = vmul.f32 %v4488, %v5629
    %v5666 = vmul.f32 %v4490, %v5629
    %v5667 = vmul.f32 %v4491, %v5629
    %v5668 = vmul.f32 %v4492, %v5629
    %v5669 = vmul.f32 %v4494, %v5629
    %v5670 = vmul.f32 %v4495, %v5629
    %v5671 = vmul.f32 %v4496, %v5629
    %v5672 = vmul.f32 %v4498, %v5629
    %v5673 = vmul.f32 %v4499, %v5629
    %v5674 = vmul.f32 %v4500, %v5629
    %v5675 = vmul.f32 %v4502, %v5629
    %v5676 = vmul.f32 %v4503, %v5629
    %v5677 = vmul.f32 %v4504, %v5629
    %v5678 = vmul.f32 %v4506, %v5629
    %v5679 = vmul.f32 %v4507, %v5629
    %v5680 = vmul.f32 %v4508, %v5629
    %v5681 = vmul.f32 %v4510, %v5629
    %v5682 = vmul.f32 %v4511, %v5629
    %v5683 = vmul.f32 %v4512, %v5629
    %v5684 = vmul.f32 %v4514, %v5629
    %v5685 = vmul.f32 %v4515, %v5629
    %v5686 = vmul.f32 %v4516, %v5629
    %v5687 = vmul.f32 %v4518, %v5629
    %v5688 = vmul.f32 %v4519, %v5629
    %v5689 = vmul.f32 %v4520, %v5629
    %v5690 = vmul.f32 %v4522, %v5629
    %v5691 = vmul.f32 %v4523, %v5629
    %v5692 = vmul.f32 %v4524, %v5629
    %v5693 = vmul.f32 %v4526, %v5629
    %v5694 = vmul.f32 %v4527, %v5629
    %v5695 = vmul.f32 %v4528, %v5629
    %v5696 = vmul.f32 %v4530, %v5629
    %v5697 = vmul.f32 %v4531, %v5629
    %v5698 = vmul.f32 %v4532, %v5629
    %v5699 = vmul.f32 %v4534, %v5629
    %v5700 = vmul.f32 %v4535, %v5629
    %v5701 = vmul.f32 %v4536, %v5629
    %v5702 = vadd.f32 %v5556, %v5630
    %v5703 = vadd.f32 %v5557, %v5631
    %v5704 = vadd.f32 %v5558, %v5632
    %v5705 = vadd.f32 %v5559, %v5633
    %v5706 = vadd.f32 %v5560, %v5634
    %v5707 = vadd.f32 %v5561, %v5635
    %v5708 = vadd.f32 %v5562, %v5636
    %v5709 = vadd.f32 %v5563, %v5637
    %v5710 = vadd.f32 %v5564, %v5638
    %v5711 = vadd.f32 %v5565, %v5639
    %v5712 = vadd.f32 %v5566, %v5640
    %v5713 = vadd.f32 %v5567, %v5641
    %v5714 = vadd.f32 %v5568, %v5642
    %v5715 = vadd.f32 %v5569, %v5643
    %v5716 = vadd.f32 %v5570, %v5644
    %v5717 = vadd.f32 %v5571, %v5645
    %v5718 = vadd.f32 %v5572, %v5646
    %v5719 = vadd.f32 %v5573, %v5647
    %v5720 = vadd.f32 %v5574, %v5648
    %v5721 = vadd.f32 %v5575, %v5649
    %v5722 = vadd.f32 %v5576, %v5650
    %v5723 = vadd.f32 %v5577, %v5651
    %v5724 = vadd.f32 %v5578, %v5652
    %v5725 = vadd.f32 %v5579, %v5653
    %v5726 = vadd.f32 %v5580, %v5654
    %v5727 = vadd.f32 %v5581, %v5655
    %v5728 = vadd.f32 %v5582, %v5656
    %v5729 = vadd.f32 %v5583, %v5657
    %v5730 = vadd.f32 %v5584, %v5658
    %v5731 = vadd.f32 %v5585, %v5659
    %v5732 = vadd.f32 %v5586, %v5660
    %v5733 = vadd.f32 %v5587, %v5661
    %v5734 = vadd.f32 %v5588, %v5662
    %v5735 = vadd.f32 %v5589, %v5663
    %v5736 = vadd.f32 %v5590, %v5664
    %v5737 = vadd.f32 %v5591, %v5665
    %v5738 = vadd.f32 %v5592, %v5666
    %v5739 = vadd.f32 %v5593, %v5667
    %v5740 = vadd.f32 %v5594, %v5668
    %v5741 = vadd.f32 %v5595, %v5669
    %v5742 = vadd.f32 %v5596, %v5670
    %v5743 = vadd.f32 %v5597, %v5671
    %v5744 = vadd.f32 %v5598, %v5672
    %v5745 = vadd.f32 %v5599, %v5673
    %v5746 = vadd.f32 %v5600, %v5674
    %v5747 = vadd.f32 %v5601, %v5675
    %v5748 = vadd.f32 %v5602, %v5676
    %v5749 = vadd.f32 %v5603, %v5677
    %v5750 = vadd.f32 %v5604, %v5678
    %v5751 = vadd.f32 %v5605, %v5679
    %v5752 = vadd.f32 %v5606, %v5680
    %v5753 = vadd.f32 %v5607, %v5681
    %v5754 = vadd.f32 %v5608, %v5682
    %v5755 = vadd.f32 %v5609, %v5683
    %v5756 = vadd.f32 %v5610, %v5684
    %v5757 = vadd.f32 %v5611, %v5685
    %v5758 = vadd.f32 %v5612, %v5686
    %v5759 = vadd.f32 %v5613, %v5687
    %v5760 = vadd.f32 %v5614, %v5688
    %v5761 = vadd.f32 %v5615, %v5689
    %v5762 = vadd.f32 %v5616, %v5690
    %v5763 = vadd.f32 %v5617, %v5691
    %v5764 = vadd.f32 %v5618, %v5692
    %v5765 = vadd.f32 %v5619, %v5693
    %v5766 = vadd.f32 %v5620, %v5694
    %v5767 = vadd.f32 %v5621, %v5695
    %v5768 = vadd.f32 %v5622, %v5696
    %v5769 = vadd.f32 %v5623, %v5697
    %v5770 = vadd.f32 %v5624, %v5698
    %v5771 = vadd.f32 %v5625, %v5699
    %v5772 = vadd.f32 %v5626, %v5700
    %v5773 = vadd.f32 %v5627, %v5701
    %s5774 = sld [smem:[#allocation10 + $0x4]]
    %v5775 = vstv %s5774
    %v5776 = vmul.f32 %v4442, %v5775
    %v5777 = vmul.f32 %v4443, %v5775
    %v5778 = vmul.f32 %v4444, %v5775
    %v5779 = vmul.f32 %v4445, %v5775
    %v5780 = vmul.f32 %v4446, %v5775
    %v5781 = vmul.f32 %v4447, %v5775
    %v5782 = vmul.f32 %v4448, %v5775
    %v5783 = vmul.f32 %v4449, %v5775
    %v5784 = vmul.f32 %v4450, %v5775
    %v5785 = vmul.f32 %v4451, %v5775
    %v5786 = vmul.f32 %v4452, %v5775
    %v5787 = vmul.f32 %v4453, %v5775
    %v5788 = vmul.f32 %v4454, %v5775
    %v5789 = vmul.f32 %v4455, %v5775
    %v5790 = vmul.f32 %v4456, %v5775
    %v5791 = vmul.f32 %v4457, %v5775
    %v5792 = vmul.f32 %v4458, %v5775
    %v5793 = vmul.f32 %v4459, %v5775
    %v5794 = vmul.f32 %v4460, %v5775
    %v5795 = vmul.f32 %v4461, %v5775
    %v5796 = vmul.f32 %v4462, %v5775
    %v5797 = vmul.f32 %v4463, %v5775
    %v5798 = vmul.f32 %v4464, %v5775
    %v5799 = vmul.f32 %v4465, %v5775
    %v5800 = vmul.f32 %v4466, %v5775
    %v5801 = vmul.f32 %v4467, %v5775
    %v5802 = vmul.f32 %v4468, %v5775
    %v5803 = vmul.f32 %v4469, %v5775
    %v5804 = vmul.f32 %v4470, %v5775
    %v5805 = vmul.f32 %v4471, %v5775
    %v5806 = vmul.f32 %v4472, %v5775
    %v5807 = vmul.f32 %v4473, %v5775
    %v5808 = vmul.f32 %v4474, %v5775
    %v5809 = vmul.f32 %v4475, %v5775
    %v5810 = vmul.f32 %v4476, %v5775
    %v5811 = vmul.f32 %v4477, %v5775
    %v5812 = vmul.f32 %v4478, %v5775
    %v5813 = vmul.f32 %v4479, %v5775
    %v5814 = vmul.f32 %v4480, %v5775
    %v5815 = vmul.f32 %v4481, %v5775
    %v5816 = vmul.f32 %v4482, %v5775
    %v5817 = vmul.f32 %v4483, %v5775
    %v5818 = vmul.f32 %v4484, %v5775
    %v5819 = vmul.f32 %v4485, %v5775
    %v5820 = vmul.f32 %v4486, %v5775
    %v5821 = vmul.f32 %v4487, %v5775
    %v5822 = vmul.f32 %v4488, %v5775
    %v5823 = vmul.f32 %v4489, %v5775
    %v5824 = vmul.f32 %v4490, %v5775
    %v5825 = vmul.f32 %v4491, %v5775
    %v5826 = vmul.f32 %v4492, %v5775
    %v5827 = vmul.f32 %v4493, %v5775
    %v5828 = vmul.f32 %v4494, %v5775
    %v5829 = vmul.f32 %v4495, %v5775
    %v5830 = vmul.f32 %v4496, %v5775
    %v5831 = vmul.f32 %v4497, %v5775
    %v5832 = vmul.f32 %v4498, %v5775
    %v5833 = vmul.f32 %v4499, %v5775
    %v5834 = vmul.f32 %v4500, %v5775
    %v5835 = vmul.f32 %v4501, %v5775
    %v5836 = vmul.f32 %v4502, %v5775
    %v5837 = vmul.f32 %v4503, %v5775
    %v5838 = vmul.f32 %v4504, %v5775
    %v5839 = vmul.f32 %v4505, %v5775
    %v5840 = vmul.f32 %v4506, %v5775
    %v5841 = vmul.f32 %v4507, %v5775
    %v5842 = vmul.f32 %v4508, %v5775
    %v5843 = vmul.f32 %v4509, %v5775
    %v5844 = vmul.f32 %v4510, %v5775
    %v5845 = vmul.f32 %v4511, %v5775
    %v5846 = vmul.f32 %v4512, %v5775
    %v5847 = vmul.f32 %v4513, %v5775
    %v5848 = vmul.f32 %v4514, %v5775
    %v5849 = vmul.f32 %v4515, %v5775
    %v5850 = vmul.f32 %v4516, %v5775
    %v5851 = vmul.f32 %v4517, %v5775
    %v5852 = vmul.f32 %v4518, %v5775
    %v5853 = vmul.f32 %v4519, %v5775
    %v5854 = vmul.f32 %v4520, %v5775
    %v5855 = vmul.f32 %v4521, %v5775
    %v5856 = vmul.f32 %v4522, %v5775
    %v5857 = vmul.f32 %v4523, %v5775
    %v5858 = vmul.f32 %v4524, %v5775
    %v5859 = vmul.f32 %v4525, %v5775
    %v5860 = vmul.f32 %v4526, %v5775
    %v5861 = vmul.f32 %v4527, %v5775
    %v5862 = vmul.f32 %v4528, %v5775
    %v5863 = vmul.f32 %v4529, %v5775
    %v5864 = vmul.f32 %v4530, %v5775
    %v5865 = vmul.f32 %v4531, %v5775
    %v5866 = vmul.f32 %v4532, %v5775
    %v5867 = vmul.f32 %v4533, %v5775
    %v5868 = vmul.f32 %v4534, %v5775
    %v5869 = vmul.f32 %v4535, %v5775
    %v5870 = vmul.f32 %v4536, %v5775
    %v5871 = vmul.f32 %v4537, %v5775
    %v5968 = vrot.slane %v5776, 1
    %v5969 = vrot.slane %v5777, 1
    %v5970 = vsel %vm520, %v5968, %v5969
    %v5971 = vrot.slane %v5778, 1
    %v5972 = vsel %vm520, %v5969, %v5971
    %v5973 = vrot.slane %v5779, 1
    %v5974 = vsel %vm520, %v5971, %v5973
    %v5975 = vrot.slane %v5780, 1
    %v5976 = vrot.slane %v5781, 1
    %v5977 = vsel %vm520, %v5975, %v5976
    %v5978 = vrot.slane %v5782, 1
    %v5979 = vsel %vm520, %v5976, %v5978
    %v5980 = vrot.slane %v5783, 1
    %v5981 = vsel %vm520, %v5978, %v5980
    %v5982 = vrot.slane %v5784, 1
    %v5983 = vrot.slane %v5785, 1
    %v5984 = vsel %vm520, %v5982, %v5983
    %v5985 = vrot.slane %v5786, 1
    %v5986 = vsel %vm520, %v5983, %v5985
    %v5987 = vrot.slane %v5787, 1
    %v5988 = vsel %vm520, %v5985, %v5987
    %v5989 = vrot.slane %v5788, 1
    %v5990 = vrot.slane %v5789, 1
    %v5991 = vsel %vm520, %v5989, %v5990
    %v5992 = vrot.slane %v5790, 1
    %v5993 = vsel %vm520, %v5990, %v5992
    %v5994 = vrot.slane %v5791, 1
    %v5995 = vsel %vm520, %v5992, %v5994
    %v5996 = vrot.slane %v5792, 1
    %v5997 = vrot.slane %v5793, 1
    %v5998 = vsel %vm520, %v5996, %v5997
    %v5999 = vrot.slane %v5794, 1
    %v6000 = vsel %vm520, %v5997, %v5999
    %v6001 = vrot.slane %v5795, 1
    %v6002 = vsel %vm520, %v5999, %v6001
    %v6003 = vrot.slane %v5796, 1
    %v6004 = vrot.slane %v5797, 1
    %v6005 = vsel %vm520, %v6003, %v6004
    %v6006 = vrot.slane %v5798, 1
    %v6007 = vsel %vm520, %v6004, %v6006
    %v6008 = vrot.slane %v5799, 1
    %v6009 = vsel %vm520, %v6006, %v6008
    %v6010 = vrot.slane %v5800, 1
    %v6011 = vrot.slane %v5801, 1
    %v6012 = vsel %vm520, %v6010, %v6011
    %v6013 = vrot.slane %v5802, 1
    %v6014 = vsel %vm520, %v6011, %v6013
    %v6015 = vrot.slane %v5803, 1
    %v6016 = vsel %vm520, %v6013, %v6015
    %v6017 = vrot.slane %v5804, 1
    %v6018 = vrot.slane %v5805, 1
    %v6019 = vsel %vm520, %v6017, %v6018
    %v6020 = vrot.slane %v5806, 1
    %v6021 = vsel %vm520, %v6018, %v6020
    %v6022 = vrot.slane %v5807, 1
    %v6023 = vsel %vm520, %v6020, %v6022
    %v6024 = vrot.slane %v5808, 1
    %v6025 = vrot.slane %v5809, 1
    %v6026 = vsel %vm520, %v6024, %v6025
    %v6027 = vrot.slane %v5810, 1
    %v6028 = vsel %vm520, %v6025, %v6027
    %v6029 = vrot.slane %v5811, 1
    %v6030 = vsel %vm520, %v6027, %v6029
    %v6031 = vrot.slane %v5812, 1
    %v6032 = vrot.slane %v5813, 1
    %v6033 = vsel %vm520, %v6031, %v6032
    %v6034 = vrot.slane %v5814, 1
    %v6035 = vsel %vm520, %v6032, %v6034
    %v6036 = vrot.slane %v5815, 1
    %v6037 = vsel %vm520, %v6034, %v6036
    %v6038 = vrot.slane %v5816, 1
    %v6039 = vrot.slane %v5817, 1
    %v6040 = vsel %vm520, %v6038, %v6039
    %v6041 = vrot.slane %v5818, 1
    %v6042 = vsel %vm520, %v6039, %v6041
    %v6043 = vrot.slane %v5819, 1
    %v6044 = vsel %vm520, %v6041, %v6043
    %v6045 = vrot.slane %v5820, 1
    %v6046 = vrot.slane %v5821, 1
    %v6047 = vsel %vm520, %v6045, %v6046
    %v6048 = vrot.slane %v5822, 1
    %v6049 = vsel %vm520, %v6046, %v6048
    %v6050 = vrot.slane %v5823, 1
    %v6051 = vsel %vm520, %v6048, %v6050
    %v6052 = vrot.slane %v5824, 1
    %v6053 = vrot.slane %v5825, 1
    %v6054 = vsel %vm520, %v6052, %v6053
    %v6055 = vrot.slane %v5826, 1
    %v6056 = vsel %vm520, %v6053, %v6055
    %v6057 = vrot.slane %v5827, 1
    %v6058 = vsel %vm520, %v6055, %v6057
    %v6059 = vrot.slane %v5828, 1
    %v6060 = vrot.slane %v5829, 1
    %v6061 = vsel %vm520, %v6059, %v6060
    %v6062 = vrot.slane %v5830, 1
    %v6063 = vsel %vm520, %v6060, %v6062
    %v6064 = vrot.slane %v5831, 1
    %v6065 = vsel %vm520, %v6062, %v6064
    %v6066 = vrot.slane %v5832, 1
    %v6067 = vrot.slane %v5833, 1
    %v6068 = vsel %vm520, %v6066, %v6067
    %v6069 = vrot.slane %v5834, 1
    %v6070 = vsel %vm520, %v6067, %v6069
    %v6071 = vrot.slane %v5835, 1
    %v6072 = vsel %vm520, %v6069, %v6071
    %v6073 = vrot.slane %v5836, 1
    %v6074 = vrot.slane %v5837, 1
    %v6075 = vsel %vm520, %v6073, %v6074
    %v6076 = vrot.slane %v5838, 1
    %v6077 = vsel %vm520, %v6074, %v6076
    %v6078 = vrot.slane %v5839, 1
    %v6079 = vsel %vm520, %v6076, %v6078
    %v6080 = vrot.slane %v5840, 1
    %v6081 = vrot.slane %v5841, 1
    %v6082 = vsel %vm520, %v6080, %v6081
    %v6083 = vrot.slane %v5842, 1
    %v6084 = vsel %vm520, %v6081, %v6083
    %v6085 = vrot.slane %v5843, 1
    %v6086 = vsel %vm520, %v6083, %v6085
    %v6087 = vrot.slane %v5844, 1
    %v6088 = vrot.slane %v5845, 1
    %v6089 = vsel %vm520, %v6087, %v6088
    %v6090 = vrot.slane %v5846, 1
    %v6091 = vsel %vm520, %v6088, %v6090
    %v6092 = vrot.slane %v5847, 1
    %v6093 = vsel %vm520, %v6090, %v6092
    %v6094 = vrot.slane %v5848, 1
    %v6095 = vrot.slane %v5849, 1
    %v6096 = vsel %vm520, %v6094, %v6095
    %v6097 = vrot.slane %v5850, 1
    %v6098 = vsel %vm520, %v6095, %v6097
    %v6099 = vrot.slane %v5851, 1
    %v6100 = vsel %vm520, %v6097, %v6099
    %v6101 = vrot.slane %v5852, 1
    %v6102 = vrot.slane %v5853, 1
    %v6103 = vsel %vm520, %v6101, %v6102
    %v6104 = vrot.slane %v5854, 1
    %v6105 = vsel %vm520, %v6102, %v6104
    %v6106 = vrot.slane %v5855, 1
    %v6107 = vsel %vm520, %v6104, %v6106
    %v6108 = vrot.slane %v5856, 1
    %v6109 = vrot.slane %v5857, 1
    %v6110 = vsel %vm520, %v6108, %v6109
    %v6111 = vrot.slane %v5858, 1
    %v6112 = vsel %vm520, %v6109, %v6111
    %v6113 = vrot.slane %v5859, 1
    %v6114 = vsel %vm520, %v6111, %v6113
    %v6115 = vrot.slane %v5860, 1
    %v6116 = vrot.slane %v5861, 1
    %v6117 = vsel %vm520, %v6115, %v6116
    %v6118 = vrot.slane %v5862, 1
    %v6119 = vsel %vm520, %v6116, %v6118
    %v6120 = vrot.slane %v5863, 1
    %v6121 = vsel %vm520, %v6118, %v6120
    %v6122 = vrot.slane %v5864, 1
    %v6123 = vrot.slane %v5865, 1
    %v6124 = vsel %vm520, %v6122, %v6123
    %v6125 = vrot.slane %v5866, 1
    %v6126 = vsel %vm520, %v6123, %v6125
    %v6127 = vrot.slane %v5867, 1
    %v6128 = vsel %vm520, %v6125, %v6127
    %v6129 = vrot.slane %v5868, 1
    %v6130 = vrot.slane %v5869, 1
    %v6131 = vsel %vm520, %v6129, %v6130
    %v6132 = vrot.slane %v5870, 1
    %v6133 = vsel %vm520, %v6130, %v6132
    %v6134 = vrot.slane %v5871, 1
    %v6135 = vsel %vm520, %v6132, %v6134
    %v6208 = vadd.f32 %v5702, %v5970
    %v6209 = vadd.f32 %v5703, %v5972
    %v6210 = vadd.f32 %v5704, %v5974
    %v6211 = vadd.f32 %v5705, %v5977
    %v6212 = vadd.f32 %v5706, %v5979
    %v6213 = vadd.f32 %v5707, %v5981
    %v6214 = vadd.f32 %v5708, %v5984
    %v6215 = vadd.f32 %v5709, %v5986
    %v6216 = vadd.f32 %v5710, %v5988
    %v6217 = vadd.f32 %v5711, %v5991
    %v6218 = vadd.f32 %v5712, %v5993
    %v6219 = vadd.f32 %v5713, %v5995
    %v6220 = vadd.f32 %v5714, %v5998
    %v6221 = vadd.f32 %v5715, %v6000
    %v6222 = vadd.f32 %v5716, %v6002
    %v6223 = vadd.f32 %v5717, %v6005
    %v6224 = vadd.f32 %v5718, %v6007
    %v6225 = vadd.f32 %v5719, %v6009
    %v6226 = vadd.f32 %v5720, %v6012
    %v6227 = vadd.f32 %v5721, %v6014
    %v6228 = vadd.f32 %v5722, %v6016
    %v6229 = vadd.f32 %v5723, %v6019
    %v6230 = vadd.f32 %v5724, %v6021
    %v6231 = vadd.f32 %v5725, %v6023
    %v6232 = vadd.f32 %v5726, %v6026
    %v6233 = vadd.f32 %v5727, %v6028
    %v6234 = vadd.f32 %v5728, %v6030
    %v6235 = vadd.f32 %v5729, %v6033
    %v6236 = vadd.f32 %v5730, %v6035
    %v6237 = vadd.f32 %v5731, %v6037
    %v6238 = vadd.f32 %v5732, %v6040
    %v6239 = vadd.f32 %v5733, %v6042
    %v6240 = vadd.f32 %v5734, %v6044
    %v6241 = vadd.f32 %v5735, %v6047
    %v6242 = vadd.f32 %v5736, %v6049
    %v6243 = vadd.f32 %v5737, %v6051
    %v6244 = vadd.f32 %v5738, %v6054
    %v6245 = vadd.f32 %v5739, %v6056
    %v6246 = vadd.f32 %v5740, %v6058
    %v6247 = vadd.f32 %v5741, %v6061
    %v6248 = vadd.f32 %v5742, %v6063
    %v6249 = vadd.f32 %v5743, %v6065
    %v6250 = vadd.f32 %v5744, %v6068
    %v6251 = vadd.f32 %v5745, %v6070
    %v6252 = vadd.f32 %v5746, %v6072
    %v6253 = vadd.f32 %v5747, %v6075
    %v6254 = vadd.f32 %v5748, %v6077
    %v6255 = vadd.f32 %v5749, %v6079
    %v6256 = vadd.f32 %v5750, %v6082
    %v6257 = vadd.f32 %v5751, %v6084
    %v6258 = vadd.f32 %v5752, %v6086
    %v6259 = vadd.f32 %v5753, %v6089
    %v6260 = vadd.f32 %v5754, %v6091
    %v6261 = vadd.f32 %v5755, %v6093
    %v6262 = vadd.f32 %v5756, %v6096
    %v6263 = vadd.f32 %v5757, %v6098
    %v6264 = vadd.f32 %v5758, %v6100
    %v6265 = vadd.f32 %v5759, %v6103
    %v6266 = vadd.f32 %v5760, %v6105
    %v6267 = vadd.f32 %v5761, %v6107
    %v6268 = vadd.f32 %v5762, %v6110
    %v6269 = vadd.f32 %v5763, %v6112
    %v6270 = vadd.f32 %v5764, %v6114
    %v6271 = vadd.f32 %v5765, %v6117
    %v6272 = vadd.f32 %v5766, %v6119
    %v6273 = vadd.f32 %v5767, %v6121
    %v6274 = vadd.f32 %v5768, %v6124
    %v6275 = vadd.f32 %v5769, %v6126
    %v6276 = vadd.f32 %v5770, %v6128
    %v6277 = vadd.f32 %v5771, %v6131
    %v6278 = vadd.f32 %v5772, %v6133
    %v6279 = vadd.f32 %v5773, %v6135
    %s6280 = sld [smem:[#allocation10 + $0x5]]
    %v6281 = vstv %s6280
    %v6282 = vmul.f32 %v4442, %v6281
    %v6283 = vmul.f32 %v4443, %v6281
    %v6284 = vmul.f32 %v4444, %v6281
    %v6285 = vmul.f32 %v4445, %v6281
    %v6286 = vmul.f32 %v4446, %v6281
    %v6287 = vmul.f32 %v4447, %v6281
    %v6288 = vmul.f32 %v4448, %v6281
    %v6289 = vmul.f32 %v4449, %v6281
    %v6290 = vmul.f32 %v4450, %v6281
    %v6291 = vmul.f32 %v4451, %v6281
    %v6292 = vmul.f32 %v4452, %v6281
    %v6293 = vmul.f32 %v4453, %v6281
    %v6294 = vmul.f32 %v4454, %v6281
    %v6295 = vmul.f32 %v4455, %v6281
    %v6296 = vmul.f32 %v4456, %v6281
    %v6297 = vmul.f32 %v4457, %v6281
    %v6298 = vmul.f32 %v4458, %v6281
    %v6299 = vmul.f32 %v4459, %v6281
    %v6300 = vmul.f32 %v4460, %v6281
    %v6301 = vmul.f32 %v4461, %v6281
    %v6302 = vmul.f32 %v4462, %v6281
    %v6303 = vmul.f32 %v4463, %v6281
    %v6304 = vmul.f32 %v4464, %v6281
    %v6305 = vmul.f32 %v4465, %v6281
    %v6306 = vmul.f32 %v4466, %v6281
    %v6307 = vmul.f32 %v4467, %v6281
    %v6308 = vmul.f32 %v4468, %v6281
    %v6309 = vmul.f32 %v4469, %v6281
    %v6310 = vmul.f32 %v4470, %v6281
    %v6311 = vmul.f32 %v4471, %v6281
    %v6312 = vmul.f32 %v4472, %v6281
    %v6313 = vmul.f32 %v4473, %v6281
    %v6314 = vmul.f32 %v4474, %v6281
    %v6315 = vmul.f32 %v4475, %v6281
    %v6316 = vmul.f32 %v4476, %v6281
    %v6317 = vmul.f32 %v4477, %v6281
    %v6318 = vmul.f32 %v4478, %v6281
    %v6319 = vmul.f32 %v4479, %v6281
    %v6320 = vmul.f32 %v4480, %v6281
    %v6321 = vmul.f32 %v4481, %v6281
    %v6322 = vmul.f32 %v4482, %v6281
    %v6323 = vmul.f32 %v4483, %v6281
    %v6324 = vmul.f32 %v4484, %v6281
    %v6325 = vmul.f32 %v4485, %v6281
    %v6326 = vmul.f32 %v4486, %v6281
    %v6327 = vmul.f32 %v4487, %v6281
    %v6328 = vmul.f32 %v4488, %v6281
    %v6329 = vmul.f32 %v4489, %v6281
    %v6330 = vmul.f32 %v4490, %v6281
    %v6331 = vmul.f32 %v4491, %v6281
    %v6332 = vmul.f32 %v4492, %v6281
    %v6333 = vmul.f32 %v4493, %v6281
    %v6334 = vmul.f32 %v4494, %v6281
    %v6335 = vmul.f32 %v4495, %v6281
    %v6336 = vmul.f32 %v4496, %v6281
    %v6337 = vmul.f32 %v4497, %v6281
    %v6338 = vmul.f32 %v4498, %v6281
    %v6339 = vmul.f32 %v4499, %v6281
    %v6340 = vmul.f32 %v4500, %v6281
    %v6341 = vmul.f32 %v4501, %v6281
    %v6342 = vmul.f32 %v4502, %v6281
    %v6343 = vmul.f32 %v4503, %v6281
    %v6344 = vmul.f32 %v4504, %v6281
    %v6345 = vmul.f32 %v4505, %v6281
    %v6346 = vmul.f32 %v4506, %v6281
    %v6347 = vmul.f32 %v4507, %v6281
    %v6348 = vmul.f32 %v4508, %v6281
    %v6349 = vmul.f32 %v4509, %v6281
    %v6350 = vmul.f32 %v4510, %v6281
    %v6351 = vmul.f32 %v4511, %v6281
    %v6352 = vmul.f32 %v4512, %v6281
    %v6353 = vmul.f32 %v4513, %v6281
    %v6354 = vmul.f32 %v4514, %v6281
    %v6355 = vmul.f32 %v4515, %v6281
    %v6356 = vmul.f32 %v4516, %v6281
    %v6357 = vmul.f32 %v4517, %v6281
    %v6358 = vmul.f32 %v4518, %v6281
    %v6359 = vmul.f32 %v4519, %v6281
    %v6360 = vmul.f32 %v4520, %v6281
    %v6361 = vmul.f32 %v4521, %v6281
    %v6362 = vmul.f32 %v4522, %v6281
    %v6363 = vmul.f32 %v4523, %v6281
    %v6364 = vmul.f32 %v4524, %v6281
    %v6365 = vmul.f32 %v4525, %v6281
    %v6366 = vmul.f32 %v4526, %v6281
    %v6367 = vmul.f32 %v4527, %v6281
    %v6368 = vmul.f32 %v4528, %v6281
    %v6369 = vmul.f32 %v4529, %v6281
    %v6370 = vmul.f32 %v4530, %v6281
    %v6371 = vmul.f32 %v4531, %v6281
    %v6372 = vmul.f32 %v4532, %v6281
    %v6373 = vmul.f32 %v4533, %v6281
    %v6374 = vmul.f32 %v4534, %v6281
    %v6375 = vmul.f32 %v4535, %v6281
    %v6376 = vmul.f32 %v4536, %v6281
    %v6377 = vmul.f32 %v4537, %v6281
    %v6474 = vrot.slane %v6282, 2
    %v6475 = vrot.slane %v6283, 2
    %v6476 = vsel %vm1121, %v6474, %v6475
    %v6477 = vrot.slane %v6284, 2
    %v6478 = vsel %vm1121, %v6475, %v6477
    %v6479 = vrot.slane %v6285, 2
    %v6480 = vsel %vm1121, %v6477, %v6479
    %v6481 = vrot.slane %v6286, 2
    %v6482 = vrot.slane %v6287, 2
    %v6483 = vsel %vm1121, %v6481, %v6482
    %v6484 = vrot.slane %v6288, 2
    %v6485 = vsel %vm1121, %v6482, %v6484
    %v6486 = vrot.slane %v6289, 2
    %v6487 = vsel %vm1121, %v6484, %v6486
    %v6488 = vrot.slane %v6290, 2
    %v6489 = vrot.slane %v6291, 2
    %v6490 = vsel %vm1121, %v6488, %v6489
    %v6491 = vrot.slane %v6292, 2
    %v6492 = vsel %vm1121, %v6489, %v6491
    %v6493 = vrot.slane %v6293, 2
    %v6494 = vsel %vm1121, %v6491, %v6493
    %v6495 = vrot.slane %v6294, 2
    %v6496 = vrot.slane %v6295, 2
    %v6497 = vsel %vm1121, %v6495, %v6496
    %v6498 = vrot.slane %v6296, 2
    %v6499 = vsel %vm1121, %v6496, %v6498
    %v6500 = vrot.slane %v6297, 2
    %v6501 = vsel %vm1121, %v6498, %v6500
    %v6502 = vrot.slane %v6298, 2
    %v6503 = vrot.slane %v6299, 2
    %v6504 = vsel %vm1121, %v6502, %v6503
    %v6505 = vrot.slane %v6300, 2
    %v6506 = vsel %vm1121, %v6503, %v6505
    %v6507 = vrot.slane %v6301, 2
    %v6508 = vsel %vm1121, %v6505, %v6507
    %v6509 = vrot.slane %v6302, 2
    %v6510 = vrot.slane %v6303, 2
    %v6511 = vsel %vm1121, %v6509, %v6510
    %v6512 = vrot.slane %v6304, 2
    %v6513 = vsel %vm1121, %v6510, %v6512
    %v6514 = vrot.slane %v6305, 2
    %v6515 = vsel %vm1121, %v6512, %v6514
    %v6516 = vrot.slane %v6306, 2
    %v6517 = vrot.slane %v6307, 2
    %v6518 = vsel %vm1121, %v6516, %v6517
    %v6519 = vrot.slane %v6308, 2
    %v6520 = vsel %vm1121, %v6517, %v6519
    %v6521 = vrot.slane %v6309, 2
    %v6522 = vsel %vm1121, %v6519, %v6521
    %v6523 = vrot.slane %v6310, 2
    %v6524 = vrot.slane %v6311, 2
    %v6525 = vsel %vm1121, %v6523, %v6524
    %v6526 = vrot.slane %v6312, 2
    %v6527 = vsel %vm1121, %v6524, %v6526
    %v6528 = vrot.slane %v6313, 2
    %v6529 = vsel %vm1121, %v6526, %v6528
    %v6530 = vrot.slane %v6314, 2
    %v6531 = vrot.slane %v6315, 2
    %v6532 = vsel %vm1121, %v6530, %v6531
    %v6533 = vrot.slane %v6316, 2
    %v6534 = vsel %vm1121, %v6531, %v6533
    %v6535 = vrot.slane %v6317, 2
    %v6536 = vsel %vm1121, %v6533, %v6535
    %v6537 = vrot.slane %v6318, 2
    %v6538 = vrot.slane %v6319, 2
    %v6539 = vsel %vm1121, %v6537, %v6538
    %v6540 = vrot.slane %v6320, 2
    %v6541 = vsel %vm1121, %v6538, %v6540
    %v6542 = vrot.slane %v6321, 2
    %v6543 = vsel %vm1121, %v6540, %v6542
    %v6544 = vrot.slane %v6322, 2
    %v6545 = vrot.slane %v6323, 2
    %v6546 = vsel %vm1121, %v6544, %v6545
    %v6547 = vrot.slane %v6324, 2
    %v6548 = vsel %vm1121, %v6545, %v6547
    %v6549 = vrot.slane %v6325, 2
    %v6550 = vsel %vm1121, %v6547, %v6549
    %v6551 = vrot.slane %v6326, 2
    %v6552 = vrot.slane %v6327, 2
    %v6553 = vsel %vm1121, %v6551, %v6552
    %v6554 = vrot.slane %v6328, 2
    %v6555 = vsel %vm1121, %v6552, %v6554
    %v6556 = vrot.slane %v6329, 2
    %v6557 = vsel %vm1121, %v6554, %v6556
    %v6558 = vrot.slane %v6330, 2
    %v6559 = vrot.slane %v6331, 2
    %v6560 = vsel %vm1121, %v6558, %v6559
    %v6561 = vrot.slane %v6332, 2
    %v6562 = vsel %vm1121, %v6559, %v6561
    %v6563 = vrot.slane %v6333, 2
    %v6564 = vsel %vm1121, %v6561, %v6563
    %v6565 = vrot.slane %v6334, 2
    %v6566 = vrot.slane %v6335, 2
    %v6567 = vsel %vm1121, %v6565, %v6566
    %v6568 = vrot.slane %v6336, 2
    %v6569 = vsel %vm1121, %v6566, %v6568
    %v6570 = vrot.slane %v6337, 2
    %v6571 = vsel %vm1121, %v6568, %v6570
    %v6572 = vrot.slane %v6338, 2
    %v6573 = vrot.slane %v6339, 2
    %v6574 = vsel %vm1121, %v6572, %v6573
    %v6575 = vrot.slane %v6340, 2
    %v6576 = vsel %vm1121, %v6573, %v6575
    %v6577 = vrot.slane %v6341, 2
    %v6578 = vsel %vm1121, %v6575, %v6577
    %v6579 = vrot.slane %v6342, 2
    %v6580 = vrot.slane %v6343, 2
    %v6581 = vsel %vm1121, %v6579, %v6580
    %v6582 = vrot.slane %v6344, 2
    %v6583 = vsel %vm1121, %v6580, %v6582
    %v6584 = vrot.slane %v6345, 2
    %v6585 = vsel %vm1121, %v6582, %v6584
    %v6586 = vrot.slane %v6346, 2
    %v6587 = vrot.slane %v6347, 2
    %v6588 = vsel %vm1121, %v6586, %v6587
    %v6589 = vrot.slane %v6348, 2
    %v6590 = vsel %vm1121, %v6587, %v6589
    %v6591 = vrot.slane %v6349, 2
    %v6592 = vsel %vm1121, %v6589, %v6591
    %v6593 = vrot.slane %v6350, 2
    %v6594 = vrot.slane %v6351, 2
    %v6595 = vsel %vm1121, %v6593, %v6594
    %v6596 = vrot.slane %v6352, 2
    %v6597 = vsel %vm1121, %v6594, %v6596
    %v6598 = vrot.slane %v6353, 2
    %v6599 = vsel %vm1121, %v6596, %v6598
    %v6600 = vrot.slane %v6354, 2
    %v6601 = vrot.slane %v6355, 2
    %v6602 = vsel %vm1121, %v6600, %v6601
    %v6603 = vrot.slane %v6356, 2
    %v6604 = vsel %vm1121, %v6601, %v6603
    %v6605 = vrot.slane %v6357, 2
    %v6606 = vsel %vm1121, %v6603, %v6605
    %v6607 = vrot.slane %v6358, 2
    %v6608 = vrot.slane %v6359, 2
    %v6609 = vsel %vm1121, %v6607, %v6608
    %v6610 = vrot.slane %v6360, 2
    %v6611 = vsel %vm1121, %v6608, %v6610
    %v6612 = vrot.slane %v6361, 2
    %v6613 = vsel %vm1121, %v6610, %v6612
    %v6614 = vrot.slane %v6362, 2
    %v6615 = vrot.slane %v6363, 2
    %v6616 = vsel %vm1121, %v6614, %v6615
    %v6617 = vrot.slane %v6364, 2
    %v6618 = vsel %vm1121, %v6615, %v6617
    %v6619 = vrot.slane %v6365, 2
    %v6620 = vsel %vm1121, %v6617, %v6619
    %v6621 = vrot.slane %v6366, 2
    %v6622 = vrot.slane %v6367, 2
    %v6623 = vsel %vm1121, %v6621, %v6622
    %v6624 = vrot.slane %v6368, 2
    %v6625 = vsel %vm1121, %v6622, %v6624
    %v6626 = vrot.slane %v6369, 2
    %v6627 = vsel %vm1121, %v6624, %v6626
    %v6628 = vrot.slane %v6370, 2
    %v6629 = vrot.slane %v6371, 2
    %v6630 = vsel %vm1121, %v6628, %v6629
    %v6631 = vrot.slane %v6372, 2
    %v6632 = vsel %vm1121, %v6629, %v6631
    %v6633 = vrot.slane %v6373, 2
    %v6634 = vsel %vm1121, %v6631, %v6633
    %v6635 = vrot.slane %v6374, 2
    %v6636 = vrot.slane %v6375, 2
    %v6637 = vsel %vm1121, %v6635, %v6636
    %v6638 = vrot.slane %v6376, 2
    %v6639 = vsel %vm1121, %v6636, %v6638
    %v6640 = vrot.slane %v6377, 2
    %v6641 = vsel %vm1121, %v6638, %v6640
    %v6714 = vadd.f32 %v6208, %v6476
    %v6715 = vadd.f32 %v6209, %v6478
    %v6716 = vadd.f32 %v6210, %v6480
    %v6717 = vadd.f32 %v6211, %v6483
    %v6718 = vadd.f32 %v6212, %v6485
    %v6719 = vadd.f32 %v6213, %v6487
    %v6720 = vadd.f32 %v6214, %v6490
    %v6721 = vadd.f32 %v6215, %v6492
    %v6722 = vadd.f32 %v6216, %v6494
    %v6723 = vadd.f32 %v6217, %v6497
    %v6724 = vadd.f32 %v6218, %v6499
    %v6725 = vadd.f32 %v6219, %v6501
    %v6726 = vadd.f32 %v6220, %v6504
    %v6727 = vadd.f32 %v6221, %v6506
    %v6728 = vadd.f32 %v6222, %v6508
    %v6729 = vadd.f32 %v6223, %v6511
    %v6730 = vadd.f32 %v6224, %v6513
    %v6731 = vadd.f32 %v6225, %v6515
    %v6732 = vadd.f32 %v6226, %v6518
    %v6733 = vadd.f32 %v6227, %v6520
    %v6734 = vadd.f32 %v6228, %v6522
    %v6735 = vadd.f32 %v6229, %v6525
    %v6736 = vadd.f32 %v6230, %v6527
    %v6737 = vadd.f32 %v6231, %v6529
    %v6738 = vadd.f32 %v6232, %v6532
    %v6739 = vadd.f32 %v6233, %v6534
    %v6740 = vadd.f32 %v6234, %v6536
    %v6741 = vadd.f32 %v6235, %v6539
    %v6742 = vadd.f32 %v6236, %v6541
    %v6743 = vadd.f32 %v6237, %v6543
    %v6744 = vadd.f32 %v6238, %v6546
    %v6745 = vadd.f32 %v6239, %v6548
    %v6746 = vadd.f32 %v6240, %v6550
    %v6747 = vadd.f32 %v6241, %v6553
    %v6748 = vadd.f32 %v6242, %v6555
    %v6749 = vadd.f32 %v6243, %v6557
    %v6750 = vadd.f32 %v6244, %v6560
    %v6751 = vadd.f32 %v6245, %v6562
    %v6752 = vadd.f32 %v6246, %v6564
    %v6753 = vadd.f32 %v6247, %v6567
    %v6754 = vadd.f32 %v6248, %v6569
    %v6755 = vadd.f32 %v6249, %v6571
    %v6756 = vadd.f32 %v6250, %v6574
    %v6757 = vadd.f32 %v6251, %v6576
    %v6758 = vadd.f32 %v6252, %v6578
    %v6759 = vadd.f32 %v6253, %v6581
    %v6760 = vadd.f32 %v6254, %v6583
    %v6761 = vadd.f32 %v6255, %v6585
    %v6762 = vadd.f32 %v6256, %v6588
    %v6763 = vadd.f32 %v6257, %v6590
    %v6764 = vadd.f32 %v6258, %v6592
    %v6765 = vadd.f32 %v6259, %v6595
    %v6766 = vadd.f32 %v6260, %v6597
    %v6767 = vadd.f32 %v6261, %v6599
    %v6768 = vadd.f32 %v6262, %v6602
    %v6769 = vadd.f32 %v6263, %v6604
    %v6770 = vadd.f32 %v6264, %v6606
    %v6771 = vadd.f32 %v6265, %v6609
    %v6772 = vadd.f32 %v6266, %v6611
    %v6773 = vadd.f32 %v6267, %v6613
    %v6774 = vadd.f32 %v6268, %v6616
    %v6775 = vadd.f32 %v6269, %v6618
    %v6776 = vadd.f32 %v6270, %v6620
    %v6777 = vadd.f32 %v6271, %v6623
    %v6778 = vadd.f32 %v6272, %v6625
    %v6779 = vadd.f32 %v6273, %v6627
    %v6780 = vadd.f32 %v6274, %v6630
    %v6781 = vadd.f32 %v6275, %v6632
    %v6782 = vadd.f32 %v6276, %v6634
    %v6783 = vadd.f32 %v6277, %v6637
    %v6784 = vadd.f32 %v6278, %v6639
    %v6785 = vadd.f32 %v6279, %v6641
    %s6786 = sld [smem:[#allocation10 + $0x6]]
    %v6787 = vstv %s6786
    %v6788 = vmul.f32 %v4446, %v6787
    %v6789 = vmul.f32 %v4447, %v6787
    %v6790 = vmul.f32 %v4448, %v6787
    %v6791 = vmul.f32 %v4450, %v6787
    %v6792 = vmul.f32 %v4451, %v6787
    %v6793 = vmul.f32 %v4452, %v6787
    %v6794 = vmul.f32 %v4454, %v6787
    %v6795 = vmul.f32 %v4455, %v6787
    %v6796 = vmul.f32 %v4456, %v6787
    %v6797 = vmul.f32 %v4458, %v6787
    %v6798 = vmul.f32 %v4459, %v6787
    %v6799 = vmul.f32 %v4460, %v6787
    %v6800 = vmul.f32 %v4462, %v6787
    %v6801 = vmul.f32 %v4463, %v6787
    %v6802 = vmul.f32 %v4464, %v6787
    %v6803 = vmul.f32 %v4466, %v6787
    %v6804 = vmul.f32 %v4467, %v6787
    %v6805 = vmul.f32 %v4468, %v6787
    %v6806 = vmul.f32 %v4470, %v6787
    %v6807 = vmul.f32 %v4471, %v6787
    %v6808 = vmul.f32 %v4472, %v6787
    %v6809 = vmul.f32 %v4474, %v6787
    %v6810 = vmul.f32 %v4475, %v6787
    %v6811 = vmul.f32 %v4476, %v6787
    %v6812 = vmul.f32 %v4478, %v6787
    %v6813 = vmul.f32 %v4479, %v6787
    %v6814 = vmul.f32 %v4480, %v6787
    %v6815 = vmul.f32 %v4482, %v6787
    %v6816 = vmul.f32 %v4483, %v6787
    %v6817 = vmul.f32 %v4484, %v6787
    %v6818 = vmul.f32 %v4486, %v6787
    %v6819 = vmul.f32 %v4487, %v6787
    %v6820 = vmul.f32 %v4488, %v6787
    %v6821 = vmul.f32 %v4490, %v6787
    %v6822 = vmul.f32 %v4491, %v6787
    %v6823 = vmul.f32 %v4492, %v6787
    %v6824 = vmul.f32 %v4494, %v6787
    %v6825 = vmul.f32 %v4495, %v6787
    %v6826 = vmul.f32 %v4496, %v6787
    %v6827 = vmul.f32 %v4498, %v6787
    %v6828 = vmul.f32 %v4499, %v6787
    %v6829 = vmul.f32 %v4500, %v6787
    %v6830 = vmul.f32 %v4502, %v6787
    %v6831 = vmul.f32 %v4503, %v6787
    %v6832 = vmul.f32 %v4504, %v6787
    %v6833 = vmul.f32 %v4506, %v6787
    %v6834 = vmul.f32 %v4507, %v6787
    %v6835 = vmul.f32 %v4508, %v6787
    %v6836 = vmul.f32 %v4510, %v6787
    %v6837 = vmul.f32 %v4511, %v6787
    %v6838 = vmul.f32 %v4512, %v6787
    %v6839 = vmul.f32 %v4514, %v6787
    %v6840 = vmul.f32 %v4515, %v6787
    %v6841 = vmul.f32 %v4516, %v6787
    %v6842 = vmul.f32 %v4518, %v6787
    %v6843 = vmul.f32 %v4519, %v6787
    %v6844 = vmul.f32 %v4520, %v6787
    %v6845 = vmul.f32 %v4522, %v6787
    %v6846 = vmul.f32 %v4523, %v6787
    %v6847 = vmul.f32 %v4524, %v6787
    %v6848 = vmul.f32 %v4526, %v6787
    %v6849 = vmul.f32 %v4527, %v6787
    %v6850 = vmul.f32 %v4528, %v6787
    %v6851 = vmul.f32 %v4530, %v6787
    %v6852 = vmul.f32 %v4531, %v6787
    %v6853 = vmul.f32 %v4532, %v6787
    %v6854 = vmul.f32 %v4534, %v6787
    %v6855 = vmul.f32 %v4535, %v6787
    %v6856 = vmul.f32 %v4536, %v6787
    %v6857 = vmul.f32 %v4538, %v6787
    %v6858 = vmul.f32 %v4539, %v6787
    %v6859 = vmul.f32 %v4540, %v6787
    %v6860 = vadd.f32 %v6714, %v6788
    %v6861 = vadd.f32 %v6715, %v6789
    %v6862 = vadd.f32 %v6716, %v6790
    %v6863 = vadd.f32 %v6717, %v6791
    %v6864 = vadd.f32 %v6718, %v6792
    %v6865 = vadd.f32 %v6719, %v6793
    %v6866 = vadd.f32 %v6720, %v6794
    %v6867 = vadd.f32 %v6721, %v6795
    %v6868 = vadd.f32 %v6722, %v6796
    %v6869 = vadd.f32 %v6723, %v6797
    %v6870 = vadd.f32 %v6724, %v6798
    %v6871 = vadd.f32 %v6725, %v6799
    %v6872 = vadd.f32 %v6726, %v6800
    %v6873 = vadd.f32 %v6727, %v6801
    %v6874 = vadd.f32 %v6728, %v6802
    %v6875 = vadd.f32 %v6729, %v6803
    %v6876 = vadd.f32 %v6730, %v6804
    %v6877 = vadd.f32 %v6731, %v6805
    %v6878 = vadd.f32 %v6732, %v6806
    %v6879 = vadd.f32 %v6733, %v6807
    %v6880 = vadd.f32 %v6734, %v6808
    %v6881 = vadd.f32 %v6735, %v6809
    %v6882 = vadd.f32 %v6736, %v6810
    %v6883 = vadd.f32 %v6737, %v6811
    %v6884 = vadd.f32 %v6738, %v6812
    %v6885 = vadd.f32 %v6739, %v6813
    %v6886 = vadd.f32 %v6740, %v6814
    %v6887 = vadd.f32 %v6741, %v6815
    %v6888 = vadd.f32 %v6742, %v6816
    %v6889 = vadd.f32 %v6743, %v6817
    %v6890 = vadd.f32 %v6744, %v6818
    %v6891 = vadd.f32 %v6745, %v6819
    %v6892 = vadd.f32 %v6746, %v6820
    %v6893 = vadd.f32 %v6747, %v6821
    %v6894 = vadd.f32 %v6748, %v6822
    %v6895 = vadd.f32 %v6749, %v6823
    %v6896 = vadd.f32 %v6750, %v6824
    %v6897 = vadd.f32 %v6751, %v6825
    %v6898 = vadd.f32 %v6752, %v6826
    %v6899 = vadd.f32 %v6753, %v6827
    %v6900 = vadd.f32 %v6754, %v6828
    %v6901 = vadd.f32 %v6755, %v6829
    %v6902 = vadd.f32 %v6756, %v6830
    %v6903 = vadd.f32 %v6757, %v6831
    %v6904 = vadd.f32 %v6758, %v6832
    %v6905 = vadd.f32 %v6759, %v6833
    %v6906 = vadd.f32 %v6760, %v6834
    %v6907 = vadd.f32 %v6761, %v6835
    %v6908 = vadd.f32 %v6762, %v6836
    %v6909 = vadd.f32 %v6763, %v6837
    %v6910 = vadd.f32 %v6764, %v6838
    %v6911 = vadd.f32 %v6765, %v6839
    %v6912 = vadd.f32 %v6766, %v6840
    %v6913 = vadd.f32 %v6767, %v6841
    %v6914 = vadd.f32 %v6768, %v6842
    %v6915 = vadd.f32 %v6769, %v6843
    %v6916 = vadd.f32 %v6770, %v6844
    %v6917 = vadd.f32 %v6771, %v6845
    %v6918 = vadd.f32 %v6772, %v6846
    %v6919 = vadd.f32 %v6773, %v6847
    %v6920 = vadd.f32 %v6774, %v6848
    %v6921 = vadd.f32 %v6775, %v6849
    %v6922 = vadd.f32 %v6776, %v6850
    %v6923 = vadd.f32 %v6777, %v6851
    %v6924 = vadd.f32 %v6778, %v6852
    %v6925 = vadd.f32 %v6779, %v6853
    %v6926 = vadd.f32 %v6780, %v6854
    %v6927 = vadd.f32 %v6781, %v6855
    %v6928 = vadd.f32 %v6782, %v6856
    %v6929 = vadd.f32 %v6783, %v6857
    %v6930 = vadd.f32 %v6784, %v6858
    %v6931 = vadd.f32 %v6785, %v6859
    %s6932 = sld [smem:[#allocation10 + $0x7]]
    %v6933 = vstv %s6932
    %v6934 = vmul.f32 %v4446, %v6933
    %v6935 = vmul.f32 %v4447, %v6933
    %v6936 = vmul.f32 %v4448, %v6933
    %v6937 = vmul.f32 %v4449, %v6933
    %v6938 = vmul.f32 %v4450, %v6933
    %v6939 = vmul.f32 %v4451, %v6933
    %v6940 = vmul.f32 %v4452, %v6933
    %v6941 = vmul.f32 %v4453, %v6933
    %v6942 = vmul.f32 %v4454, %v6933
    %v6943 = vmul.f32 %v4455, %v6933
    %v6944 = vmul.f32 %v4456, %v6933
    %v6945 = vmul.f32 %v4457, %v6933
    %v6946 = vmul.f32 %v4458, %v6933
    %v6947 = vmul.f32 %v4459, %v6933
    %v6948 = vmul.f32 %v4460, %v6933
    %v6949 = vmul.f32 %v4461, %v6933
    %v6950 = vmul.f32 %v4462, %v6933
    %v6951 = vmul.f32 %v4463, %v6933
    %v6952 = vmul.f32 %v4464, %v6933
    %v6953 = vmul.f32 %v4465, %v6933
    %v6954 = vmul.f32 %v4466, %v6933
    %v6955 = vmul.f32 %v4467, %v6933
    %v6956 = vmul.f32 %v4468, %v6933
    %v6957 = vmul.f32 %v4469, %v6933
    %v6958 = vmul.f32 %v4470, %v6933
    %v6959 = vmul.f32 %v4471, %v6933
    %v6960 = vmul.f32 %v4472, %v6933
    %v6961 = vmul.f32 %v4473, %v6933
    %v6962 = vmul.f32 %v4474, %v6933
    %v6963 = vmul.f32 %v4475, %v6933
    %v6964 = vmul.f32 %v4476, %v6933
    %v6965 = vmul.f32 %v4477, %v6933
    %v6966 = vmul.f32 %v4478, %v6933
    %v6967 = vmul.f32 %v4479, %v6933
    %v6968 = vmul.f32 %v4480, %v6933
    %v6969 = vmul.f32 %v4481, %v6933
    %v6970 = vmul.f32 %v4482, %v6933
    %v6971 = vmul.f32 %v4483, %v6933
    %v6972 = vmul.f32 %v4484, %v6933
    %v6973 = vmul.f32 %v4485, %v6933
    %v6974 = vmul.f32 %v4486, %v6933
    %v6975 = vmul.f32 %v4487, %v6933
    %v6976 = vmul.f32 %v4488, %v6933
    %v6977 = vmul.f32 %v4489, %v6933
    %v6978 = vmul.f32 %v4490, %v6933
    %v6979 = vmul.f32 %v4491, %v6933
    %v6980 = vmul.f32 %v4492, %v6933
    %v6981 = vmul.f32 %v4493, %v6933
    %v6982 = vmul.f32 %v4494, %v6933
    %v6983 = vmul.f32 %v4495, %v6933
    %v6984 = vmul.f32 %v4496, %v6933
    %v6985 = vmul.f32 %v4497, %v6933
    %v6986 = vmul.f32 %v4498, %v6933
    %v6987 = vmul.f32 %v4499, %v6933
    %v6988 = vmul.f32 %v4500, %v6933
    %v6989 = vmul.f32 %v4501, %v6933
    %v6990 = vmul.f32 %v4502, %v6933
    %v6991 = vmul.f32 %v4503, %v6933
    %v6992 = vmul.f32 %v4504, %v6933
    %v6993 = vmul.f32 %v4505, %v6933
    %v6994 = vmul.f32 %v4506, %v6933
    %v6995 = vmul.f32 %v4507, %v6933
    %v6996 = vmul.f32 %v4508, %v6933
    %v6997 = vmul.f32 %v4509, %v6933
    %v6998 = vmul.f32 %v4510, %v6933
    %v6999 = vmul.f32 %v4511, %v6933
    %v7000 = vmul.f32 %v4512, %v6933
    %v7001 = vmul.f32 %v4513, %v6933
    %v7002 = vmul.f32 %v4514, %v6933
    %v7003 = vmul.f32 %v4515, %v6933
    %v7004 = vmul.f32 %v4516, %v6933
    %v7005 = vmul.f32 %v4517, %v6933
    %v7006 = vmul.f32 %v4518, %v6933
    %v7007 = vmul.f32 %v4519, %v6933
    %v7008 = vmul.f32 %v4520, %v6933
    %v7009 = vmul.f32 %v4521, %v6933
    %v7010 = vmul.f32 %v4522, %v6933
    %v7011 = vmul.f32 %v4523, %v6933
    %v7012 = vmul.f32 %v4524, %v6933
    %v7013 = vmul.f32 %v4525, %v6933
    %v7014 = vmul.f32 %v4526, %v6933
    %v7015 = vmul.f32 %v4527, %v6933
    %v7016 = vmul.f32 %v4528, %v6933
    %v7017 = vmul.f32 %v4529, %v6933
    %v7018 = vmul.f32 %v4530, %v6933
    %v7019 = vmul.f32 %v4531, %v6933
    %v7020 = vmul.f32 %v4532, %v6933
    %v7021 = vmul.f32 %v4533, %v6933
    %v7022 = vmul.f32 %v4534, %v6933
    %v7023 = vmul.f32 %v4535, %v6933
    %v7024 = vmul.f32 %v4536, %v6933
    %v7025 = vmul.f32 %v4537, %v6933
    %v7026 = vmul.f32 %v4538, %v6933
    %v7027 = vmul.f32 %v4539, %v6933
    %v7028 = vmul.f32 %v4540, %v6933
    %v7029 = vmul.f32 %v4541, %v6933
    %v7126 = vrot.slane %v6934, 1
    %v7127 = vrot.slane %v6935, 1
    %v7128 = vsel %vm520, %v7126, %v7127
    %v7129 = vrot.slane %v6936, 1
    %v7130 = vsel %vm520, %v7127, %v7129
    %v7131 = vrot.slane %v6937, 1
    %v7132 = vsel %vm520, %v7129, %v7131
    %v7133 = vrot.slane %v6938, 1
    %v7134 = vrot.slane %v6939, 1
    %v7135 = vsel %vm520, %v7133, %v7134
    %v7136 = vrot.slane %v6940, 1
    %v7137 = vsel %vm520, %v7134, %v7136
    %v7138 = vrot.slane %v6941, 1
    %v7139 = vsel %vm520, %v7136, %v7138
    %v7140 = vrot.slane %v6942, 1
    %v7141 = vrot.slane %v6943, 1
    %v7142 = vsel %vm520, %v7140, %v7141
    %v7143 = vrot.slane %v6944, 1
    %v7144 = vsel %vm520, %v7141, %v7143
    %v7145 = vrot.slane %v6945, 1
    %v7146 = vsel %vm520, %v7143, %v7145
    %v7147 = vrot.slane %v6946, 1
    %v7148 = vrot.slane %v6947, 1
    %v7149 = vsel %vm520, %v7147, %v7148
    %v7150 = vrot.slane %v6948, 1
    %v7151 = vsel %vm520, %v7148, %v7150
    %v7152 = vrot.slane %v6949, 1
    %v7153 = vsel %vm520, %v7150, %v7152
    %v7154 = vrot.slane %v6950, 1
    %v7155 = vrot.slane %v6951, 1
    %v7156 = vsel %vm520, %v7154, %v7155
    %v7157 = vrot.slane %v6952, 1
    %v7158 = vsel %vm520, %v7155, %v7157
    %v7159 = vrot.slane %v6953, 1
    %v7160 = vsel %vm520, %v7157, %v7159
    %v7161 = vrot.slane %v6954, 1
    %v7162 = vrot.slane %v6955, 1
    %v7163 = vsel %vm520, %v7161, %v7162
    %v7164 = vrot.slane %v6956, 1
    %v7165 = vsel %vm520, %v7162, %v7164
    %v7166 = vrot.slane %v6957, 1
    %v7167 = vsel %vm520, %v7164, %v7166
    %v7168 = vrot.slane %v6958, 1
    %v7169 = vrot.slane %v6959, 1
    %v7170 = vsel %vm520, %v7168, %v7169
    %v7171 = vrot.slane %v6960, 1
    %v7172 = vsel %vm520, %v7169, %v7171
    %v7173 = vrot.slane %v6961, 1
    %v7174 = vsel %vm520, %v7171, %v7173
    %v7175 = vrot.slane %v6962, 1
    %v7176 = vrot.slane %v6963, 1
    %v7177 = vsel %vm520, %v7175, %v7176
    %v7178 = vrot.slane %v6964, 1
    %v7179 = vsel %vm520, %v7176, %v7178
    %v7180 = vrot.slane %v6965, 1
    %v7181 = vsel %vm520, %v7178, %v7180
    %v7182 = vrot.slane %v6966, 1
    %v7183 = vrot.slane %v6967, 1
    %v7184 = vsel %vm520, %v7182, %v7183
    %v7185 = vrot.slane %v6968, 1
    %v7186 = vsel %vm520, %v7183, %v7185
    %v7187 = vrot.slane %v6969, 1
    %v7188 = vsel %vm520, %v7185, %v7187
    %v7189 = vrot.slane %v6970, 1
    %v7190 = vrot.slane %v6971, 1
    %v7191 = vsel %vm520, %v7189, %v7190
    %v7192 = vrot.slane %v6972, 1
    %v7193 = vsel %vm520, %v7190, %v7192
    %v7194 = vrot.slane %v6973, 1
    %v7195 = vsel %vm520, %v7192, %v7194
    %v7196 = vrot.slane %v6974, 1
    %v7197 = vrot.slane %v6975, 1
    %v7198 = vsel %vm520, %v7196, %v7197
    %v7199 = vrot.slane %v6976, 1
    %v7200 = vsel %vm520, %v7197, %v7199
    %v7201 = vrot.slane %v6977, 1
    %v7202 = vsel %vm520, %v7199, %v7201
    %v7203 = vrot.slane %v6978, 1
    %v7204 = vrot.slane %v6979, 1
    %v7205 = vsel %vm520, %v7203, %v7204
    %v7206 = vrot.slane %v6980, 1
    %v7207 = vsel %vm520, %v7204, %v7206
    %v7208 = vrot.slane %v6981, 1
    %v7209 = vsel %vm520, %v7206, %v7208
    %v7210 = vrot.slane %v6982, 1
    %v7211 = vrot.slane %v6983, 1
    %v7212 = vsel %vm520, %v7210, %v7211
    %v7213 = vrot.slane %v6984, 1
    %v7214 = vsel %vm520, %v7211, %v7213
    %v7215 = vrot.slane %v6985, 1
    %v7216 = vsel %vm520, %v7213, %v7215
    %v7217 = vrot.slane %v6986, 1
    %v7218 = vrot.slane %v6987, 1
    %v7219 = vsel %vm520, %v7217, %v7218
    %v7220 = vrot.slane %v6988, 1
    %v7221 = vsel %vm520, %v7218, %v7220
    %v7222 = vrot.slane %v6989, 1
    %v7223 = vsel %vm520, %v7220, %v7222
    %v7224 = vrot.slane %v6990, 1
    %v7225 = vrot.slane %v6991, 1
    %v7226 = vsel %vm520, %v7224, %v7225
    %v7227 = vrot.slane %v6992, 1
    %v7228 = vsel %vm520, %v7225, %v7227
    %v7229 = vrot.slane %v6993, 1
    %v7230 = vsel %vm520, %v7227, %v7229
    %v7231 = vrot.slane %v6994, 1
    %v7232 = vrot.slane %v6995, 1
    %v7233 = vsel %vm520, %v7231, %v7232
    %v7234 = vrot.slane %v6996, 1
    %v7235 = vsel %vm520, %v7232, %v7234
    %v7236 = vrot.slane %v6997, 1
    %v7237 = vsel %vm520, %v7234, %v7236
    %v7238 = vrot.slane %v6998, 1
    %v7239 = vrot.slane %v6999, 1
    %v7240 = vsel %vm520, %v7238, %v7239
    %v7241 = vrot.slane %v7000, 1
    %v7242 = vsel %vm520, %v7239, %v7241
    %v7243 = vrot.slane %v7001, 1
    %v7244 = vsel %vm520, %v7241, %v7243
    %v7245 = vrot.slane %v7002, 1
    %v7246 = vrot.slane %v7003, 1
    %v7247 = vsel %vm520, %v7245, %v7246
    %v7248 = vrot.slane %v7004, 1
    %v7249 = vsel %vm520, %v7246, %v7248
    %v7250 = vrot.slane %v7005, 1
    %v7251 = vsel %vm520, %v7248, %v7250
    %v7252 = vrot.slane %v7006, 1
    %v7253 = vrot.slane %v7007, 1
    %v7254 = vsel %vm520, %v7252, %v7253
    %v7255 = vrot.slane %v7008, 1
    %v7256 = vsel %vm520, %v7253, %v7255
    %v7257 = vrot.slane %v7009, 1
    %v7258 = vsel %vm520, %v7255, %v7257
    %v7259 = vrot.slane %v7010, 1
    %v7260 = vrot.slane %v7011, 1
    %v7261 = vsel %vm520, %v7259, %v7260
    %v7262 = vrot.slane %v7012, 1
    %v7263 = vsel %vm520, %v7260, %v7262
    %v7264 = vrot.slane %v7013, 1
    %v7265 = vsel %vm520, %v7262, %v7264
    %v7266 = vrot.slane %v7014, 1
    %v7267 = vrot.slane %v7015, 1
    %v7268 = vsel %vm520, %v7266, %v7267
    %v7269 = vrot.slane %v7016, 1
    %v7270 = vsel %vm520, %v7267, %v7269
    %v7271 = vrot.slane %v7017, 1
    %v7272 = vsel %vm520, %v7269, %v7271
    %v7273 = vrot.slane %v7018, 1
    %v7274 = vrot.slane %v7019, 1
    %v7275 = vsel %vm520, %v7273, %v7274
    %v7276 = vrot.slane %v7020, 1
    %v7277 = vsel %vm520, %v7274, %v7276
    %v7278 = vrot.slane %v7021, 1
    %v7279 = vsel %vm520, %v7276, %v7278
    %v7280 = vrot.slane %v7022, 1
    %v7281 = vrot.slane %v7023, 1
    %v7282 = vsel %vm520, %v7280, %v7281
    %v7283 = vrot.slane %v7024, 1
    %v7284 = vsel %vm520, %v7281, %v7283
    %v7285 = vrot.slane %v7025, 1
    %v7286 = vsel %vm520, %v7283, %v7285
    %v7287 = vrot.slane %v7026, 1
    %v7288 = vrot.slane %v7027, 1
    %v7289 = vsel %vm520, %v7287, %v7288
    %v7290 = vrot.slane %v7028, 1
    %v7291 = vsel %vm520, %v7288, %v7290
    %v7292 = vrot.slane %v7029, 1
    %v7293 = vsel %vm520, %v7290, %v7292
    %v7366 = vadd.f32 %v6860, %v7128
    %v7367 = vadd.f32 %v6861, %v7130
    %v7368 = vadd.f32 %v6862, %v7132
    %v7369 = vadd.f32 %v6863, %v7135
    %v7370 = vadd.f32 %v6864, %v7137
    %v7371 = vadd.f32 %v6865, %v7139
    %v7372 = vadd.f32 %v6866, %v7142
    %v7373 = vadd.f32 %v6867, %v7144
    %v7374 = vadd.f32 %v6868, %v7146
    %v7375 = vadd.f32 %v6869, %v7149
    %v7376 = vadd.f32 %v6870, %v7151
    %v7377 = vadd.f32 %v6871, %v7153
    %v7378 = vadd.f32 %v6872, %v7156
    %v7379 = vadd.f32 %v6873, %v7158
    %v7380 = vadd.f32 %v6874, %v7160
    %v7381 = vadd.f32 %v6875, %v7163
    %v7382 = vadd.f32 %v6876, %v7165
    %v7383 = vadd.f32 %v6877, %v7167
    %v7384 = vadd.f32 %v6878, %v7170
    %v7385 = vadd.f32 %v6879, %v7172
    %v7386 = vadd.f32 %v6880, %v7174
    %v7387 = vadd.f32 %v6881, %v7177
    %v7388 = vadd.f32 %v6882, %v7179
    %v7389 = vadd.f32 %v6883, %v7181
    %v7390 = vadd.f32 %v6884, %v7184
    %v7391 = vadd.f32 %v6885, %v7186
    %v7392 = vadd.f32 %v6886, %v7188
    %v7393 = vadd.f32 %v6887, %v7191
    %v7394 = vadd.f32 %v6888, %v7193
    %v7395 = vadd.f32 %v6889, %v7195
    %v7396 = vadd.f32 %v6890, %v7198
    %v7397 = vadd.f32 %v6891, %v7200
    %v7398 = vadd.f32 %v6892, %v7202
    %v7399 = vadd.f32 %v6893, %v7205
    %v7400 = vadd.f32 %v6894, %v7207
    %v7401 = vadd.f32 %v6895, %v7209
    %v7402 = vadd.f32 %v6896, %v7212
    %v7403 = vadd.f32 %v6897, %v7214
    %v7404 = vadd.f32 %v6898, %v7216
    %v7405 = vadd.f32 %v6899, %v7219
    %v7406 = vadd.f32 %v6900, %v7221
    %v7407 = vadd.f32 %v6901, %v7223
    %v7408 = vadd.f32 %v6902, %v7226
    %v7409 = vadd.f32 %v6903, %v7228
    %v7410 = vadd.f32 %v6904, %v7230
    %v7411 = vadd.f32 %v6905, %v7233
    %v7412 = vadd.f32 %v6906, %v7235
    %v7413 = vadd.f32 %v6907, %v7237
    %v7414 = vadd.f32 %v6908, %v7240
    %v7415 = vadd.f32 %v6909, %v7242
    %v7416 = vadd.f32 %v6910, %v7244
    %v7417 = vadd.f32 %v6911, %v7247
    %v7418 = vadd.f32 %v6912, %v7249
    %v7419 = vadd.f32 %v6913, %v7251
    %v7420 = vadd.f32 %v6914, %v7254
    %v7421 = vadd.f32 %v6915, %v7256
    %v7422 = vadd.f32 %v6916, %v7258
    %v7423 = vadd.f32 %v6917, %v7261
    %v7424 = vadd.f32 %v6918, %v7263
    %v7425 = vadd.f32 %v6919, %v7265
    %v7426 = vadd.f32 %v6920, %v7268
    %v7427 = vadd.f32 %v6921, %v7270
    %v7428 = vadd.f32 %v6922, %v7272
    %v7429 = vadd.f32 %v6923, %v7275
    %v7430 = vadd.f32 %v6924, %v7277
    %v7431 = vadd.f32 %v6925, %v7279
    %v7432 = vadd.f32 %v6926, %v7282
    %v7433 = vadd.f32 %v6927, %v7284
    %v7434 = vadd.f32 %v6928, %v7286
    %v7435 = vadd.f32 %v6929, %v7289
    %v7436 = vadd.f32 %v6930, %v7291
    %v7437 = vadd.f32 %v6931, %v7293
    %s7438 = sld [smem:[#allocation10 + $0x8]]
    %v7439 = vstv %s7438
    %v7440 = vmul.f32 %v4446, %v7439
    %v7441 = vmul.f32 %v4447, %v7439
    %v7442 = vmul.f32 %v4448, %v7439
    %v7443 = vmul.f32 %v4449, %v7439
    %v7444 = vmul.f32 %v4450, %v7439
    %v7445 = vmul.f32 %v4451, %v7439
    %v7446 = vmul.f32 %v4452, %v7439
    %v7447 = vmul.f32 %v4453, %v7439
    %v7448 = vmul.f32 %v4454, %v7439
    %v7449 = vmul.f32 %v4455, %v7439
    %v7450 = vmul.f32 %v4456, %v7439
    %v7451 = vmul.f32 %v4457, %v7439
    %v7452 = vmul.f32 %v4458, %v7439
    %v7453 = vmul.f32 %v4459, %v7439
    %v7454 = vmul.f32 %v4460, %v7439
    %v7455 = vmul.f32 %v4461, %v7439
    %v7456 = vmul.f32 %v4462, %v7439
    %v7457 = vmul.f32 %v4463, %v7439
    %v7458 = vmul.f32 %v4464, %v7439
    %v7459 = vmul.f32 %v4465, %v7439
    %v7460 = vmul.f32 %v4466, %v7439
    %v7461 = vmul.f32 %v4467, %v7439
    %v7462 = vmul.f32 %v4468, %v7439
    %v7463 = vmul.f32 %v4469, %v7439
    %v7464 = vmul.f32 %v4470, %v7439
    %v7465 = vmul.f32 %v4471, %v7439
    %v7466 = vmul.f32 %v4472, %v7439
    %v7467 = vmul.f32 %v4473, %v7439
    %v7468 = vmul.f32 %v4474, %v7439
    %v7469 = vmul.f32 %v4475, %v7439
    %v7470 = vmul.f32 %v4476, %v7439
    %v7471 = vmul.f32 %v4477, %v7439
    %v7472 = vmul.f32 %v4478, %v7439
    %v7473 = vmul.f32 %v4479, %v7439
    %v7474 = vmul.f32 %v4480, %v7439
    %v7475 = vmul.f32 %v4481, %v7439
    %v7476 = vmul.f32 %v4482, %v7439
    %v7477 = vmul.f32 %v4483, %v7439
    %v7478 = vmul.f32 %v4484, %v7439
    %v7479 = vmul.f32 %v4485, %v7439
    %v7480 = vmul.f32 %v4486, %v7439
    %v7481 = vmul.f32 %v4487, %v7439
    %v7482 = vmul.f32 %v4488, %v7439
    %v7483 = vmul.f32 %v4489, %v7439
    %v7484 = vmul.f32 %v4490, %v7439
    %v7485 = vmul.f32 %v4491, %v7439
    %v7486 = vmul.f32 %v4492, %v7439
    %v7487 = vmul.f32 %v4493, %v7439
    %v7488 = vmul.f32 %v4494, %v7439
    %v7489 = vmul.f32 %v4495, %v7439
    %v7490 = vmul.f32 %v4496, %v7439
    %v7491 = vmul.f32 %v4497, %v7439
    %v7492 = vmul.f32 %v4498, %v7439
    %v7493 = vmul.f32 %v4499, %v7439
    %v7494 = vmul.f32 %v4500, %v7439
    %v7495 = vmul.f32 %v4501, %v7439
    %v7496 = vmul.f32 %v4502, %v7439
    %v7497 = vmul.f32 %v4503, %v7439
    %v7498 = vmul.f32 %v4504, %v7439
    %v7499 = vmul.f32 %v4505, %v7439
    %v7500 = vmul.f32 %v4506, %v7439
    %v7501 = vmul.f32 %v4507, %v7439
    %v7502 = vmul.f32 %v4508, %v7439
    %v7503 = vmul.f32 %v4509, %v7439
    %v7504 = vmul.f32 %v4510, %v7439
    %v7505 = vmul.f32 %v4511, %v7439
    %v7506 = vmul.f32 %v4512, %v7439
    %v7507 = vmul.f32 %v4513, %v7439
    %v7508 = vmul.f32 %v4514, %v7439
    %v7509 = vmul.f32 %v4515, %v7439
    %v7510 = vmul.f32 %v4516, %v7439
    %v7511 = vmul.f32 %v4517, %v7439
    %v7512 = vmul.f32 %v4518, %v7439
    %v7513 = vmul.f32 %v4519, %v7439
    %v7514 = vmul.f32 %v4520, %v7439
    %v7515 = vmul.f32 %v4521, %v7439
    %v7516 = vmul.f32 %v4522, %v7439
    %v7517 = vmul.f32 %v4523, %v7439
    %v7518 = vmul.f32 %v4524, %v7439
    %v7519 = vmul.f32 %v4525, %v7439
    %v7520 = vmul.f32 %v4526, %v7439
    %v7521 = vmul.f32 %v4527, %v7439
    %v7522 = vmul.f32 %v4528, %v7439
    %v7523 = vmul.f32 %v4529, %v7439
    %v7524 = vmul.f32 %v4530, %v7439
    %v7525 = vmul.f32 %v4531, %v7439
    %v7526 = vmul.f32 %v4532, %v7439
    %v7527 = vmul.f32 %v4533, %v7439
    %v7528 = vmul.f32 %v4534, %v7439
    %v7529 = vmul.f32 %v4535, %v7439
    %v7530 = vmul.f32 %v4536, %v7439
    %v7531 = vmul.f32 %v4537, %v7439
    %v7532 = vmul.f32 %v4538, %v7439
    %v7533 = vmul.f32 %v4539, %v7439
    %v7534 = vmul.f32 %v4540, %v7439
    %v7535 = vmul.f32 %v4541, %v7439
    %v7632 = vrot.slane %v7440, 2
    %v7633 = vrot.slane %v7441, 2
    %v7634 = vsel %vm1121, %v7632, %v7633
    %v7635 = vrot.slane %v7442, 2
    %v7636 = vsel %vm1121, %v7633, %v7635
    %v7637 = vrot.slane %v7443, 2
    %v7638 = vsel %vm1121, %v7635, %v7637
    %v7639 = vrot.slane %v7444, 2
    %v7640 = vrot.slane %v7445, 2
    %v7641 = vsel %vm1121, %v7639, %v7640
    %v7642 = vrot.slane %v7446, 2
    %v7643 = vsel %vm1121, %v7640, %v7642
    %v7644 = vrot.slane %v7447, 2
    %v7645 = vsel %vm1121, %v7642, %v7644
    %v7646 = vrot.slane %v7448, 2
    %v7647 = vrot.slane %v7449, 2
    %v7648 = vsel %vm1121, %v7646, %v7647
    %v7649 = vrot.slane %v7450, 2
    %v7650 = vsel %vm1121, %v7647, %v7649
    %v7651 = vrot.slane %v7451, 2
    %v7652 = vsel %vm1121, %v7649, %v7651
    %v7653 = vrot.slane %v7452, 2
    %v7654 = vrot.slane %v7453, 2
    %v7655 = vsel %vm1121, %v7653, %v7654
    %v7656 = vrot.slane %v7454, 2
    %v7657 = vsel %vm1121, %v7654, %v7656
    %v7658 = vrot.slane %v7455, 2
    %v7659 = vsel %vm1121, %v7656, %v7658
    %v7660 = vrot.slane %v7456, 2
    %v7661 = vrot.slane %v7457, 2
    %v7662 = vsel %vm1121, %v7660, %v7661
    %v7663 = vrot.slane %v7458, 2
    %v7664 = vsel %vm1121, %v7661, %v7663
    %v7665 = vrot.slane %v7459, 2
    %v7666 = vsel %vm1121, %v7663, %v7665
    %v7667 = vrot.slane %v7460, 2
    %v7668 = vrot.slane %v7461, 2
    %v7669 = vsel %vm1121, %v7667, %v7668
    %v7670 = vrot.slane %v7462, 2
    %v7671 = vsel %vm1121, %v7668, %v7670
    %v7672 = vrot.slane %v7463, 2
    %v7673 = vsel %vm1121, %v7670, %v7672
    %v7674 = vrot.slane %v7464, 2
    %v7675 = vrot.slane %v7465, 2
    %v7676 = vsel %vm1121, %v7674, %v7675
    %v7677 = vrot.slane %v7466, 2
    %v7678 = vsel %vm1121, %v7675, %v7677
    %v7679 = vrot.slane %v7467, 2
    %v7680 = vsel %vm1121, %v7677, %v7679
    %v7681 = vrot.slane %v7468, 2
    %v7682 = vrot.slane %v7469, 2
    %v7683 = vsel %vm1121, %v7681, %v7682
    %v7684 = vrot.slane %v7470, 2
    %v7685 = vsel %vm1121, %v7682, %v7684
    %v7686 = vrot.slane %v7471, 2
    %v7687 = vsel %vm1121, %v7684, %v7686
    %v7688 = vrot.slane %v7472, 2
    %v7689 = vrot.slane %v7473, 2
    %v7690 = vsel %vm1121, %v7688, %v7689
    %v7691 = vrot.slane %v7474, 2
    %v7692 = vsel %vm1121, %v7689, %v7691
    %v7693 = vrot.slane %v7475, 2
    %v7694 = vsel %vm1121, %v7691, %v7693
    %v7695 = vrot.slane %v7476, 2
    %v7696 = vrot.slane %v7477, 2
    %v7697 = vsel %vm1121, %v7695, %v7696
    %v7698 = vrot.slane %v7478, 2
    %v7699 = vsel %vm1121, %v7696, %v7698
    %v7700 = vrot.slane %v7479, 2
    %v7701 = vsel %vm1121, %v7698, %v7700
    %v7702 = vrot.slane %v7480, 2
    %v7703 = vrot.slane %v7481, 2
    %v7704 = vsel %vm1121, %v7702, %v7703
    %v7705 = vrot.slane %v7482, 2
    %v7706 = vsel %vm1121, %v7703, %v7705
    %v7707 = vrot.slane %v7483, 2
    %v7708 = vsel %vm1121, %v7705, %v7707
    %v7709 = vrot.slane %v7484, 2
    %v7710 = vrot.slane %v7485, 2
    %v7711 = vsel %vm1121, %v7709, %v7710
    %v7712 = vrot.slane %v7486, 2
    %v7713 = vsel %vm1121, %v7710, %v7712
    %v7714 = vrot.slane %v7487, 2
    %v7715 = vsel %vm1121, %v7712, %v7714
    %v7716 = vrot.slane %v7488, 2
    %v7717 = vrot.slane %v7489, 2
    %v7718 = vsel %vm1121, %v7716, %v7717
    %v7719 = vrot.slane %v7490, 2
    %v7720 = vsel %vm1121, %v7717, %v7719
    %v7721 = vrot.slane %v7491, 2
    %v7722 = vsel %vm1121, %v7719, %v7721
    %v7723 = vrot.slane %v7492, 2
    %v7724 = vrot.slane %v7493, 2
    %v7725 = vsel %vm1121, %v7723, %v7724
    %v7726 = vrot.slane %v7494, 2
    %v7727 = vsel %vm1121, %v7724, %v7726
    %v7728 = vrot.slane %v7495, 2
    %v7729 = vsel %vm1121, %v7726, %v7728
    %v7730 = vrot.slane %v7496, 2
    %v7731 = vrot.slane %v7497, 2
    %v7732 = vsel %vm1121, %v7730, %v7731
    %v7733 = vrot.slane %v7498, 2
    %v7734 = vsel %vm1121, %v7731, %v7733
    %v7735 = vrot.slane %v7499, 2
    %v7736 = vsel %vm1121, %v7733, %v7735
    %v7737 = vrot.slane %v7500, 2
    %v7738 = vrot.slane %v7501, 2
    %v7739 = vsel %vm1121, %v7737, %v7738
    %v7740 = vrot.slane %v7502, 2
    %v7741 = vsel %vm1121, %v7738, %v7740
    %v7742 = vrot.slane %v7503, 2
    %v7743 = vsel %vm1121, %v7740, %v7742
    %v7744 = vrot.slane %v7504, 2
    %v7745 = vrot.slane %v7505, 2
    %v7746 = vsel %vm1121, %v7744, %v7745
    %v7747 = vrot.slane %v7506, 2
    %v7748 = vsel %vm1121, %v7745, %v7747
    %v7749 = vrot.slane %v7507, 2
    %v7750 = vsel %vm1121, %v7747, %v7749
    %v7751 = vrot.slane %v7508, 2
    %v7752 = vrot.slane %v7509, 2
    %v7753 = vsel %vm1121, %v7751, %v7752
    %v7754 = vrot.slane %v7510, 2
    %v7755 = vsel %vm1121, %v7752, %v7754
    %v7756 = vrot.slane %v7511, 2
    %v7757 = vsel %vm1121, %v7754, %v7756
    %v7758 = vrot.slane %v7512, 2
    %v7759 = vrot.slane %v7513, 2
    %v7760 = vsel %vm1121, %v7758, %v7759
    %v7761 = vrot.slane %v7514, 2
    %v7762 = vsel %vm1121, %v7759, %v7761
    %v7763 = vrot.slane %v7515, 2
    %v7764 = vsel %vm1121, %v7761, %v7763
    %v7765 = vrot.slane %v7516, 2
    %v7766 = vrot.slane %v7517, 2
    %v7767 = vsel %vm1121, %v7765, %v7766
    %v7768 = vrot.slane %v7518, 2
    %v7769 = vsel %vm1121, %v7766, %v7768
    %v7770 = vrot.slane %v7519, 2
    %v7771 = vsel %vm1121, %v7768, %v7770
    %v7772 = vrot.slane %v7520, 2
    %v7773 = vrot.slane %v7521, 2
    %v7774 = vsel %vm1121, %v7772, %v7773
    %v7775 = vrot.slane %v7522, 2
    %v7776 = vsel %vm1121, %v7773, %v7775
    %v7777 = vrot.slane %v7523, 2
    %v7778 = vsel %vm1121, %v7775, %v7777
    %v7779 = vrot.slane %v7524, 2
    %v7780 = vrot.slane %v7525, 2
    %v7781 = vsel %vm1121, %v7779, %v7780
    %v7782 = vrot.slane %v7526, 2
    %v7783 = vsel %vm1121, %v7780, %v7782
    %v7784 = vrot.slane %v7527, 2
    %v7785 = vsel %vm1121, %v7782, %v7784
    %v7786 = vrot.slane %v7528, 2
    %v7787 = vrot.slane %v7529, 2
    %v7788 = vsel %vm1121, %v7786, %v7787
    %v7789 = vrot.slane %v7530, 2
    %v7790 = vsel %vm1121, %v7787, %v7789
    %v7791 = vrot.slane %v7531, 2
    %v7792 = vsel %vm1121, %v7789, %v7791
    %v7793 = vrot.slane %v7532, 2
    %v7794 = vrot.slane %v7533, 2
    %v7795 = vsel %vm1121, %v7793, %v7794
    %v7796 = vrot.slane %v7534, 2
    %v7797 = vsel %vm1121, %v7794, %v7796
    %v7798 = vrot.slane %v7535, 2
    %v7799 = vsel %vm1121, %v7796, %v7798
    %v7872 = vadd.f32 %v7366, %v7634
    %v7873 = vadd.f32 %v7367, %v7636
    %v7874 = vadd.f32 %v7368, %v7638
    %v7875 = vadd.f32 %v7369, %v7641
    %v7876 = vadd.f32 %v7370, %v7643
    %v7877 = vadd.f32 %v7371, %v7645
    %v7878 = vadd.f32 %v7372, %v7648
    %v7879 = vadd.f32 %v7373, %v7650
    %v7880 = vadd.f32 %v7374, %v7652
    %v7881 = vadd.f32 %v7375, %v7655
    %v7882 = vadd.f32 %v7376, %v7657
    %v7883 = vadd.f32 %v7377, %v7659
    %v7884 = vadd.f32 %v7378, %v7662
    %v7885 = vadd.f32 %v7379, %v7664
    %v7886 = vadd.f32 %v7380, %v7666
    %v7887 = vadd.f32 %v7381, %v7669
    %v7888 = vadd.f32 %v7382, %v7671
    %v7889 = vadd.f32 %v7383, %v7673
    %v7890 = vadd.f32 %v7384, %v7676
    %v7891 = vadd.f32 %v7385, %v7678
    %v7892 = vadd.f32 %v7386, %v7680
    %v7893 = vadd.f32 %v7387, %v7683
    %v7894 = vadd.f32 %v7388, %v7685
    %v7895 = vadd.f32 %v7389, %v7687
    %v7896 = vadd.f32 %v7390, %v7690
    %v7897 = vadd.f32 %v7391, %v7692
    %v7898 = vadd.f32 %v7392, %v7694
    %v7899 = vadd.f32 %v7393, %v7697
    %v7900 = vadd.f32 %v7394, %v7699
    %v7901 = vadd.f32 %v7395, %v7701
    %v7902 = vadd.f32 %v7396, %v7704
    %v7903 = vadd.f32 %v7397, %v7706
    %v7904 = vadd.f32 %v7398, %v7708
    %v7905 = vadd.f32 %v7399, %v7711
    %v7906 = vadd.f32 %v7400, %v7713
    %v7907 = vadd.f32 %v7401, %v7715
    %v7908 = vadd.f32 %v7402, %v7718
    %v7909 = vadd.f32 %v7403, %v7720
    %v7910 = vadd.f32 %v7404, %v7722
    %v7911 = vadd.f32 %v7405, %v7725
    %v7912 = vadd.f32 %v7406, %v7727
    %v7913 = vadd.f32 %v7407, %v7729
    %v7914 = vadd.f32 %v7408, %v7732
    %v7915 = vadd.f32 %v7409, %v7734
    %v7916 = vadd.f32 %v7410, %v7736
    %v7917 = vadd.f32 %v7411, %v7739
    %v7918 = vadd.f32 %v7412, %v7741
    %v7919 = vadd.f32 %v7413, %v7743
    %v7920 = vadd.f32 %v7414, %v7746
    %v7921 = vadd.f32 %v7415, %v7748
    %v7922 = vadd.f32 %v7416, %v7750
    %v7923 = vadd.f32 %v7417, %v7753
    %v7924 = vadd.f32 %v7418, %v7755
    %v7925 = vadd.f32 %v7419, %v7757
    %v7926 = vadd.f32 %v7420, %v7760
    %v7927 = vadd.f32 %v7421, %v7762
    %v7928 = vadd.f32 %v7422, %v7764
    %v7929 = vadd.f32 %v7423, %v7767
    %v7930 = vadd.f32 %v7424, %v7769
    %v7931 = vadd.f32 %v7425, %v7771
    %v7932 = vadd.f32 %v7426, %v7774
    %v7933 = vadd.f32 %v7427, %v7776
    %v7934 = vadd.f32 %v7428, %v7778
    %v7935 = vadd.f32 %v7429, %v7781
    %v7936 = vadd.f32 %v7430, %v7783
    %v7937 = vadd.f32 %v7431, %v7785
    %v7938 = vadd.f32 %v7432, %v7788
    %v7939 = vadd.f32 %v7433, %v7790
    %v7940 = vadd.f32 %v7434, %v7792
    %v7941 = vadd.f32 %v7435, %v7795
    %v7942 = vadd.f32 %v7436, %v7797
    %v7943 = vadd.f32 %v7437, %v7799
    %s7944 = sld [smem:[#allocation4]]
    %v7945 = vstv %s7944
    %v7946 = vadd.f32 %v7872, %v7945
    %v7947 = vadd.f32 %v7873, %v7945
    %v7948 = vadd.f32 %v7874, %v7945
    %v7949 = vadd.f32 %v7875, %v7945
    %v7950 = vadd.f32 %v7876, %v7945
    %v7951 = vadd.f32 %v7877, %v7945
    %v7952 = vadd.f32 %v7878, %v7945
    %v7953 = vadd.f32 %v7879, %v7945
    %v7954 = vadd.f32 %v7880, %v7945
    %v7955 = vadd.f32 %v7881, %v7945
    %v7956 = vadd.f32 %v7882, %v7945
    %v7957 = vadd.f32 %v7883, %v7945
    %v7958 = vadd.f32 %v7884, %v7945
    %v7959 = vadd.f32 %v7885, %v7945
    %v7960 = vadd.f32 %v7886, %v7945
    %v7961 = vadd.f32 %v7887, %v7945
    %v7962 = vadd.f32 %v7888, %v7945
    %v7963 = vadd.f32 %v7889, %v7945
    %v7964 = vadd.f32 %v7890, %v7945
    %v7965 = vadd.f32 %v7891, %v7945
    %v7966 = vadd.f32 %v7892, %v7945
    %v7967 = vadd.f32 %v7893, %v7945
    %v7968 = vadd.f32 %v7894, %v7945
    %v7969 = vadd.f32 %v7895, %v7945
    %v7970 = vadd.f32 %v7896, %v7945
    %v7971 = vadd.f32 %v7897, %v7945
    %v7972 = vadd.f32 %v7898, %v7945
    %v7973 = vadd.f32 %v7899, %v7945
    %v7974 = vadd.f32 %v7900, %v7945
    %v7975 = vadd.f32 %v7901, %v7945
    %v7976 = vadd.f32 %v7902, %v7945
    %v7977 = vadd.f32 %v7903, %v7945
    %v7978 = vadd.f32 %v7904, %v7945
    %v7979 = vadd.f32 %v7905, %v7945
    %v7980 = vadd.f32 %v7906, %v7945
    %v7981 = vadd.f32 %v7907, %v7945
    %v7982 = vadd.f32 %v7908, %v7945
    %v7983 = vadd.f32 %v7909, %v7945
    %v7984 = vadd.f32 %v7910, %v7945
    %v7985 = vadd.f32 %v7911, %v7945
    %v7986 = vadd.f32 %v7912, %v7945
    %v7987 = vadd.f32 %v7913, %v7945
    %v7988 = vadd.f32 %v7914, %v7945
    %v7989 = vadd.f32 %v7915, %v7945
    %v7990 = vadd.f32 %v7916, %v7945
    %v7991 = vadd.f32 %v7917, %v7945
    %v7992 = vadd.f32 %v7918, %v7945
    %v7993 = vadd.f32 %v7919, %v7945
    %v7994 = vadd.f32 %v7920, %v7945
    %v7995 = vadd.f32 %v7921, %v7945
    %v7996 = vadd.f32 %v7922, %v7945
    %v7997 = vadd.f32 %v7923, %v7945
    %v7998 = vadd.f32 %v7924, %v7945
    %v7999 = vadd.f32 %v7925, %v7945
    %v8000 = vadd.f32 %v7926, %v7945
    %v8001 = vadd.f32 %v7927, %v7945
    %v8002 = vadd.f32 %v7928, %v7945
    %v8003 = vadd.f32 %v7929, %v7945
    %v8004 = vadd.f32 %v7930, %v7945
    %v8005 = vadd.f32 %v7931, %v7945
    %v8006 = vadd.f32 %v7932, %v7945
    %v8007 = vadd.f32 %v7933, %v7945
    %v8008 = vadd.f32 %v7934, %v7945
    %v8009 = vadd.f32 %v7935, %v7945
    %v8010 = vadd.f32 %v7936, %v7945
    %v8011 = vadd.f32 %v7937, %v7945
    %v8012 = vadd.f32 %v7938, %v7945
    %v8013 = vadd.f32 %v7939, %v7945
    %v8014 = vadd.f32 %v7940, %v7945
    %v8015 = vadd.f32 %v7941, %v7945
    %v8016 = vadd.f32 %v7942, %v7945
    %v8017 = vadd.f32 %v7943, %v7945
    %v8018 = vmax.f32 %v7946, 0.0
    %v8019 = vmax.f32 %v7947, 0.0
    %v8020 = vmax.f32 %v7948, 0.0
    %v8021 = vmax.f32 %v7949, 0.0
    %v8022 = vmax.f32 %v7950, 0.0
    %v8023 = vmax.f32 %v7951, 0.0
    %v8024 = vmax.f32 %v7952, 0.0
    %v8025 = vmax.f32 %v7953, 0.0
    %v8026 = vmax.f32 %v7954, 0.0
    %v8027 = vmax.f32 %v7955, 0.0
    %v8028 = vmax.f32 %v7956, 0.0
    %v8029 = vmax.f32 %v7957, 0.0
    %v8030 = vmax.f32 %v7958, 0.0
    %v8031 = vmax.f32 %v7959, 0.0
    %v8032 = vmax.f32 %v7960, 0.0
    %v8033 = vmax.f32 %v7961, 0.0
    %v8034 = vmax.f32 %v7962, 0.0
    %v8035 = vmax.f32 %v7963, 0.0
    %v8036 = vmax.f32 %v7964, 0.0
    %v8037 = vmax.f32 %v7965, 0.0
    %v8038 = vmax.f32 %v7966, 0.0
    %v8039 = vmax.f32 %v7967, 0.0
    %v8040 = vmax.f32 %v7968, 0.0
    %v8041 = vmax.f32 %v7969, 0.0
    %v8042 = vmax.f32 %v7970, 0.0
    %v8043 = vmax.f32 %v7971, 0.0
    %v8044 = vmax.f32 %v7972, 0.0
    %v8045 = vmax.f32 %v7973, 0.0
    %v8046 = vmax.f32 %v7974, 0.0
    %v8047 = vmax.f32 %v7975, 0.0
    %v8048 = vmax.f32 %v7976, 0.0
    %v8049 = vmax.f32 %v7977, 0.0
    %v8050 = vmax.f32 %v7978, 0.0
    %v8051 = vmax.f32 %v7979, 0.0
    %v8052 = vmax.f32 %v7980, 0.0
    %v8053 = vmax.f32 %v7981, 0.0
    %v8054 = vmax.f32 %v7982, 0.0
    %v8055 = vmax.f32 %v7983, 0.0
    %v8056 = vmax.f32 %v7984, 0.0
    %v8057 = vmax.f32 %v7985, 0.0
    %v8058 = vmax.f32 %v7986, 0.0
    %v8059 = vmax.f32 %v7987, 0.0
    %v8060 = vmax.f32 %v7988, 0.0
    %v8061 = vmax.f32 %v7989, 0.0
    %v8062 = vmax.f32 %v7990, 0.0
    %v8063 = vmax.f32 %v7991, 0.0
    %v8064 = vmax.f32 %v7992, 0.0
    %v8065 = vmax.f32 %v7993, 0.0
    %v8066 = vmax.f32 %v7994, 0.0
    %v8067 = vmax.f32 %v7995, 0.0
    %v8068 = vmax.f32 %v7996, 0.0
    %v8069 = vmax.f32 %v7997, 0.0
    %v8070 = vmax.f32 %v7998, 0.0
    %v8071 = vmax.f32 %v7999, 0.0
    %v8072 = vmax.f32 %v8000, 0.0
    %v8073 = vmax.f32 %v8001, 0.0
    %v8074 = vmax.f32 %v8002, 0.0
    %v8075 = vmax.f32 %v8003, 0.0
    %v8076 = vmax.f32 %v8004, 0.0
    %v8077 = vmax.f32 %v8005, 0.0
    %v8078 = vmax.f32 %v8006, 0.0
    %v8079 = vmax.f32 %v8007, 0.0
    %v8080 = vmax.f32 %v8008, 0.0
    %v8081 = vmax.f32 %v8009, 0.0
    %v8082 = vmax.f32 %v8010, 0.0
    %v8083 = vmax.f32 %v8011, 0.0
    %v8084 = vmax.f32 %v8012, 0.0
    %v8085 = vmax.f32 %v8013, 0.0
    %v8086 = vmax.f32 %v8014, 0.0
    %v8087 = vmax.f32 %v8015, 0.0
    %v8088 = vmax.f32 %v8016, 0.0
    %v8089 = vmax.f32 %v8017, 0.0
    %v8090 = vmax.f32 %v8018, %v8021
    %v8091 = vmax.f32 %v8019, %v8022
    %v8092 = vmax.f32 %v8020, %v8023
    %8093 = vst [vmem:[#allocation2] sm:$0xff] %v8090
    %8094 = vst [vmem:[#allocation2 + $0x8] sm:$0xff] %v8091
    %8095 = vst [vmem:[#allocation2 + $0x10] sm:$0xff] %v8092
    %v8096 = vmax.f32 %v8024, %v8027
    %v8097 = vmax.f32 %v8025, %v8028
    %v8098 = vmax.f32 %v8026, %v8029
    %8099 = vst [vmem:[#allocation2 + $0x18] sm:$0xff] %v8096
    %8100 = vst [vmem:[#allocation2 + $0x20] sm:$0xff] %v8097
    %8101 = vst [vmem:[#allocation2 + $0x28] sm:$0xff] %v8098
    %v8102 = vmax.f32 %v8030, %v8033
    %v8103 = vmax.f32 %v8031, %v8034
    %v8104 = vmax.f32 %v8032, %v8035
    %8105 = vst [vmem:[#allocation2 + $0x30] sm:$0xff] %v8102
    %8106 = vst [vmem:[#allocation2 + $0x38] sm:$0xff] %v8103
    %8107 = vst [vmem:[#allocation2 + $0x40] sm:$0xff] %v8104
    %v8108 = vmax.f32 %v8036, %v8039
    %v8109 = vmax.f32 %v8037, %v8040
    %v8110 = vmax.f32 %v8038, %v8041
    %8111 = vst [vmem:[#allocation2 + $0x48] sm:$0xff] %v8108
    %8112 = vst [vmem:[#allocation2 + $0x50] sm:$0xff] %v8109
    %8113 = vst [vmem:[#allocation2 + $0x58] sm:$0xff] %v8110
    %v8114 = vmax.f32 %v8042, %v8045
    %v8115 = vmax.f32 %v8043, %v8046
    %v8116 = vmax.f32 %v8044, %v8047
    %8117 = vst [vmem:[#allocation2 + $0x60] sm:$0xff] %v8114
    %8118 = vst [vmem:[#allocation2 + $0x68] sm:$0xff] %v8115
    %8119 = vst [vmem:[#allocation2 + $0x70] sm:$0xff] %v8116
    %v8120 = vmax.f32 %v8048, %v8051
    %v8121 = vmax.f32 %v8049, %v8052
    %v8122 = vmax.f32 %v8050, %v8053
    %8123 = vst [vmem:[#allocation2 + $0x78] sm:$0xff] %v8120
    %8124 = vst [vmem:[#allocation2 + $0x80] sm:$0xff] %v8121
    %8125 = vst [vmem:[#allocation2 + $0x88] sm:$0xff] %v8122
    %v8126 = vmax.f32 %v8054, %v8057
    %v8127 = vmax.f32 %v8055, %v8058
    %v8128 = vmax.f32 %v8056, %v8059
    %8129 = vst [vmem:[#allocation2 + $0x90] sm:$0xff] %v8126
    %8130 = vst [vmem:[#allocation2 + $0x98] sm:$0xff] %v8127
    %8131 = vst [vmem:[#allocation2 + $0xa0] sm:$0xff] %v8128
    %v8132 = vmax.f32 %v8060, %v8063
    %v8133 = vmax.f32 %v8061, %v8064
    %v8134 = vmax.f32 %v8062, %v8065
    %8135 = vst [vmem:[#allocation2 + $0xa8] sm:$0xff] %v8132
    %8136 = vst [vmem:[#allocation2 + $0xb0] sm:$0xff] %v8133
    %8137 = vst [vmem:[#allocation2 + $0xb8] sm:$0xff] %v8134
    %v8138 = vmax.f32 %v8066, %v8069
    %v8139 = vmax.f32 %v8067, %v8070
    %v8140 = vmax.f32 %v8068, %v8071
    %8141 = vst [vmem:[#allocation2 + $0xc0] sm:$0xff] %v8138
    %8142 = vst [vmem:[#allocation2 + $0xc8] sm:$0xff] %v8139
    %8143 = vst [vmem:[#allocation2 + $0xd0] sm:$0xff] %v8140
    %v8144 = vmax.f32 %v8072, %v8075
    %v8145 = vmax.f32 %v8073, %v8076
    %v8146 = vmax.f32 %v8074, %v8077
    %8147 = vst [vmem:[#allocation2 + $0xd8] sm:$0xff] %v8144
    %8148 = vst [vmem:[#allocation2 + $0xe0] sm:$0xff] %v8145
    %8149 = vst [vmem:[#allocation2 + $0xe8] sm:$0xff] %v8146
    %v8150 = vmax.f32 %v8078, %v8081
    %v8151 = vmax.f32 %v8079, %v8082
    %v8152 = vmax.f32 %v8080, %v8083
    %8153 = vst [vmem:[#allocation2 + $0xf0] sm:$0xff] %v8150
    %8154 = vst [vmem:[#allocation2 + $0xf8] sm:$0xff] %v8151
    %8155 = vst [vmem:[#allocation2 + $0x100] sm:$0xff] %v8152
    %v8156 = vmax.f32 %v8084, %v8087
    %v8157 = vmax.f32 %v8085, %v8088
    %v8158 = vmax.f32 %v8086, %v8089
    %8159 = vst [vmem:[#allocation2 + $0x108] sm:$0xff] %v8156
    %8160 = vst [vmem:[#allocation2 + $0x110] sm:$0xff] %v8157
    %8161 = vst [vmem:[#allocation2 + $0x118] sm:$0xff] %v8158
    %v8162 = vld [vmem:[#allocation2] ss:$2 sm:$0xff]
    %s8163 = scalar_lea.vmem [#allocation2], 16
    %v8164 = vld [vmem:[%s8163] ss:$2 sm:$0xff]
    %s8165 = scalar_lea.vmem [#allocation2], 32
    %v8166 = vld [vmem:[%s8165] ss:$2 sm:$0xff]
    %s8167 = scalar_lea.vmem [#allocation2], 48
    %v8168 = vld [vmem:[%s8167] ss:$2 sm:$0xff]
    %s8169 = scalar_lea.vmem [#allocation2], 64
    %v8170 = vld [vmem:[%s8169] ss:$2 sm:$0xff]
    %s8171 = scalar_lea.vmem [#allocation2], 80
    %v8172 = vld [vmem:[%s8171] ss:$2 sm:$0xff]
    %s8173 = scalar_lea.vmem [#allocation2], 96
    %v8174 = vld [vmem:[%s8173] ss:$2 sm:$0xff]
    %s8175 = scalar_lea.vmem [#allocation2], 112
    %v8176 = vld [vmem:[%s8175] ss:$2 sm:$0xff]
    %s8177 = scalar_lea.vmem [#allocation2], 128
    %v8178 = vld [vmem:[%s8177] ss:$2 sm:$0xff]
    %s8179 = scalar_lea.vmem [#allocation2], 144
    %v8180 = vld [vmem:[%s8179] ss:$2 sm:$0xff]
    %s8181 = scalar_lea.vmem [#allocation2], 160
    %v8182 = vld [vmem:[%s8181] ss:$2 sm:$0xff]
    %s8183 = scalar_lea.vmem [#allocation2], 176
    %v8184 = vld [vmem:[%s8183] ss:$2 sm:$0xff]
    %s8185 = scalar_lea.vmem [#allocation2], 192
    %v8186 = vld [vmem:[%s8185] ss:$2 sm:$0xff]
    %s8187 = scalar_lea.vmem [#allocation2], 208
    %v8188 = vld [vmem:[%s8187] ss:$2 sm:$0xff]
    %s8189 = scalar_lea.vmem [#allocation2], 224
    %v8190 = vld [vmem:[%s8189] ss:$2 sm:$0xff]
    %s8191 = scalar_lea.vmem [#allocation2], 240
    %v8192 = vld [vmem:[%s8191] ss:$2 sm:$0xff]
    %s8193 = scalar_lea.vmem [#allocation2], 256
    %v8194 = vld [vmem:[%s8193] ss:$2 sm:$0xff]
    %s8195 = scalar_lea.vmem [#allocation2], 272
    %v8196 = vld [vmem:[%s8195] ss:$2 sm:$0xff]
    %s8197 = scalar_lea.vmem [#allocation2], 1
    %v8198 = vld [vmem:[%s8197] ss:$2 sm:$0xff]
    %s8199 = scalar_lea.vmem [#allocation2], 17
    %v8200 = vld [vmem:[%s8199] ss:$2 sm:$0xff]
    %s8201 = scalar_lea.vmem [#allocation2], 33
    %v8202 = vld [vmem:[%s8201] ss:$2 sm:$0xff]
    %s8203 = scalar_lea.vmem [#allocation2], 49
    %v8204 = vld [vmem:[%s8203] ss:$2 sm:$0xff]
    %s8205 = scalar_lea.vmem [#allocation2], 65
    %v8206 = vld [vmem:[%s8205] ss:$2 sm:$0xff]
    %s8207 = scalar_lea.vmem [#allocation2], 81
    %v8208 = vld [vmem:[%s8207] ss:$2 sm:$0xff]
    %s8209 = scalar_lea.vmem [#allocation2], 97
    %v8210 = vld [vmem:[%s8209] ss:$2 sm:$0xff]
    %s8211 = scalar_lea.vmem [#allocation2], 113
    %v8212 = vld [vmem:[%s8211] ss:$2 sm:$0xff]
    %s8213 = scalar_lea.vmem [#allocation2], 129
    %v8214 = vld [vmem:[%s8213] ss:$2 sm:$0xff]
    %s8215 = scalar_lea.vmem [#allocation2], 145
    %v8216 = vld [vmem:[%s8215] ss:$2 sm:$0xff]
    %s8217 = scalar_lea.vmem [#allocation2], 161
    %v8218 = vld [vmem:[%s8217] ss:$2 sm:$0xff]
    %s8219 = scalar_lea.vmem [#allocation2], 177
    %v8220 = vld [vmem:[%s8219] ss:$2 sm:$0xff]
    %s8221 = scalar_lea.vmem [#allocation2], 193
    %v8222 = vld [vmem:[%s8221] ss:$2 sm:$0xff]
    %s8223 = scalar_lea.vmem [#allocation2], 209
    %v8224 = vld [vmem:[%s8223] ss:$2 sm:$0xff]
    %s8225 = scalar_lea.vmem [#allocation2], 225
    %v8226 = vld [vmem:[%s8225] ss:$2 sm:$0xff]
    %s8227 = scalar_lea.vmem [#allocation2], 241
    %v8228 = vld [vmem:[%s8227] ss:$2 sm:$0xff]
    %s8229 = scalar_lea.vmem [#allocation2], 257
    %v8230 = vld [vmem:[%s8229] ss:$2 sm:$0xff]
    %s8231 = scalar_lea.vmem [#allocation2], 273
    %v8232 = vld [vmem:[%s8231] ss:$2 sm:$0xff]
    %v8233 = vmax.f32 %v8162, %v8198
    %v8234 = vmax.f32 %v8164, %v8200
    %v8235 = vmax.f32 %v8166, %v8202
    %v8236 = vmax.f32 %v8168, %v8204
    %v8237 = vmax.f32 %v8170, %v8206
    %v8238 = vmax.f32 %v8172, %v8208
    %v8239 = vmax.f32 %v8174, %v8210
    %v8240 = vmax.f32 %v8176, %v8212
    %v8241 = vmax.f32 %v8178, %v8214
    %v8242 = vmax.f32 %v8180, %v8216
    %v8243 = vmax.f32 %v8182, %v8218
    %v8244 = vmax.f32 %v8184, %v8220
    %v8245 = vmax.f32 %v8186, %v8222
    %v8246 = vmax.f32 %v8188, %v8224
    %v8247 = vmax.f32 %v8190, %v8226
    %v8248 = vmax.f32 %v8192, %v8228
    %v8249 = vmax.f32 %v8194, %v8230
    %v8250 = vmax.f32 %v8196, %v8232
    %v8251 = vld [vmem:[#allocation12] sm:$0xff]
    %v8252 = vld [vmem:[#allocation12 + $0x8] sm:$0xff]
    %v8253 = vld [vmem:[#allocation12 + $0x10] sm:$0xff]
    %v8254 = vld [vmem:[#allocation12 + $0x18] sm:$0xff]
    %v8255 = vld [vmem:[#allocation12 + $0x20] sm:$0xff]
    %v8256 = vld [vmem:[#allocation12 + $0x28] sm:$0xff]
    %v8257 = vld [vmem:[#allocation12 + $0x30] sm:$0xff]
    %v8258 = vld [vmem:[#allocation12 + $0x38] sm:$0xff]
    %v8259 = vld [vmem:[#allocation12 + $0x40] sm:$0xff]
    %v8260 = vld [vmem:[#allocation12 + $0x48] sm:$0xff]
    %v8261 = vld [vmem:[#allocation12 + $0x50] sm:$0xff]
    %v8262 = vld [vmem:[#allocation12 + $0x58] sm:$0xff]
    %v8263 = vld [vmem:[#allocation12 + $0x60] sm:$0xff]
    %v8264 = vld [vmem:[#allocation12 + $0x68] sm:$0xff]
    %v8265 = vld [vmem:[#allocation12 + $0x70] sm:$0xff]
    %v8266 = vld [vmem:[#allocation12 + $0x78] sm:$0xff]
    %v8267 = vld [vmem:[%s6] sm:$0xff]
    %v8268 = vld [vmem:[%s6 + $0x8] sm:$0xff]
    %v8269 = vld [vmem:[%s6 + $0x10] sm:$0xff]
    %v8270 = vld [vmem:[%s6 + $0x18] sm:$0xff]
    %v8271 = vld [vmem:[%s6 + $0x20] sm:$0xff]
    %v8272 = vld [vmem:[%s6 + $0x28] sm:$0xff]
    %v8273 = vld [vmem:[%s6 + $0x30] sm:$0xff]
    %v8274 = vld [vmem:[%s6 + $0x38] sm:$0xff]
    %8276 = vset.pattern.permute.xlu0 0
    %8277 = vperm.xlu0 %8276, %v8267
    %v8278 = vpop.permute.xlu0 %8277
    %8281 = vset.pattern.permute.xlu0 0
    %8282 = vperm.xlu0 %8281, %v8268
    %v8283 = vpop.permute.xlu0 %8282
    %8286 = vset.pattern.permute.xlu0 0
    %8287 = vperm.xlu0 %8286, %v8269
    %v8288 = vpop.permute.xlu0 %8287
    %8291 = vset.pattern.permute.xlu0 0
    %8292 = vperm.xlu0 %8291, %v8270
    %v8293 = vpop.permute.xlu0 %8292
    %8296 = vset.pattern.permute.xlu0 0
    %8297 = vperm.xlu0 %8296, %v8271
    %v8298 = vpop.permute.xlu0 %8297
    %8301 = vset.pattern.permute.xlu0 0
    %8302 = vperm.xlu0 %8301, %v8272
    %v8303 = vpop.permute.xlu0 %8302
    %8306 = vset.pattern.permute.xlu0 0
    %8307 = vperm.xlu0 %8306, %v8273
    %v8308 = vpop.permute.xlu0 %8307
    %8311 = vset.pattern.permute.xlu0 0
    %8312 = vperm.xlu0 %8311, %v8274
    %v8313 = vpop.permute.xlu0 %8312
    %vm8315 = vcmask 130048
    %v8317 = vsel %vm8315, %v8252, 0
    %v8320 = vsel %vm8315, %v8254, 0
    %v8323 = vsel %vm8315, %v8256, 0
    %v8326 = vsel %vm8315, %v8258, 0
    %v8329 = vsel %vm8315, %v8260, 0
    %v8332 = vsel %vm8315, %v8262, 0
    %v8335 = vsel %vm8315, %v8264, 0
    %v8338 = vsel %vm8315, %v8266, 0
    %8340 = vmatpush.msra.mxu0 %v8248
    %8341 = vmatpush.msra.mxu0 %v8247
    %8342 = vmatpush.msra.mxu0 %v8246
    %8343 = vmatpush.msra.mxu0 %v8245
    %8344 = vmatpush.msra.mxu0 %v8244
    %8345 = vmatpush.msra.mxu0 %v8243
    %8346 = vmatpush.msra.mxu0 %v8242
    %8347 = vmatpush.msra.mxu0 %v8241
    %8348 = vmatpush.msra.mxu0 %v8240
    %8349 = vmatpush.msra.mxu0 %v8239
    %8350 = vmatpush.msra.mxu0 %v8238
    %8351 = vmatpush.msra.mxu0 %v8237
    %8352 = vmatpush.msra.mxu0 %v8236
    %8353 = vmatpush.msra.mxu0 %v8235
    %8354 = vmatpush.msra.mxu0 %v8234
    %8355 = vmatpush.msra.mxu0 %v8233
    %8356 = vmatmul.f32.gmra.mxu0 %v8251
    %v8357 = vpop.f32.mrf.mxu0
    %v8358 = vadd.f32 %v8278, %v8357
    %8359 = vmatmul.f32.gmra.mxu0 %v8253
    %v8360 = vpop.f32.mrf.mxu0
    %v8361 = vadd.f32 %v8283, %v8360
    %8362 = vmatmul.f32.gmra.mxu0 %v8255
    %v8363 = vpop.f32.mrf.mxu0
    %v8364 = vadd.f32 %v8288, %v8363
    %8365 = vmatmul.f32.gmra.mxu0 %v8257
    %v8366 = vpop.f32.mrf.mxu0
    %v8367 = vadd.f32 %v8293, %v8366
    %8368 = vmatmul.f32.gmra.mxu0 %v8259
    %v8369 = vpop.f32.mrf.mxu0
    %v8370 = vadd.f32 %v8298, %v8369
    %8371 = vmatmul.f32.gmra.mxu0 %v8261
    %v8372 = vpop.f32.mrf.mxu0
    %v8373 = vadd.f32 %v8303, %v8372
    %8374 = vmatmul.f32.gmra.mxu0 %v8263
    %v8375 = vpop.f32.mrf.mxu0
    %v8376 = vadd.f32 %v8308, %v8375
    %8377 = vmatmul.f32.gmra.mxu0 %v8265
    %v8378 = vpop.f32.mrf.mxu0
    %v8379 = vadd.f32 %v8313, %v8378
    %8380 = vdwg.mxu0
    %8381 = vmatpush.msra.mxu0 0.0
    %8382 = vmatpush.msra.mxu0 0.0
    %8383 = vmatpush.msra.mxu0 0.0
    %8384 = vmatpush.msra.mxu0 0.0
    %8385 = vmatpush.msra.mxu0 0.0
    %8386 = vmatpush.msra.mxu0 0.0
    %8387 = vmatpush.msra.mxu0 0.0
    %8388 = vmatpush.msra.mxu0 0.0
    %8389 = vmatpush.msra.mxu0 0.0
    %8390 = vmatpush.msra.mxu0 0.0
    %8391 = vmatpush.msra.mxu0 0.0
    %8392 = vmatpush.msra.mxu0 0.0
    %8393 = vmatpush.msra.mxu0 0.0
    %8394 = vmatpush.msra.mxu0 0.0
    %8395 = vmatpush.msra.mxu0 %v8250
    %8396 = vmatpush.msra.mxu0 %v8249
    %8397 = vmatmul.f32.gmra.mxu0 %v8317
    %v8398 = vpop.f32.mrf.mxu0
    %v8399 = vadd.f32 %v8358, %v8398
    %8400 = vmatmul.f32.gmra.mxu0 %v8320
    %v8401 = vpop.f32.mrf.mxu0
    %v8402 = vadd.f32 %v8361, %v8401
    %8403 = vmatmul.f32.gmra.mxu0 %v8323
    %v8404 = vpop.f32.mrf.mxu0
    %v8405 = vadd.f32 %v8364, %v8404
    %8406 = vmatmul.f32.gmra.mxu0 %v8326
    %v8407 = vpop.f32.mrf.mxu0
    %v8408 = vadd.f32 %v8367, %v8407
    %8409 = vmatmul.f32.gmra.mxu0 %v8329
    %v8410 = vpop.f32.mrf.mxu0
    %v8411 = vadd.f32 %v8370, %v8410
    %8412 = vmatmul.f32.gmra.mxu0 %v8332
    %v8413 = vpop.f32.mrf.mxu0
    %v8414 = vadd.f32 %v8373, %v8413
    %8415 = vmatmul.f32.gmra.mxu0 %v8335
    %v8416 = vpop.f32.mrf.mxu0
    %v8417 = vadd.f32 %v8376, %v8416
    %8418 = vmatmul.f32.gmra.mxu0 %v8338
    %v8419 = vpop.f32.mrf.mxu0
    %v8420 = vadd.f32 %v8379, %v8419
    %8421 = vdwg.mxu0
    %v8422 = vmax.f32 %v8399, 0.0
    %v8423 = vmax.f32 %v8402, 0.0
    %v8424 = vmax.f32 %v8405, 0.0
    %v8425 = vmax.f32 %v8408, 0.0
    %v8426 = vmax.f32 %v8411, 0.0
    %v8427 = vmax.f32 %v8414, 0.0
    %v8428 = vmax.f32 %v8417, 0.0
    %v8429 = vmax.f32 %v8420, 0.0
    %v8430 = vld [vmem:[%s7] sm:$0xff]
    %v8431 = vld [vmem:[%s7 + $0x8] sm:$0x3]
    %v8432 = vld [vmem:[%s8] sm:$0xff]
    %v8433 = vld [vmem:[%s8 + $0x8] sm:$0x3]
    %8435 = vset.pattern.permute.xlu0 0
    %8436 = vperm.xlu0 %8435, %v8432
    %v8437 = vpop.permute.xlu0 %8436
    %8440 = vset.pattern.permute.xlu0 0
    %8441 = vperm.xlu0 %8440, %v8433
    %v8442 = vpop.permute.xlu0 %8441
    %vm8444 = vcmask 523264
    %v8446 = vsel %vm8444, %v8430, 0
    %v8449 = vsel %vm8444, %v8431, 0
    %8451 = vmatpush.msra.mxu0 0.0
    %8452 = vmatpush.msra.mxu0 0.0
    %8453 = vmatpush.msra.mxu0 0.0
    %8454 = vmatpush.msra.mxu0 0.0
    %8455 = vmatpush.msra.mxu0 0.0
    %8456 = vmatpush.msra.mxu0 0.0
    %8457 = vmatpush.msra.mxu0 0.0
    %8458 = vmatpush.msra.mxu0 0.0
    %8459 = vmatpush.msra.mxu0 %v8429
    %8460 = vmatpush.msra.mxu0 %v8428
    %8461 = vmatpush.msra.mxu0 %v8427
    %8462 = vmatpush.msra.mxu0 %v8426
    %8463 = vmatpush.msra.mxu0 %v8425
    %8464 = vmatpush.msra.mxu0 %v8424
    %8465 = vmatpush.msra.mxu0 %v8423
    %8466 = vmatpush.msra.mxu0 %v8422
    %8467 = vmatmul.f32.gmra.mxu0 %v8446
    %v8468 = vpop.f32.mrf.mxu0
    %v8469 = vadd.f32 %v8437, %v8468
    %8470 = vmatmul.f32.gmra.mxu0 %v8449
    %v8471 = vpop.f32.mrf.mxu0
    %v8472 = vadd.f32 %v8442, %v8471
    %8473 = vdwg.mxu0
    %8474 = vst [vmem:[#allocation14] sm:$0xff] %v8469
    %8475 = vst [vmem:[#allocation14 + $0x8] sm:$0x3] %v8472
    // Predicated region
    $region54: #{tpu_custom_call.1} parent=1 // pred_check
      _
    $region55: #{tpu_custom_call.1} parent=1 // pred_check_branch
      %8477 = sbr.rel (0) target = $region57
    $region56: #{tpu_custom_call.1} parent=1 // pred_region
      %8479 = vsyncadd [#allocation7], 0
      %s8480 = sshll.u32 [#allocation14], 4
      %s8481 = int_to_ptr.vmem [resolvable:$true] %s8480
      %s8482 = sshll.u32 %s9, 4
      %s8483 = int_to_ptr.hbm [resolvable:$true] %s8482
      %8488 = dma.vmem_to_hbm [thread:$0]  %s8481, 256, %s8483, [#allocation7], 128, 128, 8
    $region57: #{tpu_custom_call.1} parent=1 // pred_fallthru
      _
    // Predicated region
    $region58: #{tpu_custom_call.1} parent=1 // pred_check
      _
    $region59: #{tpu_custom_call.1} parent=1 // pred_check_branch
      %8490 = sbr.rel (0) target = $region61
    $region60: #{tpu_custom_call.1} parent=1 // pred_region
      %8492 = dma.done [#allocation7], 256
    $region61: #{tpu_custom_call.1} parent=1 // pred_fallthru
      _
    %8493 = vsyncpa [#allocation6], 1
    %8494 = vsyncpa [#allocation13], 1
    %8495 = vsyncpa [#allocation7], 1
    %8496 = vsyncpa [#allocation8], 1
    %8497 = vsyncpa [#allocation11], 1

</llo_original>
